<compile_context>
chip_gen: v5e
topology: v5e:2x2
jax: 0.10.0
libtpu: 0.0.40
codegen_flags: <defaults>
</compile_context>

<pallas_src>
import functools

import jax
import jax.numpy as jnp
from jax import lax
from jax.experimental import pallas as pl
from jax.experimental.pallas import tpu as pltpu


def _layernorm(v, g, b, eps=1e-5):
    """torch.nn.LayerNorm over the last dim (biased variance, eps=1e-5), in f32."""
    mu = jnp.mean(v, axis=-1, keepdims=True)
    var = jnp.mean((v - mu) ** 2, axis=-1, keepdims=True)
    return (v - mu) * lax.rsqrt(var + eps) * g + b


def _project_heads(x, w_heads):
    """Head-major projection: (S, E) x (G, E, Dh) -> (G, S, Dh), bf16 MXU, f32 acc."""
    g = w_heads.shape[0]
    xb = jnp.broadcast_to(x.astype(jnp.bfloat16)[None], (g,) + x.shape)
    return jnp.einsum('gse,ged->gsd', xb, w_heads,
                      preferred_element_type=jnp.float32)


def _attention_heads(q_h, k_h, v_h, mask, d_heads):
    """Head-batched attention.

    q_h: (H, S, Dh) f32, k_h/v_h: (H, SS, Dh) f32, mask: (S, SS) additive or None.
    Matches the reference: softmax((mask + Q K^T) / sqrt(d_heads)) then nan_to_num,
    softmax math in f32; both matmuls run in bf16 on the MXU.
    """
    s = jnp.einsum('hqd,hkd->hqk',
                   q_h.astype(jnp.bfloat16), k_h.astype(jnp.bfloat16),
                   preferred_element_type=jnp.float32)            # (H, S, SS)
    if mask is not None:
        s = s + mask[None, :, :]
    s = s * (1.0 / (d_heads ** 0.5))
    m = jnp.max(s, axis=-1, keepdims=True)
    e = jnp.exp(s - m)
    denom = jnp.sum(e, axis=-1, keepdims=True)
    p = e * pl.reciprocal(denom, approx=True)                      # EUP, not VPU divide
    p = jnp.nan_to_num(p)                                          # fully-masked rows -> 0
    return jnp.einsum('hqk,hkd->hqd',
                      p.astype(jnp.bfloat16), v_h.astype(jnp.bfloat16),
                      preferred_element_type=jnp.float32)          # (H, S, Dh)


def _merge_heads(o_h, wo_heads):
    """sum_h O_h @ WO_h  ==  concat(heads) @ WO, without a lane-axis concatenate."""
    per_head = jnp.einsum('hqd,hde->hqe',
                          o_h.astype(jnp.bfloat16), wo_heads,
                          preferred_element_type=jnp.float32)      # (H, S, E)
    return jnp.sum(per_head, axis=0)                               # (S, E)


def _decoder_kernel(n_heads, d_heads, has_attn_mask, has_memory_mask, *refs):
    i = 0
    x_ref = refs[i]; i += 1
    xa_ref = refs[i]; i += 1
    am_ref = None
    mm_ref = None
    if has_attn_mask:
        am_ref = refs[i]; i += 1
    if has_memory_mask:
        mm_ref = refs[i]; i += 1
    (wqkv1_ref, wo1_ref, wq2_ref, wkv2_ref, wo2_ref,
     ln1g_ref, ln1b_ref, ln2g_ref, ln2b_ref, ln3g_ref, ln3b_ref,
     w1_ref, b1_ref, w2_ref, b2_ref,
     o_ref) = refs[i:]

    x = x_ref[...].astype(jnp.float32)      # (S, E)
    xa = xa_ref[...].astype(jnp.float32)    # (SS, E)
    am = am_ref[...].astype(jnp.float32) if has_attn_mask else None
    mm = mm_ref[...].astype(jnp.float32) if has_memory_mask else None

    # TODO(synk): nn.Dropout is a no-op here (eval-mode semantics).

    H = n_heads

    # ---- self-attention block ------------------------------------------------
    qkv = _project_heads(x, wqkv1_ref[...])                        # (3H, S, Dh)
    o_h = _attention_heads(qkv[:H], qkv[H:2 * H], qkv[2 * H:], am, d_heads)
    x = _layernorm(x + _merge_heads(o_h, wo1_ref[...]),
                   ln1g_ref[...], ln1b_ref[...])

    # ---- cross-attention block -----------------------------------------------
    q_h = _project_heads(x, wq2_ref[...])                          # (H, S, Dh)
    kv = _project_heads(xa, wkv2_ref[...])                         # (2H, SS, Dh)
    o_h = _attention_heads(q_h, kv[:H], kv[H:], mm, d_heads)
    x = _layernorm(x + _merge_heads(o_h, wo2_ref[...]),
                   ln2g_ref[...], ln2b_ref[...])

    # ---- feed-forward block ----------------------------------------------------
    h = jnp.dot(x.astype(jnp.bfloat16), w1_ref[...],
                preferred_element_type=jnp.float32) + b1_ref[...]
    h = jnp.maximum(h, 0.0)
    f = jnp.dot(h.astype(jnp.bfloat16), w2_ref[...],
                preferred_element_type=jnp.float32) + b2_ref[...]
    x = _layernorm(x + f, ln3g_ref[...], ln3b_ref[...])

    o_ref[...] = x.astype(o_ref.dtype)


def decoder_forward(x, xa, weights, *, n_heads, attn_mask=None, memory_mask=None):
    """Pallas forward pass of the Decoder layer.

    x: (B, S, E) f32, xa: (B, SS, E) f32.
    weights: dict of f32 arrays in (in_features, out_features) layout (transpose of
    torch nn.Linear.weight):
        wq1,wk1,wv1,wo1,wq2,wk2,wv2,wo2 : (E, E)   (attention, bias=False)
        ln{1,2,3}_g, ln{1,2,3}_b        : (E,)
        w1 : (E, FF), b1 : (FF,), w2 : (FF, E), b2 : (E,)
    attn_mask:   optional (S, S)  additive mask shared across the batch.
    memory_mask: optional (S, SS) additive mask shared across the batch.
    """
    B, S, E = x.shape
    _, SS, _ = xa.shape
    assert E % n_heads == 0
    H, Dh = n_heads, E // n_heads
    bf16, f32 = jnp.bfloat16, jnp.float32

    def heads_in_out(ws):
        # [(E, k*E), ...] -> head-major (G, E, Dh) bf16 with G = total_out // Dh
        w = jnp.concatenate(ws, axis=1)
        g = w.shape[1] // Dh
        return jnp.transpose(w.reshape(E, g, Dh), (1, 0, 2)).astype(bf16)

    wqkv1 = heads_in_out([weights['wq1'], weights['wk1'], weights['wv1']])  # (3H,E,Dh)
    wo1_h = weights['wo1'].reshape(H, Dh, E).astype(bf16)                   # (H,Dh,E)
    wq2_h = heads_in_out([weights['wq2']])                                  # (H,E,Dh)
    wkv2 = heads_in_out([weights['wk2'], weights['wv2']])                   # (2H,E,Dh)
    wo2_h = weights['wo2'].reshape(H, Dh, E).astype(bf16)
    w1 = weights['w1'].astype(bf16)
    w2 = weights['w2'].astype(bf16)
    FF = w1.shape[1]

    ln = lambda k: weights[k].reshape(1, E).astype(f32)
    b1 = weights['b1'].reshape(1, FF).astype(f32)
    b2 = weights['b2'].reshape(1, E).astype(f32)

    weight_args = [wqkv1, wo1_h, wq2_h, wkv2, wo2_h,
                   ln('ln1_g'), ln('ln1_b'), ln('ln2_g'), ln('ln2_b'),
                   ln('ln3_g'), ln('ln3_b'),
                   w1, b1, w2, b2]

    def full_spec(a):
        # full-array block, constant index_map -> weights are only copied once
        return pl.BlockSpec(a.shape, lambda b, nd=a.ndim: (0,) * nd)

    inputs = [x, xa]
    in_specs = [pl.BlockSpec((None, S, E), lambda b: (b, 0, 0)),
                pl.BlockSpec((None, SS, E), lambda b: (b, 0, 0))]
    if attn_mask is not None:
        assert attn_mask.shape == (S, S)
        inputs.append(attn_mask.astype(f32))
        in_specs.append(pl.BlockSpec((S, S), lambda b: (0, 0)))
    if memory_mask is not None:
        assert memory_mask.shape == (S, SS)
        inputs.append(memory_mask.astype(f32))
        in_specs.append(pl.BlockSpec((S, SS), lambda b: (0, 0)))
    inputs += weight_args
    in_specs += [full_spec(a) for a in weight_args]

    kernel = functools.partial(_decoder_kernel, H, Dh,
                               attn_mask is not None, memory_mask is not None)

    return pl.pallas_call(
        kernel,
        out_shape=jax.ShapeDtypeStruct((B, S, E), x.dtype),
        grid_spec=pltpu.PrefetchScalarGridSpec(
            num_scalar_prefetch=0,
            grid=(B,),
            in_specs=in_specs,
            out_specs=pl.BlockSpec((None, S, E), lambda b: (b, 0, 0)),
        ),
        compiler_params=pltpu.CompilerParams(
            dimension_semantics=("parallel",),           # shard batch across TCs (v7x)
            vmem_limit_bytes=48 * 1024 * 1024,           # headroom under v7x 64 MiB
        ),
    )(*inputs)


def decoder_reference(x, xa, weights, *, n_heads, attn_mask=None, memory_mask=None):
    """Pure-JAX f32 reference mirroring the PyTorch module (eval mode)."""
    H = n_heads
    E = x.shape[-1]
    Dh = E // H

    def mha(xq, xkv, wq, wk, wv, wo, mask):
        B, S, _ = xq.shape
        SS = xkv.shape[1]
        Q = (xq @ wq).reshape(B, S, H, Dh).transpose(0, 2, 1, 3)
        K = (xkv @ wk).reshape(B, SS, H, Dh).transpose(0, 2, 1, 3)
        V = (xkv @ wv).reshape(B, SS, H, Dh).transpose(0, 2, 1, 3)
        s = jnp.einsum('bhqd,bhkd->bhqk', Q, K)
        if mask is not None:
            s = s + mask[None, None]
        s = s / (Dh ** 0.5)
        p = jnp.nan_to_num(jax.nn.softmax(s, axis=-1))
        o = jnp.einsum('bhqk,bhkd->bhqd', p, V)
        o = o.transpose(0, 2, 1, 3).reshape(B, S, E)
        return o @ wo

    def ln(v, g, b):
        mu = v.mean(-1, keepdims=True)
        var = ((v - mu) ** 2).mean(-1, keepdims=True)
        return (v - mu) / jnp.sqrt(var + 1e-5) * g + b

    h = mha(x, x, weights['wq1'], weights['wk1'], weights['wv1'], weights['wo1'],
            attn_mask)
    x = ln(x + h, weights['ln1_g'], weights['ln1_b'])
    h = mha(x, xa, weights['wq2'], weights['wk2'], weights['wv2'], weights['wo2'],
            memory_mask)
    x = ln(x + h, weights['ln2_g'], weights['ln2_b'])
    f = jnp.maximum(x @ weights['w1'] + weights['b1'], 0.0) @ weights['w2'] + weights['b2']
    x = ln(x + f, weights['ln3_g'], weights['ln3_b'])
    return x


if __name__ == "__main__":
    B, S, SS = 2, 8, 16          # batch, target seq, source (memory) seq
    E, H, FF = 256, 2, 512       # d_model, n_heads, dim_feedforward (lane-dense)

    key = jax.random.PRNGKey(0)
    ks = jax.random.split(key, 20)

    x = jax.random.normal(ks[0], (B, S, E), dtype=jnp.float32)
    xa = jax.random.normal(ks[1], (B, SS, E), dtype=jnp.float32)

    # Additive causal mask, shared across the batch; memory mask is None (== zeros).
    causal = jnp.where(jnp.arange(S)[:, None] >= jnp.arange(S)[None, :],
                       0.0, -1e9).astype(jnp.float32)

    def w(k, shape, scale=0.1):
        return (scale * jax.random.normal(k, shape)).astype(jnp.float32)

    weights = {
        'wq1': w(ks[2], (E, E)), 'wk1': w(ks[3], (E, E)),
        'wv1': w(ks[4], (E, E)), 'wo1': w(ks[5], (E, E)),
        'wq2': w(ks[6], (E, E)), 'wk2': w(ks[7], (E, E)),
        'wv2': w(ks[8], (E, E)), 'wo2': w(ks[9], (E, E)),
        'ln1_g': 1.0 + w(ks[10], (E,)), 'ln1_b': w(ks[11], (E,)),
        'ln2_g': 1.0 + w(ks[12], (E,)), 'ln2_b': w(ks[13], (E,)),
        'ln3_g': 1.0 + w(ks[14], (E,)), 'ln3_b': w(ks[15], (E,)),
        'w1': w(ks[16], (E, FF)), 'b1': w(ks[17], (FF,)),
        'w2': w(ks[18], (FF, E)), 'b2': w(ks[19], (E,)),
    }

    out = decoder_forward(x, xa, weights, n_heads=H,
                          attn_mask=causal, memory_mask=None)
    out = jax.block_until_ready(out)

    assert out.shape == (B, S, E), out.shape
    assert bool(jnp.all(jnp.isfinite(out)))

    # Loose check vs. a pure-JAX f32 reference (kernel matmuls run in bf16,
    # so only coarse agreement is expected; a real bug would be O(1) off).
    ref = decoder_reference(x, xa, weights, n_heads=H,
                            attn_mask=causal, memory_mask=None)
    max_err = float(jnp.max(jnp.abs(out - ref)))
    assert max_err < 0.35, f"max abs error vs f32 reference too large: {max_err}"

    print("KERNEL_OK")
</pallas_src>

<mosaic_0001>
module attributes {stable_mosaic.version = 11 : i64} {
  func.func @_decoder_kernel(%arg0: i32, %arg1: memref<1x8x256xf32, #tpu.memory_space<vmem>>, %arg2: memref<1x16x256xf32, #tpu.memory_space<vmem>>, %arg3: memref<8x8xf32, #tpu.memory_space<vmem>>, %arg4: memref<6x256x128xbf16, #tpu.memory_space<vmem>>, %arg5: memref<2x128x256xbf16, #tpu.memory_space<vmem>>, %arg6: memref<2x256x128xbf16, #tpu.memory_space<vmem>>, %arg7: memref<4x256x128xbf16, #tpu.memory_space<vmem>>, %arg8: memref<2x128x256xbf16, #tpu.memory_space<vmem>>, %arg9: memref<1x256xf32, #tpu.memory_space<vmem>>, %arg10: memref<1x256xf32, #tpu.memory_space<vmem>>, %arg11: memref<1x256xf32, #tpu.memory_space<vmem>>, %arg12: memref<1x256xf32, #tpu.memory_space<vmem>>, %arg13: memref<1x256xf32, #tpu.memory_space<vmem>>, %arg14: memref<1x256xf32, #tpu.memory_space<vmem>>, %arg15: memref<256x512xbf16, #tpu.memory_space<vmem>>, %arg16: memref<1x512xf32, #tpu.memory_space<vmem>>, %arg17: memref<512x256xbf16, #tpu.memory_space<vmem>>, %arg18: memref<1x256xf32, #tpu.memory_space<vmem>>, %arg19: memref<1x8x256xf32, #tpu.memory_space<vmem>>) attributes {dimension_semantics = [#tpu.dimension_semantics<parallel>], iteration_bounds = array<i64: 2>, scalar_prefetch = 0 : i64, scratch_operands = 0 : i64, tpu.core_type = #tpu.core_type<tc>, window_params = [{transform_indices = @transform_0, window_bounds = array<i64: 1, 8, 256>}, {transform_indices = @transform_1, window_bounds = array<i64: 1, 16, 256>}, {pipeline_mode = #tpu.pipeline_mode<synchronous>, transform_indices = @transform_2, window_bounds = array<i64: 8, 8>}, {pipeline_mode = #tpu.pipeline_mode<synchronous>, transform_indices = @transform_3, window_bounds = array<i64: 6, 256, 128>}, {pipeline_mode = #tpu.pipeline_mode<synchronous>, transform_indices = @transform_4, window_bounds = array<i64: 2, 128, 256>}, {pipeline_mode = #tpu.pipeline_mode<synchronous>, transform_indices = @transform_5, window_bounds = array<i64: 2, 256, 128>}, {pipeline_mode = #tpu.pipeline_mode<synchronous>, transform_indices = @transform_6, window_bounds = array<i64: 4, 256, 128>}, {pipeline_mode = #tpu.pipeline_mode<synchronous>, transform_indices = @transform_7, window_bounds = array<i64: 2, 128, 256>}, {pipeline_mode = #tpu.pipeline_mode<synchronous>, transform_indices = @transform_8, window_bounds = array<i64: 1, 256>}, {pipeline_mode = #tpu.pipeline_mode<synchronous>, transform_indices = @transform_9, window_bounds = array<i64: 1, 256>}, {pipeline_mode = #tpu.pipeline_mode<synchronous>, transform_indices = @transform_10, window_bounds = array<i64: 1, 256>}, {pipeline_mode = #tpu.pipeline_mode<synchronous>, transform_indices = @transform_11, window_bounds = array<i64: 1, 256>}, {pipeline_mode = #tpu.pipeline_mode<synchronous>, transform_indices = @transform_12, window_bounds = array<i64: 1, 256>}, {pipeline_mode = #tpu.pipeline_mode<synchronous>, transform_indices = @transform_13, window_bounds = array<i64: 1, 256>}, {pipeline_mode = #tpu.pipeline_mode<synchronous>, transform_indices = @transform_14, window_bounds = array<i64: 256, 512>}, {pipeline_mode = #tpu.pipeline_mode<synchronous>, transform_indices = @transform_15, window_bounds = array<i64: 1, 512>}, {pipeline_mode = #tpu.pipeline_mode<synchronous>, transform_indices = @transform_16, window_bounds = array<i64: 512, 256>}, {pipeline_mode = #tpu.pipeline_mode<synchronous>, transform_indices = @transform_17, window_bounds = array<i64: 1, 256>}, {transform_indices = @transform_18, window_bounds = array<i64: 1, 8, 256>}]} {
    %c0 = arith.constant 0 : index
    %c0_0 = arith.constant 0 : index
    %c0_1 = arith.constant 0 : index
    %0 = vector.load %arg1[%c0, %c0_0, %c0_1] : memref<1x8x256xf32, #tpu.memory_space<vmem>>, vector<1x8x256xf32>
    %1 = vector.shape_cast %0 : vector<1x8x256xf32> to vector<8x256xf32>
    %c0_2 = arith.constant 0 : index
    %c0_3 = arith.constant 0 : index
    %c0_4 = arith.constant 0 : index
    %2 = vector.load %arg2[%c0_2, %c0_3, %c0_4] : memref<1x16x256xf32, #tpu.memory_space<vmem>>, vector<1x16x256xf32>
    %3 = vector.shape_cast %2 : vector<1x16x256xf32> to vector<16x256xf32>
    %c0_5 = arith.constant 0 : index
    %c0_6 = arith.constant 0 : index
    %4 = vector.load %arg3[%c0_5, %c0_6] : memref<8x8xf32, #tpu.memory_space<vmem>>, vector<8x8xf32>
    %c0_7 = arith.constant 0 : index
    %c0_8 = arith.constant 0 : index
    %c0_9 = arith.constant 0 : index
    %5 = vector.load %arg4[%c0_7, %c0_8, %c0_9] : memref<6x256x128xbf16, #tpu.memory_space<vmem>>, vector<6x256x128xbf16>
    %6 = arith.truncf %1 : vector<8x256xf32> to vector<8x256xbf16>
    %7 = vector.shape_cast %6 : vector<8x256xbf16> to vector<1x8x256xbf16>
    %8 = vector.shape_cast %7 : vector<1x8x256xbf16> to vector<1x8x256xbf16>
    %9 = vector.broadcast %8 : vector<1x8x256xbf16> to vector<6x8x256xbf16>
    "tpu.trace_start"() <{level = 10 : i32, message = "gse,ged->gsd"}> : () -> ()
    %cst = arith.constant dense<0.000000e+00> : vector<6x8x128xf32>
    %10 = tpu.matmul %9, %5, %cst {dimension_numbers = #tpu.dot_dimension_numbers<[2], [1], [1], [2], [0, 0, 0, 1, 1, 2], [0], [0]>} : vector<6x8x256xbf16>, vector<6x256x128xbf16>, vector<6x8x128xf32> -> vector<6x8x128xf32>
    "tpu.trace_stop"() : () -> ()
    %11 = vector.extract_strided_slice %10 {offsets = [0, 0, 0], sizes = [2, 8, 128], strides = [1, 1, 1]} : vector<6x8x128xf32> to vector<2x8x128xf32>
    %12 = vector.extract_strided_slice %10 {offsets = [2, 0, 0], sizes = [2, 8, 128], strides = [1, 1, 1]} : vector<6x8x128xf32> to vector<2x8x128xf32>
    %13 = vector.extract_strided_slice %10 {offsets = [4, 0, 0], sizes = [2, 8, 128], strides = [1, 1, 1]} : vector<6x8x128xf32> to vector<2x8x128xf32>
    %14 = arith.truncf %11 : vector<2x8x128xf32> to vector<2x8x128xbf16>
    %15 = arith.truncf %12 : vector<2x8x128xf32> to vector<2x8x128xbf16>
    "tpu.trace_start"() <{level = 10 : i32, message = "hqd,hkd->hqk"}> : () -> ()
    %cst_10 = arith.constant dense<0.000000e+00> : vector<2x8x8xf32>
    %16 = tpu.matmul %14, %15, %cst_10 {dimension_numbers = #tpu.dot_dimension_numbers<[2], [2], [1], [1], [0, 0, 0, 1, 1, 1], [0], [0]>} : vector<2x8x128xbf16>, vector<2x8x128xbf16>, vector<2x8x8xf32> -> vector<2x8x8xf32>
    "tpu.trace_stop"() : () -> ()
    %17 = vector.shape_cast %4 : vector<8x8xf32> to vector<1x8x8xf32>
    %18 = vector.broadcast %17 : vector<1x8x8xf32> to vector<2x8x8xf32>
    %19 = arith.addf %16, %18 : vector<2x8x8xf32>
    %cst_11 = arith.constant 0.0883883461 : f32
    %20 = vector.broadcast %cst_11 : f32 to vector<2x8x8xf32>
    %21 = arith.mulf %19, %20 : vector<2x8x8xf32>
    %cst_12 = arith.constant dense<0xFF800000> : vector<2x8xf32>
    %22 = vector.multi_reduction <maximumf>, %21, %cst_12 [2] : vector<2x8x8xf32> to vector<2x8xf32>
    %23 = vector.shape_cast %22 : vector<2x8xf32> to vector<2x8x1xf32>
    %24 = vector.broadcast %23 : vector<2x8x1xf32> to vector<2x8x8xf32>
    %25 = arith.subf %21, %24 : vector<2x8x8xf32>
    %26 = math.exp %25 : vector<2x8x8xf32>
    %cst_13 = arith.constant dense<0.000000e+00> : vector<2x8xf32>
    %27 = vector.multi_reduction <add>, %26, %cst_13 [2] : vector<2x8x8xf32> to vector<2x8xf32>
    %28 = vector.shape_cast %27 : vector<2x8xf32> to vector<2x8x1xf32>
    %29 = tpu.reciprocal %28 {approx = true} : vector<2x8x1xf32> -> vector<2x8x1xf32>
    %30 = vector.broadcast %29 : vector<2x8x1xf32> to vector<2x8x8xf32>
    %31 = arith.mulf %26, %30 : vector<2x8x8xf32>
    %32 = arith.cmpf one, %31, %31 : vector<2x8x8xf32>
    %cst_14 = arith.constant 0.000000e+00 : f32
    %33 = vector.broadcast %cst_14 : f32 to vector<2x8x8xf32>
    %34 = arith.select %32, %33, %31 : vector<2x8x8xi1>, vector<2x8x8xf32>
    %cst_15 = arith.constant 0x7F800000 : f32
    %35 = vector.broadcast %cst_15 : f32 to vector<2x8x8xf32>
    %36 = arith.cmpf oeq, %34, %35 : vector<2x8x8xf32>
    %cst_16 = arith.constant 3.40282347E+38 : f32
    %37 = vector.broadcast %cst_16 : f32 to vector<2x8x8xf32>
    %38 = arith.select %36, %37, %34 : vector<2x8x8xi1>, vector<2x8x8xf32>
    %cst_17 = arith.constant 0xFF800000 : f32
    %39 = vector.broadcast %cst_17 : f32 to vector<2x8x8xf32>
    %40 = arith.cmpf oeq, %38, %39 : vector<2x8x8xf32>
    %cst_18 = arith.constant -3.40282347E+38 : f32
    %41 = vector.broadcast %cst_18 : f32 to vector<2x8x8xf32>
    %42 = arith.select %40, %41, %38 : vector<2x8x8xi1>, vector<2x8x8xf32>
    %43 = arith.truncf %42 : vector<2x8x8xf32> to vector<2x8x8xbf16>
    %44 = arith.truncf %13 : vector<2x8x128xf32> to vector<2x8x128xbf16>
    "tpu.trace_start"() <{level = 10 : i32, message = "hqk,hkd->hqd"}> : () -> ()
    %cst_19 = arith.constant dense<0.000000e+00> : vector<2x8x128xf32>
    %45 = tpu.matmul %43, %44, %cst_19 {dimension_numbers = #tpu.dot_dimension_numbers<[2], [1], [1], [2], [0, 0, 0, 1, 1, 2], [0], [0]>} : vector<2x8x8xbf16>, vector<2x8x128xbf16>, vector<2x8x128xf32> -> vector<2x8x128xf32>
    "tpu.trace_stop"() : () -> ()
    %c0_20 = arith.constant 0 : index
    %c0_21 = arith.constant 0 : index
    %c0_22 = arith.constant 0 : index
    %46 = vector.load %arg5[%c0_20, %c0_21, %c0_22] : memref<2x128x256xbf16, #tpu.memory_space<vmem>>, vector<2x128x256xbf16>
    %47 = arith.truncf %45 : vector<2x8x128xf32> to vector<2x8x128xbf16>
    "tpu.trace_start"() <{level = 10 : i32, message = "hqd,hde->hqe"}> : () -> ()
    %cst_23 = arith.constant dense<0.000000e+00> : vector<2x8x256xf32>
    %48 = tpu.matmul %47, %46, %cst_23 {dimension_numbers = #tpu.dot_dimension_numbers<[2], [1], [1], [2], [0, 0, 0, 1, 1, 2], [0], [0]>} : vector<2x8x128xbf16>, vector<2x128x256xbf16>, vector<2x8x256xf32> -> vector<2x8x256xf32>
    "tpu.trace_stop"() : () -> ()
    %cst_24 = arith.constant dense<0.000000e+00> : vector<8x256xf32>
    %49 = vector.multi_reduction <add>, %48, %cst_24 [0] : vector<2x8x256xf32> to vector<8x256xf32>
    %50 = arith.addf %1, %49 : vector<8x256xf32>
    %c0_25 = arith.constant 0 : index
    %c0_26 = arith.constant 0 : index
    %51 = vector.load %arg9[%c0_25, %c0_26] : memref<1x256xf32, #tpu.memory_space<vmem>>, vector<1x256xf32>
    %c0_27 = arith.constant 0 : index
    %c0_28 = arith.constant 0 : index
    %52 = vector.load %arg10[%c0_27, %c0_28] : memref<1x256xf32, #tpu.memory_space<vmem>>, vector<1x256xf32>
    %cst_29 = arith.constant dense<0.000000e+00> : vector<8xf32>
    %53 = vector.multi_reduction <add>, %50, %cst_29 [1] : vector<8x256xf32> to vector<8xf32>
    %54 = vector.shape_cast %53 : vector<8xf32> to vector<8x1xf32>
    %cst_30 = arith.constant 2.560000e+02 : f32
    %55 = vector.broadcast %cst_30 : f32 to vector<8x1xf32>
    %56 = arith.divf %54, %55 : vector<8x1xf32>
    %57 = vector.broadcast %56 : vector<8x1xf32> to vector<8x256xf32>
    %58 = arith.subf %50, %57 : vector<8x256xf32>
    %59 = arith.mulf %58, %58 : vector<8x256xf32>
    %cst_31 = arith.constant dense<0.000000e+00> : vector<8xf32>
    %60 = vector.multi_reduction <add>, %59, %cst_31 [1] : vector<8x256xf32> to vector<8xf32>
    %61 = vector.shape_cast %60 : vector<8xf32> to vector<8x1xf32>
    %cst_32 = arith.constant 2.560000e+02 : f32
    %62 = vector.broadcast %cst_32 : f32 to vector<8x1xf32>
    %63 = arith.divf %61, %62 : vector<8x1xf32>
    %64 = vector.broadcast %56 : vector<8x1xf32> to vector<8x256xf32>
    %65 = arith.subf %50, %64 : vector<8x256xf32>
    %cst_33 = arith.constant 9.99999974E-6 : f32
    %66 = vector.broadcast %cst_33 : f32 to vector<8x1xf32>
    %67 = arith.addf %63, %66 : vector<8x1xf32>
    %68 = math.rsqrt %67 : vector<8x1xf32>
    %69 = vector.broadcast %68 : vector<8x1xf32> to vector<8x256xf32>
    %70 = arith.mulf %65, %69 : vector<8x256xf32>
    %71 = vector.broadcast %51 : vector<1x256xf32> to vector<8x256xf32>
    %72 = arith.mulf %70, %71 : vector<8x256xf32>
    %73 = vector.broadcast %52 : vector<1x256xf32> to vector<8x256xf32>
    %74 = arith.addf %72, %73 : vector<8x256xf32>
    %c0_34 = arith.constant 0 : index
    %c0_35 = arith.constant 0 : index
    %c0_36 = arith.constant 0 : index
    %75 = vector.load %arg6[%c0_34, %c0_35, %c0_36] : memref<2x256x128xbf16, #tpu.memory_space<vmem>>, vector<2x256x128xbf16>
    %76 = arith.truncf %74 : vector<8x256xf32> to vector<8x256xbf16>
    %77 = vector.shape_cast %76 : vector<8x256xbf16> to vector<1x8x256xbf16>
    %78 = vector.shape_cast %77 : vector<1x8x256xbf16> to vector<1x8x256xbf16>
    %79 = vector.broadcast %78 : vector<1x8x256xbf16> to vector<2x8x256xbf16>
    "tpu.trace_start"() <{level = 10 : i32, message = "gse,ged->gsd"}> : () -> ()
    %cst_37 = arith.constant dense<0.000000e+00> : vector<2x8x128xf32>
    %80 = tpu.matmul %79, %75, %cst_37 {dimension_numbers = #tpu.dot_dimension_numbers<[2], [1], [1], [2], [0, 0, 0, 1, 1, 2], [0], [0]>} : vector<2x8x256xbf16>, vector<2x256x128xbf16>, vector<2x8x128xf32> -> vector<2x8x128xf32>
    "tpu.trace_stop"() : () -> ()
    %c0_38 = arith.constant 0 : index
    %c0_39 = arith.constant 0 : index
    %c0_40 = arith.constant 0 : index
    %81 = vector.load %arg7[%c0_38, %c0_39, %c0_40] : memref<4x256x128xbf16, #tpu.memory_space<vmem>>, vector<4x256x128xbf16>
    %82 = arith.truncf %3 : vector<16x256xf32> to vector<16x256xbf16>
    %83 = vector.shape_cast %82 : vector<16x256xbf16> to vector<1x16x256xbf16>
    %84 = vector.shape_cast %83 : vector<1x16x256xbf16> to vector<1x16x256xbf16>
    %85 = vector.broadcast %84 : vector<1x16x256xbf16> to vector<4x16x256xbf16>
    "tpu.trace_start"() <{level = 10 : i32, message = "gse,ged->gsd"}> : () -> ()
    %cst_41 = arith.constant dense<0.000000e+00> : vector<4x16x128xf32>
    %86 = tpu.matmul %85, %81, %cst_41 {dimension_numbers = #tpu.dot_dimension_numbers<[2], [1], [1], [2], [0, 0, 0, 1, 1, 2], [0], [0]>} : vector<4x16x256xbf16>, vector<4x256x128xbf16>, vector<4x16x128xf32> -> vector<4x16x128xf32>
    "tpu.trace_stop"() : () -> ()
    %87 = vector.extract_strided_slice %86 {offsets = [0, 0, 0], sizes = [2, 16, 128], strides = [1, 1, 1]} : vector<4x16x128xf32> to vector<2x16x128xf32>
    %88 = vector.extract_strided_slice %86 {offsets = [2, 0, 0], sizes = [2, 16, 128], strides = [1, 1, 1]} : vector<4x16x128xf32> to vector<2x16x128xf32>
    %89 = arith.truncf %80 : vector<2x8x128xf32> to vector<2x8x128xbf16>
    %90 = arith.truncf %87 : vector<2x16x128xf32> to vector<2x16x128xbf16>
    "tpu.trace_start"() <{level = 10 : i32, message = "hqd,hkd->hqk"}> : () -> ()
    %cst_42 = arith.constant dense<0.000000e+00> : vector<2x8x16xf32>
    %91 = tpu.matmul %89, %90, %cst_42 {dimension_numbers = #tpu.dot_dimension_numbers<[2], [2], [1], [1], [0, 0, 0, 1, 1, 1], [0], [0]>} : vector<2x8x128xbf16>, vector<2x16x128xbf16>, vector<2x8x16xf32> -> vector<2x8x16xf32>
    "tpu.trace_stop"() : () -> ()
    %cst_43 = arith.constant 0.0883883461 : f32
    %92 = vector.broadcast %cst_43 : f32 to vector<2x8x16xf32>
    %93 = arith.mulf %91, %92 : vector<2x8x16xf32>
    %cst_44 = arith.constant dense<0xFF800000> : vector<2x8xf32>
    %94 = vector.multi_reduction <maximumf>, %93, %cst_44 [2] : vector<2x8x16xf32> to vector<2x8xf32>
    %95 = vector.shape_cast %94 : vector<2x8xf32> to vector<2x8x1xf32>
    %96 = vector.broadcast %95 : vector<2x8x1xf32> to vector<2x8x16xf32>
    %97 = arith.subf %93, %96 : vector<2x8x16xf32>
    %98 = math.exp %97 : vector<2x8x16xf32>
    %cst_45 = arith.constant dense<0.000000e+00> : vector<2x8xf32>
    %99 = vector.multi_reduction <add>, %98, %cst_45 [2] : vector<2x8x16xf32> to vector<2x8xf32>
    %100 = vector.shape_cast %99 : vector<2x8xf32> to vector<2x8x1xf32>
    %101 = tpu.reciprocal %100 {approx = true} : vector<2x8x1xf32> -> vector<2x8x1xf32>
    %102 = vector.broadcast %101 : vector<2x8x1xf32> to vector<2x8x16xf32>
    %103 = arith.mulf %98, %102 : vector<2x8x16xf32>
    %104 = arith.cmpf one, %103, %103 : vector<2x8x16xf32>
    %cst_46 = arith.constant 0.000000e+00 : f32
    %105 = vector.broadcast %cst_46 : f32 to vector<2x8x16xf32>
    %106 = arith.select %104, %105, %103 : vector<2x8x16xi1>, vector<2x8x16xf32>
    %cst_47 = arith.constant 0x7F800000 : f32
    %107 = vector.broadcast %cst_47 : f32 to vector<2x8x16xf32>
    %108 = arith.cmpf oeq, %106, %107 : vector<2x8x16xf32>
    %cst_48 = arith.constant 3.40282347E+38 : f32
    %109 = vector.broadcast %cst_48 : f32 to vector<2x8x16xf32>
    %110 = arith.select %108, %109, %106 : vector<2x8x16xi1>, vector<2x8x16xf32>
    %cst_49 = arith.constant 0xFF800000 : f32
    %111 = vector.broadcast %cst_49 : f32 to vector<2x8x16xf32>
    %112 = arith.cmpf oeq, %110, %111 : vector<2x8x16xf32>
    %cst_50 = arith.constant -3.40282347E+38 : f32
    %113 = vector.broadcast %cst_50 : f32 to vector<2x8x16xf32>
    %114 = arith.select %112, %113, %110 : vector<2x8x16xi1>, vector<2x8x16xf32>
    %115 = arith.truncf %114 : vector<2x8x16xf32> to vector<2x8x16xbf16>
    %116 = arith.truncf %88 : vector<2x16x128xf32> to vector<2x16x128xbf16>
    "tpu.trace_start"() <{level = 10 : i32, message = "hqk,hkd->hqd"}> : () -> ()
    %cst_51 = arith.constant dense<0.000000e+00> : vector<2x8x128xf32>
    %117 = tpu.matmul %115, %116, %cst_51 {dimension_numbers = #tpu.dot_dimension_numbers<[2], [1], [1], [2], [0, 0, 0, 1, 1, 2], [0], [0]>} : vector<2x8x16xbf16>, vector<2x16x128xbf16>, vector<2x8x128xf32> -> vector<2x8x128xf32>
    "tpu.trace_stop"() : () -> ()
    %c0_52 = arith.constant 0 : index
    %c0_53 = arith.constant 0 : index
    %c0_54 = arith.constant 0 : index
    %118 = vector.load %arg8[%c0_52, %c0_53, %c0_54] : memref<2x128x256xbf16, #tpu.memory_space<vmem>>, vector<2x128x256xbf16>
    %119 = arith.truncf %117 : vector<2x8x128xf32> to vector<2x8x128xbf16>
    "tpu.trace_start"() <{level = 10 : i32, message = "hqd,hde->hqe"}> : () -> ()
    %cst_55 = arith.constant dense<0.000000e+00> : vector<2x8x256xf32>
    %120 = tpu.matmul %119, %118, %cst_55 {dimension_numbers = #tpu.dot_dimension_numbers<[2], [1], [1], [2], [0, 0, 0, 1, 1, 2], [0], [0]>} : vector<2x8x128xbf16>, vector<2x128x256xbf16>, vector<2x8x256xf32> -> vector<2x8x256xf32>
    "tpu.trace_stop"() : () -> ()
    %cst_56 = arith.constant dense<0.000000e+00> : vector<8x256xf32>
    %121 = vector.multi_reduction <add>, %120, %cst_56 [0] : vector<2x8x256xf32> to vector<8x256xf32>
    %122 = arith.addf %74, %121 : vector<8x256xf32>
    %c0_57 = arith.constant 0 : index
    %c0_58 = arith.constant 0 : index
    %123 = vector.load %arg11[%c0_57, %c0_58] : memref<1x256xf32, #tpu.memory_space<vmem>>, vector<1x256xf32>
    %c0_59 = arith.constant 0 : index
    %c0_60 = arith.constant 0 : index
    %124 = vector.load %arg12[%c0_59, %c0_60] : memref<1x256xf32, #tpu.memory_space<vmem>>, vector<1x256xf32>
    %cst_61 = arith.constant dense<0.000000e+00> : vector<8xf32>
    %125 = vector.multi_reduction <add>, %122, %cst_61 [1] : vector<8x256xf32> to vector<8xf32>
    %126 = vector.shape_cast %125 : vector<8xf32> to vector<8x1xf32>
    %cst_62 = arith.constant 2.560000e+02 : f32
    %127 = vector.broadcast %cst_62 : f32 to vector<8x1xf32>
    %128 = arith.divf %126, %127 : vector<8x1xf32>
    %129 = vector.broadcast %128 : vector<8x1xf32> to vector<8x256xf32>
    %130 = arith.subf %122, %129 : vector<8x256xf32>
    %131 = arith.mulf %130, %130 : vector<8x256xf32>
    %cst_63 = arith.constant dense<0.000000e+00> : vector<8xf32>
    %132 = vector.multi_reduction <add>, %131, %cst_63 [1] : vector<8x256xf32> to vector<8xf32>
    %133 = vector.shape_cast %132 : vector<8xf32> to vector<8x1xf32>
    %cst_64 = arith.constant 2.560000e+02 : f32
    %134 = vector.broadcast %cst_64 : f32 to vector<8x1xf32>
    %135 = arith.divf %133, %134 : vector<8x1xf32>
    %136 = vector.broadcast %128 : vector<8x1xf32> to vector<8x256xf32>
    %137 = arith.subf %122, %136 : vector<8x256xf32>
    %cst_65 = arith.constant 9.99999974E-6 : f32
    %138 = vector.broadcast %cst_65 : f32 to vector<8x1xf32>
    %139 = arith.addf %135, %138 : vector<8x1xf32>
    %140 = math.rsqrt %139 : vector<8x1xf32>
    %141 = vector.broadcast %140 : vector<8x1xf32> to vector<8x256xf32>
    %142 = arith.mulf %137, %141 : vector<8x256xf32>
    %143 = vector.broadcast %123 : vector<1x256xf32> to vector<8x256xf32>
    %144 = arith.mulf %142, %143 : vector<8x256xf32>
    %145 = vector.broadcast %124 : vector<1x256xf32> to vector<8x256xf32>
    %146 = arith.addf %144, %145 : vector<8x256xf32>
    %147 = arith.truncf %146 : vector<8x256xf32> to vector<8x256xbf16>
    %c0_66 = arith.constant 0 : index
    %c0_67 = arith.constant 0 : index
    %148 = vector.load %arg15[%c0_66, %c0_67] : memref<256x512xbf16, #tpu.memory_space<vmem>>, vector<256x512xbf16>
    %cst_68 = arith.constant dense<0.000000e+00> : vector<8x512xf32>
    %149 = tpu.matmul %147, %148, %cst_68 {dimension_numbers = #tpu.dot_dimension_numbers<[1], [0], [0], [1], [0, 0, 1, 1], [], []>} : vector<8x256xbf16>, vector<256x512xbf16>, vector<8x512xf32> -> vector<8x512xf32>
    %c0_69 = arith.constant 0 : index
    %c0_70 = arith.constant 0 : index
    %150 = vector.load %arg16[%c0_69, %c0_70] : memref<1x512xf32, #tpu.memory_space<vmem>>, vector<1x512xf32>
    %151 = vector.broadcast %150 : vector<1x512xf32> to vector<8x512xf32>
    %152 = arith.addf %149, %151 : vector<8x512xf32>
    %cst_71 = arith.constant 0.000000e+00 : f32
    %153 = vector.broadcast %cst_71 : f32 to vector<8x512xf32>
    %154 = arith.maximumf %152, %153 : vector<8x512xf32>
    %155 = arith.truncf %154 : vector<8x512xf32> to vector<8x512xbf16>
    %c0_72 = arith.constant 0 : index
    %c0_73 = arith.constant 0 : index
    %156 = vector.load %arg17[%c0_72, %c0_73] : memref<512x256xbf16, #tpu.memory_space<vmem>>, vector<512x256xbf16>
    %cst_74 = arith.constant dense<0.000000e+00> : vector<8x256xf32>
    %157 = tpu.matmul %155, %156, %cst_74 {dimension_numbers = #tpu.dot_dimension_numbers<[1], [0], [0], [1], [0, 0, 1, 1], [], []>} : vector<8x512xbf16>, vector<512x256xbf16>, vector<8x256xf32> -> vector<8x256xf32>
    %c0_75 = arith.constant 0 : index
    %c0_76 = arith.constant 0 : index
    %158 = vector.load %arg18[%c0_75, %c0_76] : memref<1x256xf32, #tpu.memory_space<vmem>>, vector<1x256xf32>
    %159 = vector.broadcast %158 : vector<1x256xf32> to vector<8x256xf32>
    %160 = arith.addf %157, %159 : vector<8x256xf32>
    %161 = arith.addf %146, %160 : vector<8x256xf32>
    %c0_77 = arith.constant 0 : index
    %c0_78 = arith.constant 0 : index
    %162 = vector.load %arg13[%c0_77, %c0_78] : memref<1x256xf32, #tpu.memory_space<vmem>>, vector<1x256xf32>
    %c0_79 = arith.constant 0 : index
    %c0_80 = arith.constant 0 : index
    %163 = vector.load %arg14[%c0_79, %c0_80] : memref<1x256xf32, #tpu.memory_space<vmem>>, vector<1x256xf32>
    %cst_81 = arith.constant dense<0.000000e+00> : vector<8xf32>
    %164 = vector.multi_reduction <add>, %161, %cst_81 [1] : vector<8x256xf32> to vector<8xf32>
    %165 = vector.shape_cast %164 : vector<8xf32> to vector<8x1xf32>
    %cst_82 = arith.constant 2.560000e+02 : f32
    %166 = vector.broadcast %cst_82 : f32 to vector<8x1xf32>
    %167 = arith.divf %165, %166 : vector<8x1xf32>
    %168 = vector.broadcast %167 : vector<8x1xf32> to vector<8x256xf32>
    %169 = arith.subf %161, %168 : vector<8x256xf32>
    %170 = arith.mulf %169, %169 : vector<8x256xf32>
    %cst_83 = arith.constant dense<0.000000e+00> : vector<8xf32>
    %171 = vector.multi_reduction <add>, %170, %cst_83 [1] : vector<8x256xf32> to vector<8xf32>
    %172 = vector.shape_cast %171 : vector<8xf32> to vector<8x1xf32>
    %cst_84 = arith.constant 2.560000e+02 : f32
    %173 = vector.broadcast %cst_84 : f32 to vector<8x1xf32>
    %174 = arith.divf %172, %173 : vector<8x1xf32>
    %175 = vector.broadcast %167 : vector<8x1xf32> to vector<8x256xf32>
    %176 = arith.subf %161, %175 : vector<8x256xf32>
    %cst_85 = arith.constant 9.99999974E-6 : f32
    %177 = vector.broadcast %cst_85 : f32 to vector<8x1xf32>
    %178 = arith.addf %174, %177 : vector<8x1xf32>
    %179 = math.rsqrt %178 : vector<8x1xf32>
    %180 = vector.broadcast %179 : vector<8x1xf32> to vector<8x256xf32>
    %181 = arith.mulf %176, %180 : vector<8x256xf32>
    %182 = vector.broadcast %162 : vector<1x256xf32> to vector<8x256xf32>
    %183 = arith.mulf %181, %182 : vector<8x256xf32>
    %184 = vector.broadcast %163 : vector<1x256xf32> to vector<8x256xf32>
    %185 = arith.addf %183, %184 : vector<8x256xf32>
    %c0_86 = arith.constant 0 : index
    %c0_87 = arith.constant 0 : index
    %c0_88 = arith.constant 0 : index
    %186 = vector.load %arg19[%c0_86, %c0_87, %c0_88] : memref<1x8x256xf32, #tpu.memory_space<vmem>>, vector<1x8x256xf32>
    %187 = vector.shape_cast %186 : vector<1x8x256xf32> to vector<8x256xf32>
    %188 = vector.shape_cast %185 : vector<8x256xf32> to vector<1x8x256xf32>
    tpu.vector_store %arg19[%c0_86, %c0_87, %c0_88], %188 {strides = array<i32>} : memref<1x8x256xf32, #tpu.memory_space<vmem>>, vector<1x8x256xf32>,
    return
  }
  func.func @transform_0(%arg0: i32) -> (i32, i32, i32) {
    %c0_i32 = arith.constant 0 : i32
    %c0_i32_0 = arith.constant 0 : i32
    %c0_i32_1 = arith.constant 0 : i32
    return %arg0, %c0_i32, %c0_i32_0 : i32, i32, i32
  }
  func.func @transform_1(%arg0: i32) -> (i32, i32, i32) {
    %c0_i32 = arith.constant 0 : i32
    %c0_i32_0 = arith.constant 0 : i32
    %c0_i32_1 = arith.constant 0 : i32
    return %arg0, %c0_i32, %c0_i32_0 : i32, i32, i32
  }
  func.func @transform_2(%arg0: i32) -> (i32, i32) {
    %c0_i32 = arith.constant 0 : i32
    %c0_i32_0 = arith.constant 0 : i32
    %c0_i32_1 = arith.constant 0 : i32
    return %c0_i32, %c0_i32_0 : i32, i32
  }
  func.func @transform_3(%arg0: i32) -> (i32, i32, i32) {
    %c0_i32 = arith.constant 0 : i32
    %c0_i32_0 = arith.constant 0 : i32
    %c0_i32_1 = arith.constant 0 : i32
    %c0_i32_2 = arith.constant 0 : i32
    return %c0_i32, %c0_i32_0, %c0_i32_1 : i32, i32, i32
  }
  func.func @transform_4(%arg0: i32) -> (i32, i32, i32) {
    %c0_i32 = arith.constant 0 : i32
    %c0_i32_0 = arith.constant 0 : i32
    %c0_i32_1 = arith.constant 0 : i32
    %c0_i32_2 = arith.constant 0 : i32
    return %c0_i32, %c0_i32_0, %c0_i32_1 : i32, i32, i32
  }
  func.func @transform_5(%arg0: i32) -> (i32, i32, i32) {
    %c0_i32 = arith.constant 0 : i32
    %c0_i32_0 = arith.constant 0 : i32
    %c0_i32_1 = arith.constant 0 : i32
    %c0_i32_2 = arith.constant 0 : i32
    return %c0_i32, %c0_i32_0, %c0_i32_1 : i32, i32, i32
  }
  func.func @transform_6(%arg0: i32) -> (i32, i32, i32) {
    %c0_i32 = arith.constant 0 : i32
    %c0_i32_0 = arith.constant 0 : i32
    %c0_i32_1 = arith.constant 0 : i32
    %c0_i32_2 = arith.constant 0 : i32
    return %c0_i32, %c0_i32_0, %c0_i32_1 : i32, i32, i32
  }
  func.func @transform_7(%arg0: i32) -> (i32, i32, i32) {
    %c0_i32 = arith.constant 0 : i32
    %c0_i32_0 = arith.constant 0 : i32
    %c0_i32_1 = arith.constant 0 : i32
    %c0_i32_2 = arith.constant 0 : i32
    return %c0_i32, %c0_i32_0, %c0_i32_1 : i32, i32, i32
  }
  func.func @transform_8(%arg0: i32) -> (i32, i32) {
    %c0_i32 = arith.constant 0 : i32
    %c0_i32_0 = arith.constant 0 : i32
    %c0_i32_1 = arith.constant 0 : i32
    return %c0_i32, %c0_i32_0 : i32, i32
  }
  func.func @transform_9(%arg0: i32) -> (i32, i32) {
    %c0_i32 = arith.constant 0 : i32
    %c0_i32_0 = arith.constant 0 : i32
    %c0_i32_1 = arith.constant 0 : i32
    return %c0_i32, %c0_i32_0 : i32, i32
  }
  func.func @transform_10(%arg0: i32) -> (i32, i32) {
    %c0_i32 = arith.constant 0 : i32
    %c0_i32_0 = arith.constant 0 : i32
    %c0_i32_1 = arith.constant 0 : i32
    return %c0_i32, %c0_i32_0 : i32, i32
  }
  func.func @transform_11(%arg0: i32) -> (i32, i32) {
    %c0_i32 = arith.constant 0 : i32
    %c0_i32_0 = arith.constant 0 : i32
    %c0_i32_1 = arith.constant 0 : i32
    return %c0_i32, %c0_i32_0 : i32, i32
  }
  func.func @transform_12(%arg0: i32) -> (i32, i32) {
    %c0_i32 = arith.constant 0 : i32
    %c0_i32_0 = arith.constant 0 : i32
    %c0_i32_1 = arith.constant 0 : i32
    return %c0_i32, %c0_i32_0 : i32, i32
  }
  func.func @transform_13(%arg0: i32) -> (i32, i32) {
    %c0_i32 = arith.constant 0 : i32
    %c0_i32_0 = arith.constant 0 : i32
    %c0_i32_1 = arith.constant 0 : i32
    return %c0_i32, %c0_i32_0 : i32, i32
  }
  func.func @transform_14(%arg0: i32) -> (i32, i32) {
    %c0_i32 = arith.constant 0 : i32
    %c0_i32_0 = arith.constant 0 : i32
    %c0_i32_1 = arith.constant 0 : i32
    return %c0_i32, %c0_i32_0 : i32, i32
  }
  func.func @transform_15(%arg0: i32) -> (i32, i32) {
    %c0_i32 = arith.constant 0 : i32
    %c0_i32_0 = arith.constant 0 : i32
    %c0_i32_1 = arith.constant 0 : i32
    return %c0_i32, %c0_i32_0 : i32, i32
  }
  func.func @transform_16(%arg0: i32) -> (i32, i32) {
    %c0_i32 = arith.constant 0 : i32
    %c0_i32_0 = arith.constant 0 : i32
    %c0_i32_1 = arith.constant 0 : i32
    return %c0_i32, %c0_i32_0 : i32, i32
  }
  func.func @transform_17(%arg0: i32) -> (i32, i32) {
    %c0_i32 = arith.constant 0 : i32
    %c0_i32_0 = arith.constant 0 : i32
    %c0_i32_1 = arith.constant 0 : i32
    return %c0_i32, %c0_i32_0 : i32, i32
  }
  func.func @transform_18(%arg0: i32) -> (i32, i32, i32) {
    %c0_i32 = arith.constant 0 : i32
    %c0_i32_0 = arith.constant 0 : i32
    %c0_i32_1 = arith.constant 0 : i32
    return %arg0, %c0_i32, %c0_i32_0 : i32, i32, i32
  }
}

</mosaic_0001>

<llo_original>
// kernel: tpu_custom_call.1
$region0: #{tpu_custom_call.1}
  #allocation0 [shape = 'u32[]', space=smem, size = 0x4, offset = 0x4, fixed_abs, tag = 'smem constant byte address 0x4 - core index']
  #allocation1 [shape = 'u32[72,128]{1,0:T(1,128)}', space=vmem, size = 0x9000, scoped, tag = 'internal scratch']
  %s0 = inlined_call_operand.hbm [shape: f32[2,8,256], index: 0, kind: input, shape index: {}]
  %s1 = inlined_call_operand.hbm [shape: f32[2,16,256], index: 1, kind: input, shape index: {}]
  %s2 = inlined_call_operand.hbm [shape: f32[8,8], index: 2, kind: input, shape index: {}]
  %s3 = inlined_call_operand.hbm [shape: bf16[6,256,128], index: 3, kind: input, shape index: {}]
  %s4 = inlined_call_operand.hbm [shape: bf16[2,128,256], index: 4, kind: input, shape index: {}]
  %s5 = inlined_call_operand.hbm [shape: bf16[2,256,128], index: 5, kind: input, shape index: {}]
  %s6 = inlined_call_operand.hbm [shape: bf16[4,256,128], index: 6, kind: input, shape index: {}]
  %s7 = inlined_call_operand.hbm [shape: bf16[2,128,256], index: 7, kind: input, shape index: {}]
  %s8 = inlined_call_operand.vmem [shape: f32[1,256], index: 8, kind: input, shape index: {}]
  %s9 = inlined_call_operand.vmem [shape: f32[1,256], index: 9, kind: input, shape index: {}]
  %s10 = inlined_call_operand.hbm [shape: f32[1,256], index: 10, kind: input, shape index: {}]
  %s11 = inlined_call_operand.vmem [shape: f32[1,256], index: 11, kind: input, shape index: {}]
  %s12 = inlined_call_operand.hbm [shape: f32[1,256], index: 12, kind: input, shape index: {}]
  %s13 = inlined_call_operand.vmem [shape: f32[1,256], index: 13, kind: input, shape index: {}]
  %s14 = inlined_call_operand.hbm [shape: bf16[256,512], index: 14, kind: input, shape index: {}]
  %s15 = inlined_call_operand.vmem [shape: f32[1,512], index: 15, kind: input, shape index: {}]
  %s16 = inlined_call_operand.hbm [shape: bf16[512,256], index: 16, kind: input, shape index: {}]
  %s17 = inlined_call_operand.vmem [shape: f32[1,256], index: 17, kind: input, shape index: {}]
  %s18 = inlined_call_operand.hbm [shape: f32[2,8,256], index: 18, kind: output, shape index: {}]
  %s19 = sld [smem:[#allocation0]]
  $region153: #{tpu_custom_call.1} parent=0
    _
  %s21 = ssub.s32 1, %s19
  %s22 = scalar_select 0, %s21, %s19
  $region1: #{tpu_custom_call.1} parent=0
    #allocation2 [shape = 'u8[16384]{0}', space=vmem, size = 0x4000, scoped, tag = 'input window, operand 0']
    #allocation3 [shape = 's32[2]{0}', space=sflag, size = 0x8, scoped, tag = 'scoped memory for tpu_custom_call.1']
    #allocation4 [shape = 's32[2]{0}', space=sflag, size = 0x8, scoped, tag = 'scoped memory for tpu_custom_call.1']
    #allocation5 [shape = 'u8[32768]{0}', space=vmem, size = 0x8000, scoped, tag = 'input window, operand 1']
    #allocation6 [shape = 's32[2]{0}', space=sflag, size = 0x8, scoped, tag = 'scoped memory for tpu_custom_call.1']
    #allocation7 [shape = 'u8[4096]{0}', space=vmem, size = 0x1000, scoped, tag = 'input window, operand 2, single buffered']
    #allocation8 [shape = 'u8[393216]{0}', space=vmem, size = 0x60000, scoped, tag = 'input window, operand 3, single buffered']
    #allocation9 [shape = 's32[1]{0}', space=sflag, size = 0x4, scoped, tag = 'scoped memory for tpu_custom_call.1']
    #allocation10 [shape = 'u8[131072]{0}', space=vmem, size = 0x20000, scoped, tag = 'input window, operand 4, single buffered']
    #allocation11 [shape = 'u8[131072]{0}', space=vmem, size = 0x20000, scoped, tag = 'input window, operand 5, single buffered']
    #allocation12 [shape = 's32[1]{0}', space=sflag, size = 0x4, scoped, tag = 'scoped memory for tpu_custom_call.1']
    #allocation13 [shape = 'u8[262144]{0}', space=vmem, size = 0x40000, scoped, tag = 'input window, operand 6, single buffered']
    #allocation14 [shape = 'u8[131072]{0}', space=vmem, size = 0x20000, scoped, tag = 'input window, operand 7, single buffered']
    #allocation15 [shape = 's32[1]{0}', space=sflag, size = 0x4, scoped, tag = 'scoped memory for tpu_custom_call.1']
    #allocation16 [shape = 'u8[1024]{0}', space=vmem, size = 0x400, scoped, tag = 'input window, operand 10, single buffered']
    #allocation17 [shape = 'u8[1024]{0}', space=vmem, size = 0x400, scoped, tag = 'input window, operand 12, single buffered']
    #allocation18 [shape = 's32[1]{0}', space=sflag, size = 0x4, scoped, tag = 'scoped memory for tpu_custom_call.1']
    #allocation19 [shape = 'u8[262144]{0}', space=vmem, size = 0x40000, scoped, tag = 'input window, operand 14, single buffered']
    #allocation20 [shape = 'u8[262144]{0}', space=vmem, size = 0x40000, scoped, tag = 'input window, operand 16, single buffered']
    #allocation21 [shape = 's32[1]{0}', space=sflag, size = 0x4, scoped, tag = 'scoped memory for tpu_custom_call.1']
    #allocation22 [shape = 'u8[16384]{0}', space=vmem, size = 0x4000, scoped, tag = 'output window, operand 0']
    %23 = vsyncpa [#allocation3], 0
    %s24 = scalar_lea.sflag [#allocation3], 1
    %25 = vsyncpa %s24, 0
    %26 = vsyncpa [#allocation6], 0
    %s27 = scalar_lea.sflag [#allocation6], 1
    %28 = vsyncpa %s27, 0
    %29 = vsyncpa [#allocation9], 0
    %30 = vsyncpa [#allocation12], 0
    %31 = vsyncpa [#allocation15], 0
    %32 = vsyncpa [#allocation18], 0
    %33 = vsyncpa [#allocation21], 0
    %34 = vsyncpa [#allocation4], 0
    %s35 = scalar_lea.sflag [#allocation4], 1
    %36 = vsyncpa %s35, 0
    loop: start=0, step=1, limit=4
    $region2: #{tpu_custom_call.1} parent=1 // loop_pre_header
      _
    $region3: #{tpu_custom_call.1} parent=1 // loop_header
      %s38 = sphi 0, %s42
      %p39 = scmp.ge.s32.totalorder %s38, 4
      %s48 = sphi 0, %s50
      %s51 = sphi 0, %s48
      %s52 = sphi 0, %s51
      %s68 = sphi 0, %s52
      %s74 = sphi 0, %s76
      %s77 = sphi 0, %s74
      %s78 = sphi 0, %s77
      %s94 = sphi 0, %s78
      %s98 = sphi 0, %s98
      %s100 = sphi 0, %s98
      %s101 = sphi 0, %s100
      %s115 = sphi 0, %s101
      %s119 = sphi 0, %s119
      %s121 = sphi 0, %s119
      %s122 = sphi 0, %s121
      %s136 = sphi 0, %s122
      %s140 = sphi 0, %s140
      %s142 = sphi 0, %s140
      %s143 = sphi 0, %s142
      %s157 = sphi 0, %s143
      %s161 = sphi 0, %s161
      %s163 = sphi 0, %s161
      %s164 = sphi 0, %s163
      %s178 = sphi 0, %s164
      %s182 = sphi 0, %s182
      %s184 = sphi 0, %s182
      %s185 = sphi 0, %s184
      %s199 = sphi 0, %s185
      %s203 = sphi 0, %s203
      %s205 = sphi 0, %s203
      %s206 = sphi 0, %s205
      %s220 = sphi 0, %s206
      %s224 = sphi 0, %s224
      %s226 = sphi 0, %s224
      %s227 = sphi 0, %s226
      %s241 = sphi 0, %s227
      %s245 = sphi 0, %s245
      %s247 = sphi 0, %s245
      %s248 = sphi 0, %s247
      %s262 = sphi 0, %s248
      %s266 = sphi 0, %s266
      %s268 = sphi 0, %s266
      %s269 = sphi 0, %s268
      %s283 = sphi 0, %s269
      %s287 = sphi 0, %s287
      %s289 = sphi 0, %s287
      %s290 = sphi 0, %s289
      %s304 = sphi 0, %s290
      %s308 = sphi 0, %s308
      %s310 = sphi 0, %s308
      %s311 = sphi 0, %s310
      %s325 = sphi 0, %s311
      %s329 = sphi 0, %s329
      %s331 = sphi 0, %s329
      %s332 = sphi 0, %s331
      %s346 = sphi 0, %s332
      %s350 = sphi 0, %s350
      %s352 = sphi 0, %s350
      %s353 = sphi 0, %s352
      %s367 = sphi 0, %s353
      %s371 = sphi 0, %s371
      %s373 = sphi 0, %s371
      %s374 = sphi 0, %s373
      %s388 = sphi 0, %s374
      %s392 = sphi 0, %s392
      %s394 = sphi 0, %s392
      %s395 = sphi 0, %s394
      %s409 = sphi 0, %s395
      %s413 = sphi 0, %s413
      %s415 = sphi 0, %s413
      %s416 = sphi 0, %s415
      %s430 = sphi 0, %s416
      %s436 = sphi 0, %s438
      %s439 = sphi 0, %s436
      %s440 = sphi 0, %s439
      %s456 = sphi 0, %s440
    $region4: #{tpu_custom_call.1} parent=1 // loop_header_branch
      %41 = sbr.rel (%p39) target = $region8
    $region5: #{tpu_custom_call.1} parent=1 // loop_body
      %s43 = ssub.s32 %s38, 1
      %s44 = ssub.s32 %s38, 2
      %s45 = sadd.s32 %s38, 1
      %s46 = ssub.s32 %s38, %s45
      %p47 = scmp.eq.s32.totalorder %s46, 0
      %s49 = sadd.s32 %s48, 1
      %s50 = scalar_select %p47, %s48, %s49
      %p53 = pneg %p47
      %p54 = scmp.eq.s32.totalorder %s38, 1
      %p55 = por %p53, %p54
      %p56 = scmp.ne.s32.totalorder %s48, %s51
      %p57 = scmp.eq.s32.totalorder %s38, 0
      %p58 = por %p56, %p57
      %p59 = scmp.ne.s32.totalorder %s48, %s51
      %p60 = scmp.eq.s32.totalorder %s43, 1
      %p61 = por %p59, %p60
      %p62 = scmp.ne.s32.totalorder %s51, %s52
      %p63 = scmp.eq.s32.totalorder %s43, 0
      %p64 = por %p62, %p63
      %p65 = scmp.ne.s32.totalorder %s51, %s52
      %p66 = scmp.eq.s32.totalorder %s44, 1
      %p67 = por %p65, %p66
      %p69 = scmp.ne.s32.totalorder %s52, %s68
      %p70 = scmp.eq.s32.totalorder %s44, 0
      %p71 = por %p69, %p70
      %s72 = ssub.s32 %s38, %s45
      %p73 = scmp.eq.s32.totalorder %s72, 0
      %s75 = sadd.s32 %s74, 1
      %s76 = scalar_select %p73, %s74, %s75
      %p79 = pneg %p73
      %p80 = scmp.eq.s32.totalorder %s38, 1
      %p81 = por %p79, %p80
      %p82 = scmp.ne.s32.totalorder %s74, %s77
      %p83 = scmp.eq.s32.totalorder %s38, 0
      %p84 = por %p82, %p83
      %p85 = scmp.ne.s32.totalorder %s74, %s77
      %p86 = scmp.eq.s32.totalorder %s43, 1
      %p87 = por %p85, %p86
      %p88 = scmp.ne.s32.totalorder %s77, %s78
      %p89 = scmp.eq.s32.totalorder %s43, 0
      %p90 = por %p88, %p89
      %p91 = scmp.ne.s32.totalorder %s77, %s78
      %p92 = scmp.eq.s32.totalorder %s44, 1
      %p93 = por %p91, %p92
      %p95 = scmp.ne.s32.totalorder %s78, %s94
      %p96 = scmp.eq.s32.totalorder %s44, 0
      %p97 = por %p95, %p96
      %s99 = sadd.s32 %s98, 1
      %p102 = scmp.eq.s32.totalorder %s38, 1
      %p103 = scmp.ne.s32.totalorder %s98, %s100
      %p104 = scmp.eq.s32.totalorder %s38, 0
      %p105 = por %p103, %p104
      %p106 = scmp.ne.s32.totalorder %s98, %s100
      %p107 = scmp.eq.s32.totalorder %s43, 1
      %p108 = por %p106, %p107
      %p109 = scmp.ne.s32.totalorder %s100, %s101
      %p110 = scmp.eq.s32.totalorder %s43, 0
      %p111 = por %p109, %p110
      %p112 = scmp.ne.s32.totalorder %s100, %s101
      %p113 = scmp.eq.s32.totalorder %s44, 1
      %p114 = por %p112, %p113
      %p116 = scmp.ne.s32.totalorder %s101, %s115
      %p117 = scmp.eq.s32.totalorder %s44, 0
      %p118 = por %p116, %p117
      %s120 = sadd.s32 %s119, 1
      %p123 = scmp.eq.s32.totalorder %s38, 1
      %p124 = scmp.ne.s32.totalorder %s119, %s121
      %p125 = scmp.eq.s32.totalorder %s38, 0
      %p126 = por %p124, %p125
      %p127 = scmp.ne.s32.totalorder %s119, %s121
      %p128 = scmp.eq.s32.totalorder %s43, 1
      %p129 = por %p127, %p128
      %p130 = scmp.ne.s32.totalorder %s121, %s122
      %p131 = scmp.eq.s32.totalorder %s43, 0
      %p132 = por %p130, %p131
      %p133 = scmp.ne.s32.totalorder %s121, %s122
      %p134 = scmp.eq.s32.totalorder %s44, 1
      %p135 = por %p133, %p134
      %p137 = scmp.ne.s32.totalorder %s122, %s136
      %p138 = scmp.eq.s32.totalorder %s44, 0
      %p139 = por %p137, %p138
      %s141 = sadd.s32 %s140, 1
      %p144 = scmp.eq.s32.totalorder %s38, 1
      %p145 = scmp.ne.s32.totalorder %s140, %s142
      %p146 = scmp.eq.s32.totalorder %s38, 0
      %p147 = por %p145, %p146
      %p148 = scmp.ne.s32.totalorder %s140, %s142
      %p149 = scmp.eq.s32.totalorder %s43, 1
      %p150 = por %p148, %p149
      %p151 = scmp.ne.s32.totalorder %s142, %s143
      %p152 = scmp.eq.s32.totalorder %s43, 0
      %p153 = por %p151, %p152
      %p154 = scmp.ne.s32.totalorder %s142, %s143
      %p155 = scmp.eq.s32.totalorder %s44, 1
      %p156 = por %p154, %p155
      %p158 = scmp.ne.s32.totalorder %s143, %s157
      %p159 = scmp.eq.s32.totalorder %s44, 0
      %p160 = por %p158, %p159
      %s162 = sadd.s32 %s161, 1
      %p165 = scmp.eq.s32.totalorder %s38, 1
      %p166 = scmp.ne.s32.totalorder %s161, %s163
      %p167 = scmp.eq.s32.totalorder %s38, 0
      %p168 = por %p166, %p167
      %p169 = scmp.ne.s32.totalorder %s161, %s163
      %p170 = scmp.eq.s32.totalorder %s43, 1
      %p171 = por %p169, %p170
      %p172 = scmp.ne.s32.totalorder %s163, %s164
      %p173 = scmp.eq.s32.totalorder %s43, 0
      %p174 = por %p172, %p173
      %p175 = scmp.ne.s32.totalorder %s163, %s164
      %p176 = scmp.eq.s32.totalorder %s44, 1
      %p177 = por %p175, %p176
      %p179 = scmp.ne.s32.totalorder %s164, %s178
      %p180 = scmp.eq.s32.totalorder %s44, 0
      %p181 = por %p179, %p180
      %s183 = sadd.s32 %s182, 1
      %p186 = scmp.eq.s32.totalorder %s38, 1
      %p187 = scmp.ne.s32.totalorder %s182, %s184
      %p188 = scmp.eq.s32.totalorder %s38, 0
      %p189 = por %p187, %p188
      %p190 = scmp.ne.s32.totalorder %s182, %s184
      %p191 = scmp.eq.s32.totalorder %s43, 1
      %p192 = por %p190, %p191
      %p193 = scmp.ne.s32.totalorder %s184, %s185
      %p194 = scmp.eq.s32.totalorder %s43, 0
      %p195 = por %p193, %p194
      %p196 = scmp.ne.s32.totalorder %s184, %s185
      %p197 = scmp.eq.s32.totalorder %s44, 1
      %p198 = por %p196, %p197
      %p200 = scmp.ne.s32.totalorder %s185, %s199
      %p201 = scmp.eq.s32.totalorder %s44, 0
      %p202 = por %p200, %p201
      %s204 = sadd.s32 %s203, 1
      %p207 = scmp.eq.s32.totalorder %s38, 1
      %p208 = scmp.ne.s32.totalorder %s203, %s205
      %p209 = scmp.eq.s32.totalorder %s38, 0
      %p210 = por %p208, %p209
      %p211 = scmp.ne.s32.totalorder %s203, %s205
      %p212 = scmp.eq.s32.totalorder %s43, 1
      %p213 = por %p211, %p212
      %p214 = scmp.ne.s32.totalorder %s205, %s206
      %p215 = scmp.eq.s32.totalorder %s43, 0
      %p216 = por %p214, %p215
      %p217 = scmp.ne.s32.totalorder %s205, %s206
      %p218 = scmp.eq.s32.totalorder %s44, 1
      %p219 = por %p217, %p218
      %p221 = scmp.ne.s32.totalorder %s206, %s220
      %p222 = scmp.eq.s32.totalorder %s44, 0
      %p223 = por %p221, %p222
      %s225 = sadd.s32 %s224, 1
      %p228 = scmp.eq.s32.totalorder %s38, 1
      %p229 = scmp.ne.s32.totalorder %s224, %s226
      %p230 = scmp.eq.s32.totalorder %s38, 0
      %p231 = por %p229, %p230
      %p232 = scmp.ne.s32.totalorder %s224, %s226
      %p233 = scmp.eq.s32.totalorder %s43, 1
      %p234 = por %p232, %p233
      %p235 = scmp.ne.s32.totalorder %s226, %s227
      %p236 = scmp.eq.s32.totalorder %s43, 0
      %p237 = por %p235, %p236
      %p238 = scmp.ne.s32.totalorder %s226, %s227
      %p239 = scmp.eq.s32.totalorder %s44, 1
      %p240 = por %p238, %p239
      %p242 = scmp.ne.s32.totalorder %s227, %s241
      %p243 = scmp.eq.s32.totalorder %s44, 0
      %p244 = por %p242, %p243
      %s246 = sadd.s32 %s245, 1
      %p249 = scmp.eq.s32.totalorder %s38, 1
      %p250 = scmp.ne.s32.totalorder %s245, %s247
      %p251 = scmp.eq.s32.totalorder %s38, 0
      %p252 = por %p250, %p251
      %p253 = scmp.ne.s32.totalorder %s245, %s247
      %p254 = scmp.eq.s32.totalorder %s43, 1
      %p255 = por %p253, %p254
      %p256 = scmp.ne.s32.totalorder %s247, %s248
      %p257 = scmp.eq.s32.totalorder %s43, 0
      %p258 = por %p256, %p257
      %p259 = scmp.ne.s32.totalorder %s247, %s248
      %p260 = scmp.eq.s32.totalorder %s44, 1
      %p261 = por %p259, %p260
      %p263 = scmp.ne.s32.totalorder %s248, %s262
      %p264 = scmp.eq.s32.totalorder %s44, 0
      %p265 = por %p263, %p264
      %s267 = sadd.s32 %s266, 1
      %p270 = scmp.eq.s32.totalorder %s38, 1
      %p271 = scmp.ne.s32.totalorder %s266, %s268
      %p272 = scmp.eq.s32.totalorder %s38, 0
      %p273 = por %p271, %p272
      %p274 = scmp.ne.s32.totalorder %s266, %s268
      %p275 = scmp.eq.s32.totalorder %s43, 1
      %p276 = por %p274, %p275
      %p277 = scmp.ne.s32.totalorder %s268, %s269
      %p278 = scmp.eq.s32.totalorder %s43, 0
      %p279 = por %p277, %p278
      %p280 = scmp.ne.s32.totalorder %s268, %s269
      %p281 = scmp.eq.s32.totalorder %s44, 1
      %p282 = por %p280, %p281
      %p284 = scmp.ne.s32.totalorder %s269, %s283
      %p285 = scmp.eq.s32.totalorder %s44, 0
      %p286 = por %p284, %p285
      %s288 = sadd.s32 %s287, 1
      %p291 = scmp.eq.s32.totalorder %s38, 1
      %p292 = scmp.ne.s32.totalorder %s287, %s289
      %p293 = scmp.eq.s32.totalorder %s38, 0
      %p294 = por %p292, %p293
      %p295 = scmp.ne.s32.totalorder %s287, %s289
      %p296 = scmp.eq.s32.totalorder %s43, 1
      %p297 = por %p295, %p296
      %p298 = scmp.ne.s32.totalorder %s289, %s290
      %p299 = scmp.eq.s32.totalorder %s43, 0
      %p300 = por %p298, %p299
      %p301 = scmp.ne.s32.totalorder %s289, %s290
      %p302 = scmp.eq.s32.totalorder %s44, 1
      %p303 = por %p301, %p302
      %p305 = scmp.ne.s32.totalorder %s290, %s304
      %p306 = scmp.eq.s32.totalorder %s44, 0
      %p307 = por %p305, %p306
      %s309 = sadd.s32 %s308, 1
      %p312 = scmp.eq.s32.totalorder %s38, 1
      %p313 = scmp.ne.s32.totalorder %s308, %s310
      %p314 = scmp.eq.s32.totalorder %s38, 0
      %p315 = por %p313, %p314
      %p316 = scmp.ne.s32.totalorder %s308, %s310
      %p317 = scmp.eq.s32.totalorder %s43, 1
      %p318 = por %p316, %p317
      %p319 = scmp.ne.s32.totalorder %s310, %s311
      %p320 = scmp.eq.s32.totalorder %s43, 0
      %p321 = por %p319, %p320
      %p322 = scmp.ne.s32.totalorder %s310, %s311
      %p323 = scmp.eq.s32.totalorder %s44, 1
      %p324 = por %p322, %p323
      %p326 = scmp.ne.s32.totalorder %s311, %s325
      %p327 = scmp.eq.s32.totalorder %s44, 0
      %p328 = por %p326, %p327
      %s330 = sadd.s32 %s329, 1
      %p333 = scmp.eq.s32.totalorder %s38, 1
      %p334 = scmp.ne.s32.totalorder %s329, %s331
      %p335 = scmp.eq.s32.totalorder %s38, 0
      %p336 = por %p334, %p335
      %p337 = scmp.ne.s32.totalorder %s329, %s331
      %p338 = scmp.eq.s32.totalorder %s43, 1
      %p339 = por %p337, %p338
      %p340 = scmp.ne.s32.totalorder %s331, %s332
      %p341 = scmp.eq.s32.totalorder %s43, 0
      %p342 = por %p340, %p341
      %p343 = scmp.ne.s32.totalorder %s331, %s332
      %p344 = scmp.eq.s32.totalorder %s44, 1
      %p345 = por %p343, %p344
      %p347 = scmp.ne.s32.totalorder %s332, %s346
      %p348 = scmp.eq.s32.totalorder %s44, 0
      %p349 = por %p347, %p348
      %s351 = sadd.s32 %s350, 1
      %p354 = scmp.eq.s32.totalorder %s38, 1
      %p355 = scmp.ne.s32.totalorder %s350, %s352
      %p356 = scmp.eq.s32.totalorder %s38, 0
      %p357 = por %p355, %p356
      %p358 = scmp.ne.s32.totalorder %s350, %s352
      %p359 = scmp.eq.s32.totalorder %s43, 1
      %p360 = por %p358, %p359
      %p361 = scmp.ne.s32.totalorder %s352, %s353
      %p362 = scmp.eq.s32.totalorder %s43, 0
      %p363 = por %p361, %p362
      %p364 = scmp.ne.s32.totalorder %s352, %s353
      %p365 = scmp.eq.s32.totalorder %s44, 1
      %p366 = por %p364, %p365
      %p368 = scmp.ne.s32.totalorder %s353, %s367
      %p369 = scmp.eq.s32.totalorder %s44, 0
      %p370 = por %p368, %p369
      %s372 = sadd.s32 %s371, 1
      %p375 = scmp.eq.s32.totalorder %s38, 1
      %p376 = scmp.ne.s32.totalorder %s371, %s373
      %p377 = scmp.eq.s32.totalorder %s38, 0
      %p378 = por %p376, %p377
      %p379 = scmp.ne.s32.totalorder %s371, %s373
      %p380 = scmp.eq.s32.totalorder %s43, 1
      %p381 = por %p379, %p380
      %p382 = scmp.ne.s32.totalorder %s373, %s374
      %p383 = scmp.eq.s32.totalorder %s43, 0
      %p384 = por %p382, %p383
      %p385 = scmp.ne.s32.totalorder %s373, %s374
      %p386 = scmp.eq.s32.totalorder %s44, 1
      %p387 = por %p385, %p386
      %p389 = scmp.ne.s32.totalorder %s374, %s388
      %p390 = scmp.eq.s32.totalorder %s44, 0
      %p391 = por %p389, %p390
      %s393 = sadd.s32 %s392, 1
      %p396 = scmp.eq.s32.totalorder %s38, 1
      %p397 = scmp.ne.s32.totalorder %s392, %s394
      %p398 = scmp.eq.s32.totalorder %s38, 0
      %p399 = por %p397, %p398
      %p400 = scmp.ne.s32.totalorder %s392, %s394
      %p401 = scmp.eq.s32.totalorder %s43, 1
      %p402 = por %p400, %p401
      %p403 = scmp.ne.s32.totalorder %s394, %s395
      %p404 = scmp.eq.s32.totalorder %s43, 0
      %p405 = por %p403, %p404
      %p406 = scmp.ne.s32.totalorder %s394, %s395
      %p407 = scmp.eq.s32.totalorder %s44, 1
      %p408 = por %p406, %p407
      %p410 = scmp.ne.s32.totalorder %s395, %s409
      %p411 = scmp.eq.s32.totalorder %s44, 0
      %p412 = por %p410, %p411
      %s414 = sadd.s32 %s413, 1
      %p417 = scmp.eq.s32.totalorder %s38, 1
      %p418 = scmp.ne.s32.totalorder %s413, %s415
      %p419 = scmp.eq.s32.totalorder %s38, 0
      %p420 = por %p418, %p419
      %p421 = scmp.ne.s32.totalorder %s413, %s415
      %p422 = scmp.eq.s32.totalorder %s43, 1
      %p423 = por %p421, %p422
      %p424 = scmp.ne.s32.totalorder %s415, %s416
      %p425 = scmp.eq.s32.totalorder %s43, 0
      %p426 = por %p424, %p425
      %p427 = scmp.ne.s32.totalorder %s415, %s416
      %p428 = scmp.eq.s32.totalorder %s44, 1
      %p429 = por %p427, %p428
      %p431 = scmp.ne.s32.totalorder %s416, %s430
      %p432 = scmp.eq.s32.totalorder %s44, 0
      %p433 = por %p431, %p432
      %s434 = ssub.s32 %s38, %s45
      %p435 = scmp.eq.s32.totalorder %s434, 0
      %s437 = sadd.s32 %s436, 1
      %s438 = scalar_select %p435, %s436, %s437
      %p441 = pneg %p435
      %p442 = scmp.eq.s32.totalorder %s38, 1
      %p443 = por %p441, %p442
      %p444 = scmp.ne.s32.totalorder %s436, %s439
      %p445 = scmp.eq.s32.totalorder %s38, 0
      %p446 = por %p444, %p445
      %p447 = scmp.ne.s32.totalorder %s436, %s439
      %p448 = scmp.eq.s32.totalorder %s43, 1
      %p449 = por %p447, %p448
      %p450 = scmp.ne.s32.totalorder %s439, %s440
      %p451 = scmp.eq.s32.totalorder %s43, 0
      %p452 = por %p450, %p451
      %p453 = scmp.ne.s32.totalorder %s439, %s440
      %p454 = scmp.eq.s32.totalorder %s44, 1
      %p455 = por %p453, %p454
      %p457 = scmp.ne.s32.totalorder %s440, %s456
      %p458 = scmp.eq.s32.totalorder %s44, 0
      %p459 = por %p457, %p458
      %p460 = scmp.le.s32.totalorder 1, %s38
      %p461 = scmp.lt.s32.totalorder %s38, 3
      %p462 = pnand %p460, %p461
      %p463 = pneg %p462
      // Predicated region
      $region9: #{tpu_custom_call.1} parent=5 // pred_check
        _
      $region10: #{tpu_custom_call.1} parent=5 // pred_check_branch
        %465 = sbr.rel (%p462) target = $region12
      $region11: #{tpu_custom_call.1} parent=5 // pred_region
        %s466 = ssub.s32 %s38, 1
        // Predicated region
        $region13: #{tpu_custom_call.1} parent=11 // pred_check
          %p467 = pneg %p111
        $region14: #{tpu_custom_call.1} parent=11 // pred_check_branch
          %469 = sbr.rel (%p467) target = $region16
        $region15: #{tpu_custom_call.1} parent=11 // pred_region
          %471 = vsyncadd [#allocation6], 0
          %s473 = sshll.u32 %s2, 4
          %s474 = int_to_ptr.hbm [resolvable:$true] %s473
          %s475 = sshll.u32 [#allocation7], 4
          %s476 = int_to_ptr.vmem [resolvable:$true] %s475
          %478 = dma.hbm_to_vmem [thread:$0]  %s474, 128, %s476, [#allocation6]
        $region16: #{tpu_custom_call.1} parent=11 // pred_fallthru
          _
        // Predicated region
        $region17: #{tpu_custom_call.1} parent=11 // pred_check
          %p479 = pneg %p132
        $region18: #{tpu_custom_call.1} parent=11 // pred_check_branch
          %481 = sbr.rel (%p479) target = $region20
        $region19: #{tpu_custom_call.1} parent=11 // pred_region
          %483 = vsyncadd [#allocation9], 0
          %s484 = sshll.u32 %s3, 4
          %s485 = int_to_ptr.hbm [resolvable:$true] %s484
          %s486 = sshll.u32 [#allocation8], 4
          %s487 = int_to_ptr.vmem [resolvable:$true] %s486
          %492 = dma.hbm_to_vmem [thread:$0]  %s485, 12288, %s487, [#allocation9], 64, 64, 4
        $region20: #{tpu_custom_call.1} parent=11 // pred_fallthru
          _
        // Predicated region
        $region21: #{tpu_custom_call.1} parent=11 // pred_check
          %p493 = pneg %p153
        $region22: #{tpu_custom_call.1} parent=11 // pred_check_branch
          %495 = sbr.rel (%p493) target = $region24
        $region23: #{tpu_custom_call.1} parent=11 // pred_region
          %497 = vsyncadd [#allocation9], 0
          %s498 = sshll.u32 %s4, 4
          %s499 = int_to_ptr.hbm [resolvable:$true] %s498
          %s500 = sshll.u32 [#allocation10], 4
          %s501 = int_to_ptr.vmem [resolvable:$true] %s500
          %506 = dma.hbm_to_vmem [thread:$0]  %s499, 4096, %s501, [#allocation9], 128, 128, 8
        $region24: #{tpu_custom_call.1} parent=11 // pred_fallthru
          _
        // Predicated region
        $region25: #{tpu_custom_call.1} parent=11 // pred_check
          %p507 = pneg %p174
        $region26: #{tpu_custom_call.1} parent=11 // pred_check_branch
          %509 = sbr.rel (%p507) target = $region28
        $region27: #{tpu_custom_call.1} parent=11 // pred_region
          %511 = vsyncadd [#allocation12], 0
          %s512 = sshll.u32 %s5, 4
          %s513 = int_to_ptr.hbm [resolvable:$true] %s512
          %s514 = sshll.u32 [#allocation11], 4
          %s515 = int_to_ptr.vmem [resolvable:$true] %s514
          %520 = dma.hbm_to_vmem [thread:$0]  %s513, 4096, %s515, [#allocation12], 64, 64, 4
        $region28: #{tpu_custom_call.1} parent=11 // pred_fallthru
          _
        // Predicated region
        $region29: #{tpu_custom_call.1} parent=11 // pred_check
          %p521 = pneg %p195
        $region30: #{tpu_custom_call.1} parent=11 // pred_check_branch
          %523 = sbr.rel (%p521) target = $region32
        $region31: #{tpu_custom_call.1} parent=11 // pred_region
          %525 = vsyncadd [#allocation12], 0
          %s526 = sshll.u32 %s6, 4
          %s527 = int_to_ptr.hbm [resolvable:$true] %s526
          %s528 = sshll.u32 [#allocation13], 4
          %s529 = int_to_ptr.vmem [resolvable:$true] %s528
          %534 = dma.hbm_to_vmem [thread:$0]  %s527, 8192, %s529, [#allocation12], 64, 64, 4
        $region32: #{tpu_custom_call.1} parent=11 // pred_fallthru
          _
        // Predicated region
        $region33: #{tpu_custom_call.1} parent=11 // pred_check
          %p535 = pneg %p216
        $region34: #{tpu_custom_call.1} parent=11 // pred_check_branch
          %537 = sbr.rel (%p535) target = $region36
        $region35: #{tpu_custom_call.1} parent=11 // pred_region
          %539 = vsyncadd [#allocation15], 0
          %s540 = sshll.u32 %s7, 4
          %s541 = int_to_ptr.hbm [resolvable:$true] %s540
          %s542 = sshll.u32 [#allocation14], 4
          %s543 = int_to_ptr.vmem [resolvable:$true] %s542
          %548 = dma.hbm_to_vmem [thread:$0]  %s541, 4096, %s543, [#allocation15], 128, 128, 8
        $region36: #{tpu_custom_call.1} parent=11 // pred_fallthru
          _
        // Predicated region
        $region37: #{tpu_custom_call.1} parent=11 // pred_check
          %p549 = pneg %p237
        $region38: #{tpu_custom_call.1} parent=11 // pred_check_branch
          %551 = sbr.rel (%p549) target = $region40
        $region39: #{tpu_custom_call.1} parent=11 // pred_region
          _
        $region40: #{tpu_custom_call.1} parent=11 // pred_fallthru
          _
        // Predicated region
        $region41: #{tpu_custom_call.1} parent=11 // pred_check
          %p552 = pneg %p258
        $region42: #{tpu_custom_call.1} parent=11 // pred_check_branch
          %554 = sbr.rel (%p552) target = $region44
        $region43: #{tpu_custom_call.1} parent=11 // pred_region
          _
        $region44: #{tpu_custom_call.1} parent=11 // pred_fallthru
          _
        // Predicated region
        $region45: #{tpu_custom_call.1} parent=11 // pred_check
          %p555 = pneg %p279
        $region46: #{tpu_custom_call.1} parent=11 // pred_check_branch
          %557 = sbr.rel (%p555) target = $region48
        $region47: #{tpu_custom_call.1} parent=11 // pred_region
          %559 = vsyncadd [#allocation15], 0
          %s561 = sshll.u32 %s10, 4
          %s562 = int_to_ptr.hbm [resolvable:$true] %s561
          %s563 = sshll.u32 [#allocation16], 4
          %s564 = int_to_ptr.vmem [resolvable:$true] %s563
          %566 = dma.hbm_to_vmem [thread:$0]  %s562, 32, %s564, [#allocation15]
        $region48: #{tpu_custom_call.1} parent=11 // pred_fallthru
          _
        // Predicated region
        $region49: #{tpu_custom_call.1} parent=11 // pred_check
          %p567 = pneg %p300
        $region50: #{tpu_custom_call.1} parent=11 // pred_check_branch
          %569 = sbr.rel (%p567) target = $region52
        $region51: #{tpu_custom_call.1} parent=11 // pred_region
          _
        $region52: #{tpu_custom_call.1} parent=11 // pred_fallthru
          _
        // Predicated region
        $region53: #{tpu_custom_call.1} parent=11 // pred_check
          %p570 = pneg %p321
        $region54: #{tpu_custom_call.1} parent=11 // pred_check_branch
          %572 = sbr.rel (%p570) target = $region56
        $region55: #{tpu_custom_call.1} parent=11 // pred_region
          %574 = vsyncadd [#allocation18], 0
          %s576 = sshll.u32 %s12, 4
          %s577 = int_to_ptr.hbm [resolvable:$true] %s576
          %s578 = sshll.u32 [#allocation17], 4
          %s579 = int_to_ptr.vmem [resolvable:$true] %s578
          %581 = dma.hbm_to_vmem [thread:$0]  %s577, 32, %s579, [#allocation18]
        $region56: #{tpu_custom_call.1} parent=11 // pred_fallthru
          _
        // Predicated region
        $region57: #{tpu_custom_call.1} parent=11 // pred_check
          %p582 = pneg %p342
        $region58: #{tpu_custom_call.1} parent=11 // pred_check_branch
          %584 = sbr.rel (%p582) target = $region60
        $region59: #{tpu_custom_call.1} parent=11 // pred_region
          _
        $region60: #{tpu_custom_call.1} parent=11 // pred_fallthru
          _
        // Predicated region
        $region61: #{tpu_custom_call.1} parent=11 // pred_check
          %p585 = pneg %p363
        $region62: #{tpu_custom_call.1} parent=11 // pred_check_branch
          %587 = sbr.rel (%p585) target = $region64
        $region63: #{tpu_custom_call.1} parent=11 // pred_region
          %589 = vsyncadd [#allocation18], 0
          %s590 = sshll.u32 %s14, 4
          %s591 = int_to_ptr.hbm [resolvable:$true] %s590
          %s592 = sshll.u32 [#allocation19], 4
          %s593 = int_to_ptr.vmem [resolvable:$true] %s592
          %598 = dma.hbm_to_vmem [thread:$0]  %s591, 8192, %s593, [#allocation18], 256, 256, 16
        $region64: #{tpu_custom_call.1} parent=11 // pred_fallthru
          _
        // Predicated region
        $region65: #{tpu_custom_call.1} parent=11 // pred_check
          %p599 = pneg %p384
        $region66: #{tpu_custom_call.1} parent=11 // pred_check_branch
          %601 = sbr.rel (%p599) target = $region68
        $region67: #{tpu_custom_call.1} parent=11 // pred_region
          _
        $region68: #{tpu_custom_call.1} parent=11 // pred_fallthru
          _
        // Predicated region
        $region69: #{tpu_custom_call.1} parent=11 // pred_check
          %p602 = pneg %p405
        $region70: #{tpu_custom_call.1} parent=11 // pred_check_branch
          %604 = sbr.rel (%p602) target = $region72
        $region71: #{tpu_custom_call.1} parent=11 // pred_region
          %606 = vsyncadd [#allocation21], 0
          %s607 = sshll.u32 %s16, 4
          %s608 = int_to_ptr.hbm [resolvable:$true] %s607
          %s609 = sshll.u32 [#allocation20], 4
          %s610 = int_to_ptr.vmem [resolvable:$true] %s609
          %615 = dma.hbm_to_vmem [thread:$0]  %s608, 8192, %s610, [#allocation21], 128, 128, 8
        $region72: #{tpu_custom_call.1} parent=11 // pred_fallthru
          _
        // Predicated region
        $region73: #{tpu_custom_call.1} parent=11 // pred_check
          %p616 = pneg %p426
        $region74: #{tpu_custom_call.1} parent=11 // pred_check_branch
          %618 = sbr.rel (%p616) target = $region76
        $region75: #{tpu_custom_call.1} parent=11 // pred_region
          _
        $region76: #{tpu_custom_call.1} parent=11 // pred_fallthru
          _
      $region12: #{tpu_custom_call.1} parent=5 // pred_fallthru
        _
      %p619 = scmp.lt.s32.totalorder %s38, 2
      // Predicated region
      $region77: #{tpu_custom_call.1} parent=5 // pred_check
        %p620 = pneg %p619
      $region78: #{tpu_custom_call.1} parent=5 // pred_check_branch
        %622 = sbr.rel (%p620) target = $region80
      $region79: #{tpu_custom_call.1} parent=5 // pred_region
        // Predicated region
        $region81: #{tpu_custom_call.1} parent=79 // pred_check
          %p623 = pneg %p58
        $region82: #{tpu_custom_call.1} parent=79 // pred_check_branch
          %625 = sbr.rel (%p623) target = $region84
        $region83: #{tpu_custom_call.1} parent=79 // pred_region
          %s626 = sand.u32 %s48, 1
          %s627 = scalar_lea.sflag [#allocation3], %s626
          %s628 = sand.u32 %s48, 1
          %s629 = smul.addr %s628, 16
          %s630 = scalar_lea.vmem [#allocation2], %s629
          %632 = vsyncadd %s627, 0
          %s633 = smul.addr %s38, 2
          %s634 = smul.addr %s633, 8
          %s635 = scalar_lea.hbm %s0, %s634
          %s637 = sshll.u32 %s635, 4
          %s638 = int_to_ptr.hbm [resolvable:$true] %s637
          %s639 = sshll.u32 %s630, 4
          %s640 = int_to_ptr.vmem [resolvable:$true] %s639
          %642 = dma.hbm_to_vmem [thread:$0]  %s638, 256, %s640, %s627
        $region84: #{tpu_custom_call.1} parent=79 // pred_fallthru
          _
        // Predicated region
        $region85: #{tpu_custom_call.1} parent=79 // pred_check
          %p643 = pneg %p84
        $region86: #{tpu_custom_call.1} parent=79 // pred_check_branch
          %645 = sbr.rel (%p643) target = $region88
        $region87: #{tpu_custom_call.1} parent=79 // pred_region
          %s646 = sand.u32 %s38, 1
          %s647 = scalar_lea.sflag [#allocation6], %s646
          %s648 = sand.u32 %s74, 1
          %s649 = smul.addr %s648, 32
          %s650 = scalar_lea.vmem [#allocation5], %s649
          %652 = vsyncadd %s647, 0
          %s653 = smul.addr %s38, 4
          %s654 = smul.addr %s653, 8
          %s655 = scalar_lea.hbm %s1, %s654
          %s656 = sshll.u32 %s655, 4
          %s657 = int_to_ptr.hbm [resolvable:$true] %s656
          %s658 = sshll.u32 %s650, 4
          %s659 = int_to_ptr.vmem [resolvable:$true] %s658
          %664 = dma.hbm_to_vmem [thread:$0]  %s657, 512, %s659, %s647, 256, 256, 16
        $region88: #{tpu_custom_call.1} parent=79 // pred_fallthru
          _
      $region80: #{tpu_custom_call.1} parent=5 // pred_fallthru
        _
      %p665 = scmp.le.s32.totalorder 1, %s38
      %p666 = scmp.lt.s32.totalorder %s38, 3
      %p667 = pnand %p665, %p666
      %p668 = pneg %p667
      // Predicated region
      $region89: #{tpu_custom_call.1} parent=5 // pred_check
        _
      $region90: #{tpu_custom_call.1} parent=5 // pred_check_branch
        %670 = sbr.rel (%p667) target = $region92
      $region91: #{tpu_custom_call.1} parent=5 // pred_region
        %s671 = ssub.s32 %s38, 1
        %s672 = sand.u32 %s51, 1
        %s673 = scalar_lea.sflag [#allocation3], %s672
        %s674 = sand.u32 %s51, 1
        %s675 = smul.addr %s674, 16
        %s676 = scalar_lea.vmem [#allocation2], %s675
        // Predicated region
        $region93: #{tpu_custom_call.1} parent=91 // pred_check
          %p677 = pneg %p64
        $region94: #{tpu_custom_call.1} parent=91 // pred_check_branch
          %679 = sbr.rel (%p677) target = $region96
        $region95: #{tpu_custom_call.1} parent=91 // pred_region
          %681 = dma.done %s673, 256
        $region96: #{tpu_custom_call.1} parent=91 // pred_fallthru
          _
        %s682 = sand.u32 %s43, 1
        %s683 = scalar_lea.sflag [#allocation6], %s682
        %s684 = sand.u32 %s77, 1
        %s685 = smul.addr %s684, 32
        %s686 = scalar_lea.vmem [#allocation5], %s685
        // Predicated region
        $region97: #{tpu_custom_call.1} parent=91 // pred_check
          %p687 = pneg %p90
        $region98: #{tpu_custom_call.1} parent=91 // pred_check_branch
          %689 = sbr.rel (%p687) target = $region100
        $region99: #{tpu_custom_call.1} parent=91 // pred_region
          %691 = dma.done %s683, 512
        $region100: #{tpu_custom_call.1} parent=91 // pred_fallthru
          _
        // Predicated region
        $region101: #{tpu_custom_call.1} parent=91 // pred_check
          %p692 = pneg %p111
        $region102: #{tpu_custom_call.1} parent=91 // pred_check_branch
          %694 = sbr.rel (%p692) target = $region104
        $region103: #{tpu_custom_call.1} parent=91 // pred_region
          %696 = dma.done [#allocation6], 128
        $region104: #{tpu_custom_call.1} parent=91 // pred_fallthru
          _
        // Predicated region
        $region105: #{tpu_custom_call.1} parent=91 // pred_check
          %p697 = pneg %p132
        $region106: #{tpu_custom_call.1} parent=91 // pred_check_branch
          %699 = sbr.rel (%p697) target = $region108
        $region107: #{tpu_custom_call.1} parent=91 // pred_region
          %701 = dma.done [#allocation9], 12288
        $region108: #{tpu_custom_call.1} parent=91 // pred_fallthru
          _
        // Predicated region
        $region109: #{tpu_custom_call.1} parent=91 // pred_check
          %p702 = pneg %p153
        $region110: #{tpu_custom_call.1} parent=91 // pred_check_branch
          %704 = sbr.rel (%p702) target = $region112
        $region111: #{tpu_custom_call.1} parent=91 // pred_region
          %706 = dma.done [#allocation9], 4096
        $region112: #{tpu_custom_call.1} parent=91 // pred_fallthru
          _
        // Predicated region
        $region113: #{tpu_custom_call.1} parent=91 // pred_check
          %p707 = pneg %p174
        $region114: #{tpu_custom_call.1} parent=91 // pred_check_branch
          %709 = sbr.rel (%p707) target = $region116
        $region115: #{tpu_custom_call.1} parent=91 // pred_region
          %711 = dma.done [#allocation12], 4096
        $region116: #{tpu_custom_call.1} parent=91 // pred_fallthru
          _
        // Predicated region
        $region117: #{tpu_custom_call.1} parent=91 // pred_check
          %p712 = pneg %p195
        $region118: #{tpu_custom_call.1} parent=91 // pred_check_branch
          %714 = sbr.rel (%p712) target = $region120
        $region119: #{tpu_custom_call.1} parent=91 // pred_region
          %716 = dma.done [#allocation12], 8192
        $region120: #{tpu_custom_call.1} parent=91 // pred_fallthru
          _
        // Predicated region
        $region121: #{tpu_custom_call.1} parent=91 // pred_check
          %p717 = pneg %p216
        $region122: #{tpu_custom_call.1} parent=91 // pred_check_branch
          %719 = sbr.rel (%p717) target = $region124
        $region123: #{tpu_custom_call.1} parent=91 // pred_region
          %721 = dma.done [#allocation15], 4096
        $region124: #{tpu_custom_call.1} parent=91 // pred_fallthru
          _
        // Predicated region
        $region125: #{tpu_custom_call.1} parent=91 // pred_check
          %p722 = pneg %p279
        $region126: #{tpu_custom_call.1} parent=91 // pred_check_branch
          %724 = sbr.rel (%p722) target = $region128
        $region127: #{tpu_custom_call.1} parent=91 // pred_region
          %726 = dma.done [#allocation15], 32
        $region128: #{tpu_custom_call.1} parent=91 // pred_fallthru
          _
        // Predicated region
        $region129: #{tpu_custom_call.1} parent=91 // pred_check
          %p727 = pneg %p321
        $region130: #{tpu_custom_call.1} parent=91 // pred_check_branch
          %729 = sbr.rel (%p727) target = $region132
        $region131: #{tpu_custom_call.1} parent=91 // pred_region
          %731 = dma.done [#allocation18], 32
        $region132: #{tpu_custom_call.1} parent=91 // pred_fallthru
          _
        // Predicated region
        $region133: #{tpu_custom_call.1} parent=91 // pred_check
          %p732 = pneg %p363
        $region134: #{tpu_custom_call.1} parent=91 // pred_check_branch
          %734 = sbr.rel (%p732) target = $region136
        $region135: #{tpu_custom_call.1} parent=91 // pred_region
          %736 = dma.done [#allocation18], 8192
        $region136: #{tpu_custom_call.1} parent=91 // pred_fallthru
          _
        // Predicated region
        $region137: #{tpu_custom_call.1} parent=91 // pred_check
          %p737 = pneg %p405
        $region138: #{tpu_custom_call.1} parent=91 // pred_check_branch
          %739 = sbr.rel (%p737) target = $region140
        $region139: #{tpu_custom_call.1} parent=91 // pred_region
          %741 = dma.done [#allocation21], 8192
        $region140: #{tpu_custom_call.1} parent=91 // pred_fallthru
          _
        %s742 = sand.u32 %s51, 1
        %s743 = scalar_lea.sflag [#allocation3], %s742
        %s744 = sand.u32 %s51, 1
        %s745 = smul.addr %s744, 16
        %s746 = scalar_lea.vmem [#allocation2], %s745
        %p747 = pneg %p64
        %p748 = pneg %p61
        %s749 = sand.u32 %s43, 1
        %s750 = scalar_lea.sflag [#allocation6], %s749
        %s751 = sand.u32 %s77, 1
        %s752 = smul.addr %s751, 32
        %s753 = scalar_lea.vmem [#allocation5], %s752
        %p754 = pneg %p90
        %p755 = pneg %p87
        %p756 = pneg %p111
        %p757 = pneg %p108
        %p758 = pneg %p132
        %p759 = pneg %p129
        %p760 = pneg %p153
        %p761 = pneg %p150
        %p762 = pneg %p174
        %p763 = pneg %p171
        %p764 = pneg %p195
        %p765 = pneg %p192
        %p766 = pneg %p216
        %p767 = pneg %p213
        %p768 = pneg %p237
        %p769 = pneg %p234
        %p770 = pneg %p258
        %p771 = pneg %p255
        %p772 = pneg %p279
        %p773 = pneg %p276
        %p774 = pneg %p300
        %p775 = pneg %p297
        %p776 = pneg %p321
        %p777 = pneg %p318
        %p778 = pneg %p342
        %p779 = pneg %p339
        %p780 = pneg %p363
        %p781 = pneg %p360
        %p782 = pneg %p384
        %p783 = pneg %p381
        %p784 = pneg %p405
        %p785 = pneg %p402
        %p786 = pneg %p426
        %p787 = pneg %p423
        %p788 = pneg %p452
        %p789 = pneg %p449
        %s790 = sand.u32 %s439, 1
        %s791 = scalar_lea.sflag [#allocation4], %s790
        %s792 = sand.u32 %s439, 1
        %s793 = smul.addr %s792, 16
        %s794 = scalar_lea.vmem [#allocation22], %s793
        %v796 = vld [vmem:[%s676] sm:$0xff]
        %v797 = vld [vmem:[%s676 + $0x8] sm:$0xff]
        %v798 = vld [vmem:[%s686] sm:$0xff]
        %v799 = vld [vmem:[%s686 + $0x8] sm:$0xff]
        %v800 = vld [vmem:[%s686 + $0x10] sm:$0xff]
        %v801 = vld [vmem:[%s686 + $0x18] sm:$0xff]
        %v802 = vld [vmem:[#allocation7] sm:$0xff]
        %v803 = vld [vmem:[#allocation8] sm:$0xf]
        %v804 = vld [vmem:[#allocation8 + $0x4] sm:$0xf]
        %v805 = vld [vmem:[#allocation8 + $0x8] sm:$0xf]
        %v806 = vld [vmem:[#allocation8 + $0xc] sm:$0xf]
        %v807 = vld [vmem:[#allocation8 + $0x10] sm:$0xf]
        %v808 = vld [vmem:[#allocation8 + $0x14] sm:$0xf]
        %v809 = vld [vmem:[#allocation8 + $0x18] sm:$0xf]
        %v810 = vld [vmem:[#allocation8 + $0x1c] sm:$0xf]
        %v811 = vld [vmem:[#allocation8 + $0x20] sm:$0xf]
        %v812 = vld [vmem:[#allocation8 + $0x24] sm:$0xf]
        %v813 = vld [vmem:[#allocation8 + $0x28] sm:$0xf]
        %v814 = vld [vmem:[#allocation8 + $0x2c] sm:$0xf]
        %v815 = vld [vmem:[#allocation8 + $0x30] sm:$0xf]
        %v816 = vld [vmem:[#allocation8 + $0x34] sm:$0xf]
        %v817 = vld [vmem:[#allocation8 + $0x38] sm:$0xf]
        %v818 = vld [vmem:[#allocation8 + $0x3c] sm:$0xf]
        %v819 = vld [vmem:[#allocation8 + $0x40] sm:$0xf]
        %v820 = vld [vmem:[#allocation8 + $0x44] sm:$0xf]
        %v821 = vld [vmem:[#allocation8 + $0x48] sm:$0xf]
        %v822 = vld [vmem:[#allocation8 + $0x4c] sm:$0xf]
        %v823 = vld [vmem:[#allocation8 + $0x50] sm:$0xf]
        %v824 = vld [vmem:[#allocation8 + $0x54] sm:$0xf]
        %v825 = vld [vmem:[#allocation8 + $0x58] sm:$0xf]
        %v826 = vld [vmem:[#allocation8 + $0x5c] sm:$0xf]
        %v827 = vld [vmem:[#allocation8 + $0x60] sm:$0xf]
        %v828 = vld [vmem:[#allocation8 + $0x64] sm:$0xf]
        %v829 = vld [vmem:[#allocation8 + $0x68] sm:$0xf]
        %v830 = vld [vmem:[#allocation8 + $0x6c] sm:$0xf]
        %v831 = vld [vmem:[#allocation8 + $0x70] sm:$0xf]
        %v832 = vld [vmem:[#allocation8 + $0x74] sm:$0xf]
        %v833 = vld [vmem:[#allocation8 + $0x78] sm:$0xf]
        %v834 = vld [vmem:[#allocation8 + $0x7c] sm:$0xf]
        %v835 = vld [vmem:[#allocation8 + $0x80] sm:$0xf]
        %v836 = vld [vmem:[#allocation8 + $0x84] sm:$0xf]
        %v837 = vld [vmem:[#allocation8 + $0x88] sm:$0xf]
        %v838 = vld [vmem:[#allocation8 + $0x8c] sm:$0xf]
        %v839 = vld [vmem:[#allocation8 + $0x90] sm:$0xf]
        %v840 = vld [vmem:[#allocation8 + $0x94] sm:$0xf]
        %v841 = vld [vmem:[#allocation8 + $0x98] sm:$0xf]
        %v842 = vld [vmem:[#allocation8 + $0x9c] sm:$0xf]
        %v843 = vld [vmem:[#allocation8 + $0xa0] sm:$0xf]
        %v844 = vld [vmem:[#allocation8 + $0xa4] sm:$0xf]
        %v845 = vld [vmem:[#allocation8 + $0xa8] sm:$0xf]
        %v846 = vld [vmem:[#allocation8 + $0xac] sm:$0xf]
        %v847 = vld [vmem:[#allocation8 + $0xb0] sm:$0xf]
        %v848 = vld [vmem:[#allocation8 + $0xb4] sm:$0xf]
        %v849 = vld [vmem:[#allocation8 + $0xb8] sm:$0xf]
        %v850 = vld [vmem:[#allocation8 + $0xbc] sm:$0xf]
        %v851 = vld [vmem:[#allocation8 + $0xc0] sm:$0xf]
        %v852 = vld [vmem:[#allocation8 + $0xc4] sm:$0xf]
        %v853 = vld [vmem:[#allocation8 + $0xc8] sm:$0xf]
        %v854 = vld [vmem:[#allocation8 + $0xcc] sm:$0xf]
        %v855 = vld [vmem:[#allocation8 + $0xd0] sm:$0xf]
        %v856 = vld [vmem:[#allocation8 + $0xd4] sm:$0xf]
        %v857 = vld [vmem:[#allocation8 + $0xd8] sm:$0xf]
        %v858 = vld [vmem:[#allocation8 + $0xdc] sm:$0xf]
        %v859 = vld [vmem:[#allocation8 + $0xe0] sm:$0xf]
        %v860 = vld [vmem:[#allocation8 + $0xe4] sm:$0xf]
        %v861 = vld [vmem:[#allocation8 + $0xe8] sm:$0xf]
        %v862 = vld [vmem:[#allocation8 + $0xec] sm:$0xf]
        %v863 = vld [vmem:[#allocation8 + $0xf0] sm:$0xf]
        %v864 = vld [vmem:[#allocation8 + $0xf4] sm:$0xf]
        %v865 = vld [vmem:[#allocation8 + $0xf8] sm:$0xf]
        %v866 = vld [vmem:[#allocation8 + $0xfc] sm:$0xf]
        %v867 = vld [vmem:[#allocation8 + $0x100] sm:$0xf]
        %v868 = vld [vmem:[#allocation8 + $0x104] sm:$0xf]
        %v869 = vld [vmem:[#allocation8 + $0x108] sm:$0xf]
        %v870 = vld [vmem:[#allocation8 + $0x10c] sm:$0xf]
        %v871 = vld [vmem:[#allocation8 + $0x110] sm:$0xf]
        %v872 = vld [vmem:[#allocation8 + $0x114] sm:$0xf]
        %v873 = vld [vmem:[#allocation8 + $0x118] sm:$0xf]
        %v874 = vld [vmem:[#allocation8 + $0x11c] sm:$0xf]
        %v875 = vld [vmem:[#allocation8 + $0x120] sm:$0xf]
        %v876 = vld [vmem:[#allocation8 + $0x124] sm:$0xf]
        %v877 = vld [vmem:[#allocation8 + $0x128] sm:$0xf]
        %v878 = vld [vmem:[#allocation8 + $0x12c] sm:$0xf]
        %v879 = vld [vmem:[#allocation8 + $0x130] sm:$0xf]
        %v880 = vld [vmem:[#allocation8 + $0x134] sm:$0xf]
        %v881 = vld [vmem:[#allocation8 + $0x138] sm:$0xf]
        %v882 = vld [vmem:[#allocation8 + $0x13c] sm:$0xf]
        %v883 = vld [vmem:[#allocation8 + $0x140] sm:$0xf]
        %v884 = vld [vmem:[#allocation8 + $0x144] sm:$0xf]
        %v885 = vld [vmem:[#allocation8 + $0x148] sm:$0xf]
        %v886 = vld [vmem:[#allocation8 + $0x14c] sm:$0xf]
        %v887 = vld [vmem:[#allocation8 + $0x150] sm:$0xf]
        %v888 = vld [vmem:[#allocation8 + $0x154] sm:$0xf]
        %v889 = vld [vmem:[#allocation8 + $0x158] sm:$0xf]
        %v890 = vld [vmem:[#allocation8 + $0x15c] sm:$0xf]
        %v891 = vld [vmem:[#allocation8 + $0x160] sm:$0xf]
        %v892 = vld [vmem:[#allocation8 + $0x164] sm:$0xf]
        %v893 = vld [vmem:[#allocation8 + $0x168] sm:$0xf]
        %v894 = vld [vmem:[#allocation8 + $0x16c] sm:$0xf]
        %v895 = vld [vmem:[#allocation8 + $0x170] sm:$0xf]
        %v896 = vld [vmem:[#allocation8 + $0x174] sm:$0xf]
        %v897 = vld [vmem:[#allocation8 + $0x178] sm:$0xf]
        %v898 = vld [vmem:[#allocation8 + $0x17c] sm:$0xf]
        %v899 = vld [vmem:[#allocation8 + $0x180] sm:$0xf]
        %v900 = vld [vmem:[#allocation8 + $0x184] sm:$0xf]
        %v901 = vld [vmem:[#allocation8 + $0x188] sm:$0xf]
        %v902 = vld [vmem:[#allocation8 + $0x18c] sm:$0xf]
        %v903 = vld [vmem:[#allocation8 + $0x190] sm:$0xf]
        %v904 = vld [vmem:[#allocation8 + $0x194] sm:$0xf]
        %v905 = vld [vmem:[#allocation8 + $0x198] sm:$0xf]
        %v906 = vld [vmem:[#allocation8 + $0x19c] sm:$0xf]
        %v907 = vld [vmem:[#allocation8 + $0x1a0] sm:$0xf]
        %v908 = vld [vmem:[#allocation8 + $0x1a4] sm:$0xf]
        %v909 = vld [vmem:[#allocation8 + $0x1a8] sm:$0xf]
        %v910 = vld [vmem:[#allocation8 + $0x1ac] sm:$0xf]
        %v911 = vld [vmem:[#allocation8 + $0x1b0] sm:$0xf]
        %v912 = vld [vmem:[#allocation8 + $0x1b4] sm:$0xf]
        %v913 = vld [vmem:[#allocation8 + $0x1b8] sm:$0xf]
        %v914 = vld [vmem:[#allocation8 + $0x1bc] sm:$0xf]
        %v915 = vld [vmem:[#allocation8 + $0x1c0] sm:$0xf]
        %v916 = vld [vmem:[#allocation8 + $0x1c4] sm:$0xf]
        %v917 = vld [vmem:[#allocation8 + $0x1c8] sm:$0xf]
        %v918 = vld [vmem:[#allocation8 + $0x1cc] sm:$0xf]
        %v919 = vld [vmem:[#allocation8 + $0x1d0] sm:$0xf]
        %v920 = vld [vmem:[#allocation8 + $0x1d4] sm:$0xf]
        %v921 = vld [vmem:[#allocation8 + $0x1d8] sm:$0xf]
        %v922 = vld [vmem:[#allocation8 + $0x1dc] sm:$0xf]
        %v923 = vld [vmem:[#allocation8 + $0x1e0] sm:$0xf]
        %v924 = vld [vmem:[#allocation8 + $0x1e4] sm:$0xf]
        %v925 = vld [vmem:[#allocation8 + $0x1e8] sm:$0xf]
        %v926 = vld [vmem:[#allocation8 + $0x1ec] sm:$0xf]
        %v927 = vld [vmem:[#allocation8 + $0x1f0] sm:$0xf]
        %v928 = vld [vmem:[#allocation8 + $0x1f4] sm:$0xf]
        %v929 = vld [vmem:[#allocation8 + $0x1f8] sm:$0xf]
        %v930 = vld [vmem:[#allocation8 + $0x1fc] sm:$0xf]
        %v931 = vld [vmem:[#allocation8 + $0x200] sm:$0xf]
        %v932 = vld [vmem:[#allocation8 + $0x204] sm:$0xf]
        %v933 = vld [vmem:[#allocation8 + $0x208] sm:$0xf]
        %v934 = vld [vmem:[#allocation8 + $0x20c] sm:$0xf]
        %v935 = vld [vmem:[#allocation8 + $0x210] sm:$0xf]
        %v936 = vld [vmem:[#allocation8 + $0x214] sm:$0xf]
        %v937 = vld [vmem:[#allocation8 + $0x218] sm:$0xf]
        %v938 = vld [vmem:[#allocation8 + $0x21c] sm:$0xf]
        %v939 = vld [vmem:[#allocation8 + $0x220] sm:$0xf]
        %v940 = vld [vmem:[#allocation8 + $0x224] sm:$0xf]
        %v941 = vld [vmem:[#allocation8 + $0x228] sm:$0xf]
        %v942 = vld [vmem:[#allocation8 + $0x22c] sm:$0xf]
        %v943 = vld [vmem:[#allocation8 + $0x230] sm:$0xf]
        %v944 = vld [vmem:[#allocation8 + $0x234] sm:$0xf]
        %v945 = vld [vmem:[#allocation8 + $0x238] sm:$0xf]
        %v946 = vld [vmem:[#allocation8 + $0x23c] sm:$0xf]
        %v947 = vld [vmem:[#allocation8 + $0x240] sm:$0xf]
        %v948 = vld [vmem:[#allocation8 + $0x244] sm:$0xf]
        %v949 = vld [vmem:[#allocation8 + $0x248] sm:$0xf]
        %v950 = vld [vmem:[#allocation8 + $0x24c] sm:$0xf]
        %v951 = vld [vmem:[#allocation8 + $0x250] sm:$0xf]
        %v952 = vld [vmem:[#allocation8 + $0x254] sm:$0xf]
        %v953 = vld [vmem:[#allocation8 + $0x258] sm:$0xf]
        %v954 = vld [vmem:[#allocation8 + $0x25c] sm:$0xf]
        %v955 = vld [vmem:[#allocation8 + $0x260] sm:$0xf]
        %v956 = vld [vmem:[#allocation8 + $0x264] sm:$0xf]
        %v957 = vld [vmem:[#allocation8 + $0x268] sm:$0xf]
        %v958 = vld [vmem:[#allocation8 + $0x26c] sm:$0xf]
        %v959 = vld [vmem:[#allocation8 + $0x270] sm:$0xf]
        %v960 = vld [vmem:[#allocation8 + $0x274] sm:$0xf]
        %v961 = vld [vmem:[#allocation8 + $0x278] sm:$0xf]
        %v962 = vld [vmem:[#allocation8 + $0x27c] sm:$0xf]
        %v963 = vld [vmem:[#allocation8 + $0x280] sm:$0xf]
        %v964 = vld [vmem:[#allocation8 + $0x284] sm:$0xf]
        %v965 = vld [vmem:[#allocation8 + $0x288] sm:$0xf]
        %v966 = vld [vmem:[#allocation8 + $0x28c] sm:$0xf]
        %v967 = vld [vmem:[#allocation8 + $0x290] sm:$0xf]
        %v968 = vld [vmem:[#allocation8 + $0x294] sm:$0xf]
        %v969 = vld [vmem:[#allocation8 + $0x298] sm:$0xf]
        %v970 = vld [vmem:[#allocation8 + $0x29c] sm:$0xf]
        %v971 = vld [vmem:[#allocation8 + $0x2a0] sm:$0xf]
        %v972 = vld [vmem:[#allocation8 + $0x2a4] sm:$0xf]
        %v973 = vld [vmem:[#allocation8 + $0x2a8] sm:$0xf]
        %v974 = vld [vmem:[#allocation8 + $0x2ac] sm:$0xf]
        %v975 = vld [vmem:[#allocation8 + $0x2b0] sm:$0xf]
        %v976 = vld [vmem:[#allocation8 + $0x2b4] sm:$0xf]
        %v977 = vld [vmem:[#allocation8 + $0x2b8] sm:$0xf]
        %v978 = vld [vmem:[#allocation8 + $0x2bc] sm:$0xf]
        %v979 = vld [vmem:[#allocation8 + $0x2c0] sm:$0xf]
        %v980 = vld [vmem:[#allocation8 + $0x2c4] sm:$0xf]
        %v981 = vld [vmem:[#allocation8 + $0x2c8] sm:$0xf]
        %v982 = vld [vmem:[#allocation8 + $0x2cc] sm:$0xf]
        %v983 = vld [vmem:[#allocation8 + $0x2d0] sm:$0xf]
        %v984 = vld [vmem:[#allocation8 + $0x2d4] sm:$0xf]
        %v985 = vld [vmem:[#allocation8 + $0x2d8] sm:$0xf]
        %v986 = vld [vmem:[#allocation8 + $0x2dc] sm:$0xf]
        %v987 = vld [vmem:[#allocation8 + $0x2e0] sm:$0xf]
        %v988 = vld [vmem:[#allocation8 + $0x2e4] sm:$0xf]
        %v989 = vld [vmem:[#allocation8 + $0x2e8] sm:$0xf]
        %v990 = vld [vmem:[#allocation8 + $0x2ec] sm:$0xf]
        %v991 = vld [vmem:[#allocation8 + $0x2f0] sm:$0xf]
        %v992 = vld [vmem:[#allocation8 + $0x2f4] sm:$0xf]
        %v993 = vld [vmem:[#allocation8 + $0x2f8] sm:$0xf]
        %v994 = vld [vmem:[#allocation8 + $0x2fc] sm:$0xf]
        %v995 = vpack.c.bf16 %v797, %v796
        %v997 = vunpack.c.l.b16 %v995
        %v998 = vunpack.c.h.b16 %v995
        %v999 = vpack.c.b16 %v997, %v997
        %v1000 = vpack.c.b16 %v998, %v998
        %v1035 = vunpack.c.l.b16 %v803
        %v1036 = vunpack.c.l.b16 %v804
        %v1037 = vunpack.c.l.b16 %v805
        %v1038 = vunpack.c.l.b16 %v806
        %v1039 = vunpack.c.l.b16 %v807
        %v1040 = vunpack.c.l.b16 %v808
        %v1041 = vunpack.c.l.b16 %v809
        %v1042 = vunpack.c.l.b16 %v810
        %v1043 = vunpack.c.l.b16 %v811
        %v1044 = vunpack.c.l.b16 %v812
        %v1045 = vunpack.c.l.b16 %v813
        %v1046 = vunpack.c.l.b16 %v814
        %v1047 = vunpack.c.l.b16 %v815
        %v1048 = vunpack.c.l.b16 %v816
        %v1049 = vunpack.c.l.b16 %v817
        %v1050 = vunpack.c.l.b16 %v818
        %v1051 = vunpack.c.l.b16 %v819
        %v1052 = vunpack.c.l.b16 %v820
        %v1053 = vunpack.c.l.b16 %v821
        %v1054 = vunpack.c.l.b16 %v822
        %v1055 = vunpack.c.l.b16 %v823
        %v1056 = vunpack.c.l.b16 %v824
        %v1057 = vunpack.c.l.b16 %v825
        %v1058 = vunpack.c.l.b16 %v826
        %v1059 = vunpack.c.l.b16 %v827
        %v1060 = vunpack.c.l.b16 %v828
        %v1061 = vunpack.c.l.b16 %v829
        %v1062 = vunpack.c.l.b16 %v830
        %v1063 = vunpack.c.l.b16 %v831
        %v1064 = vunpack.c.l.b16 %v832
        %v1065 = vunpack.c.l.b16 %v833
        %v1066 = vunpack.c.l.b16 %v834
        %v1067 = vpack.c.b16 %v1036, %v1035
        %v1068 = vpack.c.b16 %v1038, %v1037
        %v1069 = vpack.c.b16 %v1040, %v1039
        %v1070 = vpack.c.b16 %v1042, %v1041
        %v1071 = vpack.c.b16 %v1044, %v1043
        %v1072 = vpack.c.b16 %v1046, %v1045
        %v1073 = vpack.c.b16 %v1048, %v1047
        %v1074 = vpack.c.b16 %v1050, %v1049
        %v1075 = vpack.c.b16 %v1052, %v1051
        %v1076 = vpack.c.b16 %v1054, %v1053
        %v1077 = vpack.c.b16 %v1056, %v1055
        %v1078 = vpack.c.b16 %v1058, %v1057
        %v1079 = vpack.c.b16 %v1060, %v1059
        %v1080 = vpack.c.b16 %v1062, %v1061
        %v1081 = vpack.c.b16 %v1064, %v1063
        %v1082 = vpack.c.b16 %v1066, %v1065
        %1099 = vmatpush.bf16.msra.mxu0 %v1074
        %1100 = vmatpush.bf16.msra.mxu0 %v1073
        %1101 = vmatpush.bf16.msra.mxu0 %v1072
        %1102 = vmatpush.bf16.msra.mxu0 %v1071
        %1103 = vmatpush.bf16.msra.mxu0 %v1070
        %1104 = vmatpush.bf16.msra.mxu0 %v1069
        %1105 = vmatpush.bf16.msra.mxu0 %v1068
        %1106 = vmatpush.bf16.msra.mxu0 %v1067
        %1107 = vmatmul.bf16.gmra.mxu0 %v999
        %v1108 = vpop.f32.mrf.mxu0
        %v1109 = vadd.f32 0.0, %v1108
        %v1110 = vpop.f32.mrf.mxu0
        %1111 = vdwg.mxu0
        %1112 = vmatpush.bf16.msra.mxu0 %v1082
        %1113 = vmatpush.bf16.msra.mxu0 %v1081
        %1114 = vmatpush.bf16.msra.mxu0 %v1080
        %1115 = vmatpush.bf16.msra.mxu0 %v1079
        %1116 = vmatpush.bf16.msra.mxu0 %v1078
        %1117 = vmatpush.bf16.msra.mxu0 %v1077
        %1118 = vmatpush.bf16.msra.mxu0 %v1076
        %1119 = vmatpush.bf16.msra.mxu0 %v1075
        %1120 = vmatmul.bf16.gmra.mxu0 %v1000
        %v1121 = vpop.f32.mrf.mxu0
        %v1122 = vadd.f32 %v1109, %v1121
        %v1123 = vpop.f32.mrf.mxu0
        %1124 = vdwg.mxu0
        %v1157 = vunpack.c.l.b16 %v835
        %v1158 = vunpack.c.l.b16 %v836
        %v1159 = vunpack.c.l.b16 %v837
        %v1160 = vunpack.c.l.b16 %v838
        %v1161 = vunpack.c.l.b16 %v839
        %v1162 = vunpack.c.l.b16 %v840
        %v1163 = vunpack.c.l.b16 %v841
        %v1164 = vunpack.c.l.b16 %v842
        %v1165 = vunpack.c.l.b16 %v843
        %v1166 = vunpack.c.l.b16 %v844
        %v1167 = vunpack.c.l.b16 %v845
        %v1168 = vunpack.c.l.b16 %v846
        %v1169 = vunpack.c.l.b16 %v847
        %v1170 = vunpack.c.l.b16 %v848
        %v1171 = vunpack.c.l.b16 %v849
        %v1172 = vunpack.c.l.b16 %v850
        %v1173 = vunpack.c.l.b16 %v851
        %v1174 = vunpack.c.l.b16 %v852
        %v1175 = vunpack.c.l.b16 %v853
        %v1176 = vunpack.c.l.b16 %v854
        %v1177 = vunpack.c.l.b16 %v855
        %v1178 = vunpack.c.l.b16 %v856
        %v1179 = vunpack.c.l.b16 %v857
        %v1180 = vunpack.c.l.b16 %v858
        %v1181 = vunpack.c.l.b16 %v859
        %v1182 = vunpack.c.l.b16 %v860
        %v1183 = vunpack.c.l.b16 %v861
        %v1184 = vunpack.c.l.b16 %v862
        %v1185 = vunpack.c.l.b16 %v863
        %v1186 = vunpack.c.l.b16 %v864
        %v1187 = vunpack.c.l.b16 %v865
        %v1188 = vunpack.c.l.b16 %v866
        %v1189 = vpack.c.b16 %v1158, %v1157
        %v1190 = vpack.c.b16 %v1160, %v1159
        %v1191 = vpack.c.b16 %v1162, %v1161
        %v1192 = vpack.c.b16 %v1164, %v1163
        %v1193 = vpack.c.b16 %v1166, %v1165
        %v1194 = vpack.c.b16 %v1168, %v1167
        %v1195 = vpack.c.b16 %v1170, %v1169
        %v1196 = vpack.c.b16 %v1172, %v1171
        %v1197 = vpack.c.b16 %v1174, %v1173
        %v1198 = vpack.c.b16 %v1176, %v1175
        %v1199 = vpack.c.b16 %v1178, %v1177
        %v1200 = vpack.c.b16 %v1180, %v1179
        %v1201 = vpack.c.b16 %v1182, %v1181
        %v1202 = vpack.c.b16 %v1184, %v1183
        %v1203 = vpack.c.b16 %v1186, %v1185
        %v1204 = vpack.c.b16 %v1188, %v1187
        %1221 = vmatpush.bf16.msra.mxu0 %v1196
        %1222 = vmatpush.bf16.msra.mxu0 %v1195
        %1223 = vmatpush.bf16.msra.mxu0 %v1194
        %1224 = vmatpush.bf16.msra.mxu0 %v1193
        %1225 = vmatpush.bf16.msra.mxu0 %v1192
        %1226 = vmatpush.bf16.msra.mxu0 %v1191
        %1227 = vmatpush.bf16.msra.mxu0 %v1190
        %1228 = vmatpush.bf16.msra.mxu0 %v1189
        %1229 = vmatmul.bf16.gmra.mxu0 %v999
        %v1230 = vpop.f32.mrf.mxu0
        %v1231 = vadd.f32 0.0, %v1230
        %v1232 = vpop.f32.mrf.mxu0
        %1233 = vdwg.mxu0
        %1234 = vmatpush.bf16.msra.mxu0 %v1204
        %1235 = vmatpush.bf16.msra.mxu0 %v1203
        %1236 = vmatpush.bf16.msra.mxu0 %v1202
        %1237 = vmatpush.bf16.msra.mxu0 %v1201
        %1238 = vmatpush.bf16.msra.mxu0 %v1200
        %1239 = vmatpush.bf16.msra.mxu0 %v1199
        %1240 = vmatpush.bf16.msra.mxu0 %v1198
        %1241 = vmatpush.bf16.msra.mxu0 %v1197
        %1242 = vmatmul.bf16.gmra.mxu0 %v1000
        %v1243 = vpop.f32.mrf.mxu0
        %v1244 = vadd.f32 %v1231, %v1243
        %v1245 = vpop.f32.mrf.mxu0
        %1246 = vdwg.mxu0
        %v1279 = vunpack.c.l.b16 %v867
        %v1280 = vunpack.c.l.b16 %v868
        %v1281 = vunpack.c.l.b16 %v869
        %v1282 = vunpack.c.l.b16 %v870
        %v1283 = vunpack.c.l.b16 %v871
        %v1284 = vunpack.c.l.b16 %v872
        %v1285 = vunpack.c.l.b16 %v873
        %v1286 = vunpack.c.l.b16 %v874
        %v1287 = vunpack.c.l.b16 %v875
        %v1288 = vunpack.c.l.b16 %v876
        %v1289 = vunpack.c.l.b16 %v877
        %v1290 = vunpack.c.l.b16 %v878
        %v1291 = vunpack.c.l.b16 %v879
        %v1292 = vunpack.c.l.b16 %v880
        %v1293 = vunpack.c.l.b16 %v881
        %v1294 = vunpack.c.l.b16 %v882
        %v1295 = vunpack.c.l.b16 %v883
        %v1296 = vunpack.c.l.b16 %v884
        %v1297 = vunpack.c.l.b16 %v885
        %v1298 = vunpack.c.l.b16 %v886
        %v1299 = vunpack.c.l.b16 %v887
        %v1300 = vunpack.c.l.b16 %v888
        %v1301 = vunpack.c.l.b16 %v889
        %v1302 = vunpack.c.l.b16 %v890
        %v1303 = vunpack.c.l.b16 %v891
        %v1304 = vunpack.c.l.b16 %v892
        %v1305 = vunpack.c.l.b16 %v893
        %v1306 = vunpack.c.l.b16 %v894
        %v1307 = vunpack.c.l.b16 %v895
        %v1308 = vunpack.c.l.b16 %v896
        %v1309 = vunpack.c.l.b16 %v897
        %v1310 = vunpack.c.l.b16 %v898
        %v1311 = vpack.c.b16 %v1280, %v1279
        %v1312 = vpack.c.b16 %v1282, %v1281
        %v1313 = vpack.c.b16 %v1284, %v1283
        %v1314 = vpack.c.b16 %v1286, %v1285
        %v1315 = vpack.c.b16 %v1288, %v1287
        %v1316 = vpack.c.b16 %v1290, %v1289
        %v1317 = vpack.c.b16 %v1292, %v1291
        %v1318 = vpack.c.b16 %v1294, %v1293
        %v1319 = vpack.c.b16 %v1296, %v1295
        %v1320 = vpack.c.b16 %v1298, %v1297
        %v1321 = vpack.c.b16 %v1300, %v1299
        %v1322 = vpack.c.b16 %v1302, %v1301
        %v1323 = vpack.c.b16 %v1304, %v1303
        %v1324 = vpack.c.b16 %v1306, %v1305
        %v1325 = vpack.c.b16 %v1308, %v1307
        %v1326 = vpack.c.b16 %v1310, %v1309
        %1343 = vmatpush.bf16.msra.mxu0 %v1318
        %1344 = vmatpush.bf16.msra.mxu0 %v1317
        %1345 = vmatpush.bf16.msra.mxu0 %v1316
        %1346 = vmatpush.bf16.msra.mxu0 %v1315
        %1347 = vmatpush.bf16.msra.mxu0 %v1314
        %1348 = vmatpush.bf16.msra.mxu0 %v1313
        %1349 = vmatpush.bf16.msra.mxu0 %v1312
        %1350 = vmatpush.bf16.msra.mxu0 %v1311
        %1351 = vmatmul.bf16.gmra.mxu0 %v999
        %v1352 = vpop.f32.mrf.mxu0
        %v1353 = vadd.f32 0.0, %v1352
        %v1354 = vpop.f32.mrf.mxu0
        %1355 = vdwg.mxu0
        %1356 = vmatpush.bf16.msra.mxu0 %v1326
        %1357 = vmatpush.bf16.msra.mxu0 %v1325
        %1358 = vmatpush.bf16.msra.mxu0 %v1324
        %1359 = vmatpush.bf16.msra.mxu0 %v1323
        %1360 = vmatpush.bf16.msra.mxu0 %v1322
        %1361 = vmatpush.bf16.msra.mxu0 %v1321
        %1362 = vmatpush.bf16.msra.mxu0 %v1320
        %1363 = vmatpush.bf16.msra.mxu0 %v1319
        %1364 = vmatmul.bf16.gmra.mxu0 %v1000
        %v1365 = vpop.f32.mrf.mxu0
        %v1366 = vadd.f32 %v1353, %v1365
        %v1367 = vpop.f32.mrf.mxu0
        %1368 = vdwg.mxu0
        %v1401 = vunpack.c.l.b16 %v899
        %v1402 = vunpack.c.l.b16 %v900
        %v1403 = vunpack.c.l.b16 %v901
        %v1404 = vunpack.c.l.b16 %v902
        %v1405 = vunpack.c.l.b16 %v903
        %v1406 = vunpack.c.l.b16 %v904
        %v1407 = vunpack.c.l.b16 %v905
        %v1408 = vunpack.c.l.b16 %v906
        %v1409 = vunpack.c.l.b16 %v907
        %v1410 = vunpack.c.l.b16 %v908
        %v1411 = vunpack.c.l.b16 %v909
        %v1412 = vunpack.c.l.b16 %v910
        %v1413 = vunpack.c.l.b16 %v911
        %v1414 = vunpack.c.l.b16 %v912
        %v1415 = vunpack.c.l.b16 %v913
        %v1416 = vunpack.c.l.b16 %v914
        %v1417 = vunpack.c.l.b16 %v915
        %v1418 = vunpack.c.l.b16 %v916
        %v1419 = vunpack.c.l.b16 %v917
        %v1420 = vunpack.c.l.b16 %v918
        %v1421 = vunpack.c.l.b16 %v919
        %v1422 = vunpack.c.l.b16 %v920
        %v1423 = vunpack.c.l.b16 %v921
        %v1424 = vunpack.c.l.b16 %v922
        %v1425 = vunpack.c.l.b16 %v923
        %v1426 = vunpack.c.l.b16 %v924
        %v1427 = vunpack.c.l.b16 %v925
        %v1428 = vunpack.c.l.b16 %v926
        %v1429 = vunpack.c.l.b16 %v927
        %v1430 = vunpack.c.l.b16 %v928
        %v1431 = vunpack.c.l.b16 %v929
        %v1432 = vunpack.c.l.b16 %v930
        %v1433 = vpack.c.b16 %v1402, %v1401
        %v1434 = vpack.c.b16 %v1404, %v1403
        %v1435 = vpack.c.b16 %v1406, %v1405
        %v1436 = vpack.c.b16 %v1408, %v1407
        %v1437 = vpack.c.b16 %v1410, %v1409
        %v1438 = vpack.c.b16 %v1412, %v1411
        %v1439 = vpack.c.b16 %v1414, %v1413
        %v1440 = vpack.c.b16 %v1416, %v1415
        %v1441 = vpack.c.b16 %v1418, %v1417
        %v1442 = vpack.c.b16 %v1420, %v1419
        %v1443 = vpack.c.b16 %v1422, %v1421
        %v1444 = vpack.c.b16 %v1424, %v1423
        %v1445 = vpack.c.b16 %v1426, %v1425
        %v1446 = vpack.c.b16 %v1428, %v1427
        %v1447 = vpack.c.b16 %v1430, %v1429
        %v1448 = vpack.c.b16 %v1432, %v1431
        %1465 = vmatpush.bf16.msra.mxu0 %v1440
        %1466 = vmatpush.bf16.msra.mxu0 %v1439
        %1467 = vmatpush.bf16.msra.mxu0 %v1438
        %1468 = vmatpush.bf16.msra.mxu0 %v1437
        %1469 = vmatpush.bf16.msra.mxu0 %v1436
        %1470 = vmatpush.bf16.msra.mxu0 %v1435
        %1471 = vmatpush.bf16.msra.mxu0 %v1434
        %1472 = vmatpush.bf16.msra.mxu0 %v1433
        %1473 = vmatmul.bf16.gmra.mxu0 %v999
        %v1474 = vpop.f32.mrf.mxu0
        %v1475 = vadd.f32 0.0, %v1474
        %v1476 = vpop.f32.mrf.mxu0
        %1477 = vdwg.mxu0
        %1478 = vmatpush.bf16.msra.mxu0 %v1448
        %1479 = vmatpush.bf16.msra.mxu0 %v1447
        %1480 = vmatpush.bf16.msra.mxu0 %v1446
        %1481 = vmatpush.bf16.msra.mxu0 %v1445
        %1482 = vmatpush.bf16.msra.mxu0 %v1444
        %1483 = vmatpush.bf16.msra.mxu0 %v1443
        %1484 = vmatpush.bf16.msra.mxu0 %v1442
        %1485 = vmatpush.bf16.msra.mxu0 %v1441
        %1486 = vmatmul.bf16.gmra.mxu0 %v1000
        %v1487 = vpop.f32.mrf.mxu0
        %v1488 = vadd.f32 %v1475, %v1487
        %v1489 = vpop.f32.mrf.mxu0
        %1490 = vdwg.mxu0
        %v1523 = vunpack.c.l.b16 %v931
        %v1524 = vunpack.c.l.b16 %v932
        %v1525 = vunpack.c.l.b16 %v933
        %v1526 = vunpack.c.l.b16 %v934
        %v1527 = vunpack.c.l.b16 %v935
        %v1528 = vunpack.c.l.b16 %v936
        %v1529 = vunpack.c.l.b16 %v937
        %v1530 = vunpack.c.l.b16 %v938
        %v1531 = vunpack.c.l.b16 %v939
        %v1532 = vunpack.c.l.b16 %v940
        %v1533 = vunpack.c.l.b16 %v941
        %v1534 = vunpack.c.l.b16 %v942
        %v1535 = vunpack.c.l.b16 %v943
        %v1536 = vunpack.c.l.b16 %v944
        %v1537 = vunpack.c.l.b16 %v945
        %v1538 = vunpack.c.l.b16 %v946
        %v1539 = vunpack.c.l.b16 %v947
        %v1540 = vunpack.c.l.b16 %v948
        %v1541 = vunpack.c.l.b16 %v949
        %v1542 = vunpack.c.l.b16 %v950
        %v1543 = vunpack.c.l.b16 %v951
        %v1544 = vunpack.c.l.b16 %v952
        %v1545 = vunpack.c.l.b16 %v953
        %v1546 = vunpack.c.l.b16 %v954
        %v1547 = vunpack.c.l.b16 %v955
        %v1548 = vunpack.c.l.b16 %v956
        %v1549 = vunpack.c.l.b16 %v957
        %v1550 = vunpack.c.l.b16 %v958
        %v1551 = vunpack.c.l.b16 %v959
        %v1552 = vunpack.c.l.b16 %v960
        %v1553 = vunpack.c.l.b16 %v961
        %v1554 = vunpack.c.l.b16 %v962
        %v1555 = vpack.c.b16 %v1524, %v1523
        %v1556 = vpack.c.b16 %v1526, %v1525
        %v1557 = vpack.c.b16 %v1528, %v1527
        %v1558 = vpack.c.b16 %v1530, %v1529
        %v1559 = vpack.c.b16 %v1532, %v1531
        %v1560 = vpack.c.b16 %v1534, %v1533
        %v1561 = vpack.c.b16 %v1536, %v1535
        %v1562 = vpack.c.b16 %v1538, %v1537
        %v1563 = vpack.c.b16 %v1540, %v1539
        %v1564 = vpack.c.b16 %v1542, %v1541
        %v1565 = vpack.c.b16 %v1544, %v1543
        %v1566 = vpack.c.b16 %v1546, %v1545
        %v1567 = vpack.c.b16 %v1548, %v1547
        %v1568 = vpack.c.b16 %v1550, %v1549
        %v1569 = vpack.c.b16 %v1552, %v1551
        %v1570 = vpack.c.b16 %v1554, %v1553
        %1587 = vmatpush.bf16.msra.mxu0 %v1562
        %1588 = vmatpush.bf16.msra.mxu0 %v1561
        %1589 = vmatpush.bf16.msra.mxu0 %v1560
        %1590 = vmatpush.bf16.msra.mxu0 %v1559
        %1591 = vmatpush.bf16.msra.mxu0 %v1558
        %1592 = vmatpush.bf16.msra.mxu0 %v1557
        %1593 = vmatpush.bf16.msra.mxu0 %v1556
        %1594 = vmatpush.bf16.msra.mxu0 %v1555
        %1595 = vmatmul.bf16.gmra.mxu0 %v999
        %v1596 = vpop.f32.mrf.mxu0
        %v1597 = vadd.f32 0.0, %v1596
        %v1598 = vpop.f32.mrf.mxu0
        %1599 = vdwg.mxu0
        %1600 = vmatpush.bf16.msra.mxu0 %v1570
        %1601 = vmatpush.bf16.msra.mxu0 %v1569
        %1602 = vmatpush.bf16.msra.mxu0 %v1568
        %1603 = vmatpush.bf16.msra.mxu0 %v1567
        %1604 = vmatpush.bf16.msra.mxu0 %v1566
        %1605 = vmatpush.bf16.msra.mxu0 %v1565
        %1606 = vmatpush.bf16.msra.mxu0 %v1564
        %1607 = vmatpush.bf16.msra.mxu0 %v1563
        %1608 = vmatmul.bf16.gmra.mxu0 %v1000
        %v1609 = vpop.f32.mrf.mxu0
        %v1610 = vadd.f32 %v1597, %v1609
        %v1611 = vpop.f32.mrf.mxu0
        %1612 = vdwg.mxu0
        %v1645 = vunpack.c.l.b16 %v963
        %v1646 = vunpack.c.l.b16 %v964
        %v1647 = vunpack.c.l.b16 %v965
        %v1648 = vunpack.c.l.b16 %v966
        %v1649 = vunpack.c.l.b16 %v967
        %v1650 = vunpack.c.l.b16 %v968
        %v1651 = vunpack.c.l.b16 %v969
        %v1652 = vunpack.c.l.b16 %v970
        %v1653 = vunpack.c.l.b16 %v971
        %v1654 = vunpack.c.l.b16 %v972
        %v1655 = vunpack.c.l.b16 %v973
        %v1656 = vunpack.c.l.b16 %v974
        %v1657 = vunpack.c.l.b16 %v975
        %v1658 = vunpack.c.l.b16 %v976
        %v1659 = vunpack.c.l.b16 %v977
        %v1660 = vunpack.c.l.b16 %v978
        %v1661 = vunpack.c.l.b16 %v979
        %v1662 = vunpack.c.l.b16 %v980
        %v1663 = vunpack.c.l.b16 %v981
        %v1664 = vunpack.c.l.b16 %v982
        %v1665 = vunpack.c.l.b16 %v983
        %v1666 = vunpack.c.l.b16 %v984
        %v1667 = vunpack.c.l.b16 %v985
        %v1668 = vunpack.c.l.b16 %v986
        %v1669 = vunpack.c.l.b16 %v987
        %v1670 = vunpack.c.l.b16 %v988
        %v1671 = vunpack.c.l.b16 %v989
        %v1672 = vunpack.c.l.b16 %v990
        %v1673 = vunpack.c.l.b16 %v991
        %v1674 = vunpack.c.l.b16 %v992
        %v1675 = vunpack.c.l.b16 %v993
        %v1676 = vunpack.c.l.b16 %v994
        %v1677 = vpack.c.b16 %v1646, %v1645
        %v1678 = vpack.c.b16 %v1648, %v1647
        %v1679 = vpack.c.b16 %v1650, %v1649
        %v1680 = vpack.c.b16 %v1652, %v1651
        %v1681 = vpack.c.b16 %v1654, %v1653
        %v1682 = vpack.c.b16 %v1656, %v1655
        %v1683 = vpack.c.b16 %v1658, %v1657
        %v1684 = vpack.c.b16 %v1660, %v1659
        %v1685 = vpack.c.b16 %v1662, %v1661
        %v1686 = vpack.c.b16 %v1664, %v1663
        %v1687 = vpack.c.b16 %v1666, %v1665
        %v1688 = vpack.c.b16 %v1668, %v1667
        %v1689 = vpack.c.b16 %v1670, %v1669
        %v1690 = vpack.c.b16 %v1672, %v1671
        %v1691 = vpack.c.b16 %v1674, %v1673
        %v1692 = vpack.c.b16 %v1676, %v1675
        %1709 = vmatpush.bf16.msra.mxu0 %v1684
        %1710 = vmatpush.bf16.msra.mxu0 %v1683
        %1711 = vmatpush.bf16.msra.mxu0 %v1682
        %1712 = vmatpush.bf16.msra.mxu0 %v1681
        %1713 = vmatpush.bf16.msra.mxu0 %v1680
        %1714 = vmatpush.bf16.msra.mxu0 %v1679
        %1715 = vmatpush.bf16.msra.mxu0 %v1678
        %1716 = vmatpush.bf16.msra.mxu0 %v1677
        %1717 = vmatmul.bf16.gmra.mxu0 %v999
        %v1718 = vpop.f32.mrf.mxu0
        %v1719 = vadd.f32 0.0, %v1718
        %v1720 = vpop.f32.mrf.mxu0
        %1721 = vdwg.mxu0
        %1722 = vmatpush.bf16.msra.mxu0 %v1692
        %1723 = vmatpush.bf16.msra.mxu0 %v1691
        %1724 = vmatpush.bf16.msra.mxu0 %v1690
        %1725 = vmatpush.bf16.msra.mxu0 %v1689
        %1726 = vmatpush.bf16.msra.mxu0 %v1688
        %1727 = vmatpush.bf16.msra.mxu0 %v1687
        %1728 = vmatpush.bf16.msra.mxu0 %v1686
        %1729 = vmatpush.bf16.msra.mxu0 %v1685
        %1730 = vmatmul.bf16.gmra.mxu0 %v1000
        %v1731 = vpop.f32.mrf.mxu0
        %v1732 = vadd.f32 %v1719, %v1731
        %v1733 = vpop.f32.mrf.mxu0
        %1734 = vdwg.mxu0
        %v1735 = vpack.c.bf16 %v1122, %v1122
        %v1736 = vpack.c.bf16 %v1244, %v1244
        %v1737 = vpack.c.bf16 %v1366, %v1366
        %v1738 = vpack.c.bf16 %v1488, %v1488
        %1739 = vmatpush.bf16.xpose.msra.mxu0 0
        %1740 = vmatpush.bf16.xpose.msra.mxu0 0
        %1741 = vmatpush.bf16.xpose.msra.mxu0 0
        %1742 = vmatpush.bf16.xpose.msra.mxu0 0
        %1743 = vmatpush.bf16.xpose.msra.mxu0 0
        %1744 = vmatpush.bf16.xpose.msra.mxu0 0
        %1745 = vmatpush.bf16.xpose.msra.mxu0 0
        %1746 = vmatpush.bf16.xpose.msra.mxu0 %v1737
        %1747 = vmatmul.bf16.gmra.mxu0 %v1735
        %v1748 = vpop.f32.mrf.mxu0
        %v1749 = vadd.f32 %v802, %v1748
        %v1750 = vpop.f32.mrf.mxu0
        %1751 = vdwg.mxu0
        %1752 = vmatpush.bf16.xpose.msra.mxu0 0
        %1753 = vmatpush.bf16.xpose.msra.mxu0 0
        %1754 = vmatpush.bf16.xpose.msra.mxu0 0
        %1755 = vmatpush.bf16.xpose.msra.mxu0 0
        %1756 = vmatpush.bf16.xpose.msra.mxu0 0
        %1757 = vmatpush.bf16.xpose.msra.mxu0 0
        %1758 = vmatpush.bf16.xpose.msra.mxu0 0
        %1759 = vmatpush.bf16.xpose.msra.mxu0 %v1738
        %1760 = vmatmul.bf16.gmra.mxu0 %v1736
        %v1761 = vpop.f32.mrf.mxu0
        %v1762 = vadd.f32 %v802, %v1761
        %v1763 = vpop.f32.mrf.mxu0
        %1764 = vdwg.mxu0
        %v1765 = vmul.f32 %v1749, 0.088388346
        %v1766 = vmul.f32 %v1762, 0.088388346
        %vm1767 = vcmask 64512
        %v1768 = vsel %vm1767, %v1765, -inf
        %1769 = vmax.xlane.f32.xlu0 %v1768
        %v1770 = vpop.xlane.xlu0 %1769
        %v1771 = vsel %vm1767, %v1766, -inf
        %1772 = vmax.xlane.f32.xlu0 %v1771
        %v1773 = vpop.xlane.xlu0 %1772
        %v1774 = vsub.f32 %v1765, %v1770
        %v1775 = vsub.f32 %v1766, %v1773
        %v1776 = vmul.f32 %v1774, 1.442695
        %v1777 = vpow.pop %v1776
        %v1778 = vmul.f32 %v1775, 1.442695
        %v1779 = vpow.pop %v1778
        %v1780 = vsel %vm1767, %v1777, 0.0
        %1781 = vadd.xlane.f32.xlu0 %v1780
        %v1782 = vpop.xlane.xlu0 %1781
        %v1783 = vsel %vm1767, %v1779, 0.0
        %1784 = vadd.xlane.f32.xlu0 %v1783
        %v1785 = vpop.xlane.xlu0 %1784
        %v1786 = vrcp.pop %v1782
        %v1787 = vrcp.pop %v1785
        %v1788 = vmul.f32 %v1777, %v1786
        %v1789 = vmul.f32 %v1779, %v1787
        %vm1790 = vcmp.ne.f32.partialorder %v1788, %v1788
        %vm1791 = vcmp.ne.f32.partialorder %v1789, %v1789
        %v1792 = vsel %vm1790, 0.0, %v1788
        %v1793 = vsel %vm1791, 0.0, %v1789
        %vm1794 = vcmp.eq.f32.partialorder %v1792, inf
        %vm1795 = vcmp.eq.f32.partialorder %v1793, inf
        %v1796 = vsel %vm1794, 3.4028235e+38, %v1792
        %v1797 = vsel %vm1795, 3.4028235e+38, %v1793
        %vm1798 = vcmp.eq.f32.partialorder %v1796, -inf
        %vm1799 = vcmp.eq.f32.partialorder %v1797, -inf
        %v1800 = vsel %vm1798, -3.4028235e+38, %v1796
        %v1801 = vsel %vm1799, -3.4028235e+38, %v1797
        %v1802 = vpack.c.bf16 %v1800, %v1800
        %v1803 = vpack.c.bf16 %v1801, %v1801
        %v1804 = vpack.c.bf16 %v1610, %v1610
        %v1805 = vpack.c.bf16 %v1732, %v1732
        %v1807 = vsel %vm1767, %v1802, 0
        %vm1809 = vcmask 1043456
        %v1811 = vsel %vm1809, %v1804, 0
        %1813 = vmatpush.bf16.msra.mxu0 0
        %1814 = vmatpush.bf16.msra.mxu0 0
        %1815 = vmatpush.bf16.msra.mxu0 0
        %1816 = vmatpush.bf16.msra.mxu0 0
        %1817 = vmatpush.bf16.msra.mxu0 0
        %1818 = vmatpush.bf16.msra.mxu0 0
        %1819 = vmatpush.bf16.msra.mxu0 0
        %1820 = vmatpush.bf16.msra.mxu0 %v1811
        %1821 = vmatmul.bf16.gmra.mxu0 %v1807
        %v1822 = vpop.f32.mrf.mxu0
        %v1823 = vadd.f32 0.0, %v1822
        %v1824 = vpop.f32.mrf.mxu0
        %1825 = vdwg.mxu0
        %v1827 = vsel %vm1767, %v1803, 0
        %v1830 = vsel %vm1809, %v1805, 0
        %1832 = vmatpush.bf16.msra.mxu0 0
        %1833 = vmatpush.bf16.msra.mxu0 0
        %1834 = vmatpush.bf16.msra.mxu0 0
        %1835 = vmatpush.bf16.msra.mxu0 0
        %1836 = vmatpush.bf16.msra.mxu0 0
        %1837 = vmatpush.bf16.msra.mxu0 0
        %1838 = vmatpush.bf16.msra.mxu0 0
        %1839 = vmatpush.bf16.msra.mxu0 %v1830
        %1840 = vmatmul.bf16.gmra.mxu0 %v1827
        %v1841 = vpop.f32.mrf.mxu0
        %v1842 = vadd.f32 0.0, %v1841
        %v1843 = vpop.f32.mrf.mxu0
        %1844 = vdwg.mxu0
        %v1845 = vld [vmem:[#allocation10] sm:$0xff]
        %v1846 = vld [vmem:[#allocation10 + $0x8] sm:$0xff]
        %v1847 = vld [vmem:[#allocation10 + $0x10] sm:$0xff]
        %v1848 = vld [vmem:[#allocation10 + $0x18] sm:$0xff]
        %v1849 = vld [vmem:[#allocation10 + $0x20] sm:$0xff]
        %v1850 = vld [vmem:[#allocation10 + $0x28] sm:$0xff]
        %v1851 = vld [vmem:[#allocation10 + $0x30] sm:$0xff]
        %v1852 = vld [vmem:[#allocation10 + $0x38] sm:$0xff]
        %v1853 = vld [vmem:[#allocation10 + $0x40] sm:$0xff]
        %v1854 = vld [vmem:[#allocation10 + $0x48] sm:$0xff]
        %v1855 = vld [vmem:[#allocation10 + $0x50] sm:$0xff]
        %v1856 = vld [vmem:[#allocation10 + $0x58] sm:$0xff]
        %v1857 = vld [vmem:[#allocation10 + $0x60] sm:$0xff]
        %v1858 = vld [vmem:[#allocation10 + $0x68] sm:$0xff]
        %v1859 = vld [vmem:[#allocation10 + $0x70] sm:$0xff]
        %v1860 = vld [vmem:[#allocation10 + $0x78] sm:$0xff]
        %v1861 = vld [vmem:[#allocation10 + $0x80] sm:$0xff]
        %v1862 = vld [vmem:[#allocation10 + $0x88] sm:$0xff]
        %v1863 = vld [vmem:[#allocation10 + $0x90] sm:$0xff]
        %v1864 = vld [vmem:[#allocation10 + $0x98] sm:$0xff]
        %v1865 = vld [vmem:[#allocation10 + $0xa0] sm:$0xff]
        %v1866 = vld [vmem:[#allocation10 + $0xa8] sm:$0xff]
        %v1867 = vld [vmem:[#allocation10 + $0xb0] sm:$0xff]
        %v1868 = vld [vmem:[#allocation10 + $0xb8] sm:$0xff]
        %v1869 = vld [vmem:[#allocation10 + $0xc0] sm:$0xff]
        %v1870 = vld [vmem:[#allocation10 + $0xc8] sm:$0xff]
        %v1871 = vld [vmem:[#allocation10 + $0xd0] sm:$0xff]
        %v1872 = vld [vmem:[#allocation10 + $0xd8] sm:$0xff]
        %v1873 = vld [vmem:[#allocation10 + $0xe0] sm:$0xff]
        %v1874 = vld [vmem:[#allocation10 + $0xe8] sm:$0xff]
        %v1875 = vld [vmem:[#allocation10 + $0xf0] sm:$0xff]
        %v1876 = vld [vmem:[#allocation10 + $0xf8] sm:$0xff]
        %v1877 = vpack.c.bf16 %v1823, %v1823
        %v1878 = vpack.c.bf16 %v1842, %v1842
        %v1895 = vunpack.c.l.b16 %v1845
        %v1896 = vunpack.c.h.b16 %v1845
        %v1897 = vunpack.c.l.b16 %v1846
        %v1898 = vunpack.c.h.b16 %v1846
        %v1899 = vunpack.c.l.b16 %v1847
        %v1900 = vunpack.c.h.b16 %v1847
        %v1901 = vunpack.c.l.b16 %v1848
        %v1902 = vunpack.c.h.b16 %v1848
        %v1903 = vunpack.c.l.b16 %v1849
        %v1904 = vunpack.c.h.b16 %v1849
        %v1905 = vunpack.c.l.b16 %v1850
        %v1906 = vunpack.c.h.b16 %v1850
        %v1907 = vunpack.c.l.b16 %v1851
        %v1908 = vunpack.c.h.b16 %v1851
        %v1909 = vunpack.c.l.b16 %v1852
        %v1910 = vunpack.c.h.b16 %v1852
        %v1911 = vunpack.c.l.b16 %v1853
        %v1912 = vunpack.c.h.b16 %v1853
        %v1913 = vunpack.c.l.b16 %v1854
        %v1914 = vunpack.c.h.b16 %v1854
        %v1915 = vunpack.c.l.b16 %v1855
        %v1916 = vunpack.c.h.b16 %v1855
        %v1917 = vunpack.c.l.b16 %v1856
        %v1918 = vunpack.c.h.b16 %v1856
        %v1919 = vunpack.c.l.b16 %v1857
        %v1920 = vunpack.c.h.b16 %v1857
        %v1921 = vunpack.c.l.b16 %v1858
        %v1922 = vunpack.c.h.b16 %v1858
        %v1923 = vunpack.c.l.b16 %v1859
        %v1924 = vunpack.c.h.b16 %v1859
        %v1925 = vunpack.c.l.b16 %v1860
        %v1926 = vunpack.c.h.b16 %v1860
        %v1927 = vpack.c.b16 %v1897, %v1895
        %v1928 = vpack.c.b16 %v1898, %v1896
        %v1929 = vpack.c.b16 %v1901, %v1899
        %v1930 = vpack.c.b16 %v1902, %v1900
        %v1931 = vpack.c.b16 %v1905, %v1903
        %v1932 = vpack.c.b16 %v1906, %v1904
        %v1933 = vpack.c.b16 %v1909, %v1907
        %v1934 = vpack.c.b16 %v1910, %v1908
        %v1935 = vpack.c.b16 %v1913, %v1911
        %v1936 = vpack.c.b16 %v1914, %v1912
        %v1937 = vpack.c.b16 %v1917, %v1915
        %v1938 = vpack.c.b16 %v1918, %v1916
        %v1939 = vpack.c.b16 %v1921, %v1919
        %v1940 = vpack.c.b16 %v1922, %v1920
        %v1941 = vpack.c.b16 %v1925, %v1923
        %v1942 = vpack.c.b16 %v1926, %v1924
        %1959 = vmatpush.bf16.msra.mxu0 %v1941
        %1960 = vmatpush.bf16.msra.mxu0 %v1939
        %1961 = vmatpush.bf16.msra.mxu0 %v1937
        %1962 = vmatpush.bf16.msra.mxu0 %v1935
        %1963 = vmatpush.bf16.msra.mxu0 %v1933
        %1964 = vmatpush.bf16.msra.mxu0 %v1931
        %1965 = vmatpush.bf16.msra.mxu0 %v1929
        %1966 = vmatpush.bf16.msra.mxu0 %v1927
        %1967 = vmatmul.bf16.gmra.mxu0 %v1877
        %v1968 = vpop.f32.mrf.mxu0
        %v1969 = vadd.f32 0.0, %v1968
        %v1970 = vpop.f32.mrf.mxu0
        %1971 = vdwg.mxu0
        %1972 = vmatpush.bf16.msra.mxu0 %v1942
        %1973 = vmatpush.bf16.msra.mxu0 %v1940
        %1974 = vmatpush.bf16.msra.mxu0 %v1938
        %1975 = vmatpush.bf16.msra.mxu0 %v1936
        %1976 = vmatpush.bf16.msra.mxu0 %v1934
        %1977 = vmatpush.bf16.msra.mxu0 %v1932
        %1978 = vmatpush.bf16.msra.mxu0 %v1930
        %1979 = vmatpush.bf16.msra.mxu0 %v1928
        %1980 = vmatmul.bf16.gmra.mxu0 %v1877
        %v1981 = vpop.f32.mrf.mxu0
        %v1982 = vadd.f32 0.0, %v1981
        %v1983 = vpop.f32.mrf.mxu0
        %1984 = vdwg.mxu0
        %v2001 = vunpack.c.l.b16 %v1861
        %v2002 = vunpack.c.h.b16 %v1861
        %v2003 = vunpack.c.l.b16 %v1862
        %v2004 = vunpack.c.h.b16 %v1862
        %v2005 = vunpack.c.l.b16 %v1863
        %v2006 = vunpack.c.h.b16 %v1863
        %v2007 = vunpack.c.l.b16 %v1864
        %v2008 = vunpack.c.h.b16 %v1864
        %v2009 = vunpack.c.l.b16 %v1865
        %v2010 = vunpack.c.h.b16 %v1865
        %v2011 = vunpack.c.l.b16 %v1866
        %v2012 = vunpack.c.h.b16 %v1866
        %v2013 = vunpack.c.l.b16 %v1867
        %v2014 = vunpack.c.h.b16 %v1867
        %v2015 = vunpack.c.l.b16 %v1868
        %v2016 = vunpack.c.h.b16 %v1868
        %v2017 = vunpack.c.l.b16 %v1869
        %v2018 = vunpack.c.h.b16 %v1869
        %v2019 = vunpack.c.l.b16 %v1870
        %v2020 = vunpack.c.h.b16 %v1870
        %v2021 = vunpack.c.l.b16 %v1871
        %v2022 = vunpack.c.h.b16 %v1871
        %v2023 = vunpack.c.l.b16 %v1872
        %v2024 = vunpack.c.h.b16 %v1872
        %v2025 = vunpack.c.l.b16 %v1873
        %v2026 = vunpack.c.h.b16 %v1873
        %v2027 = vunpack.c.l.b16 %v1874
        %v2028 = vunpack.c.h.b16 %v1874
        %v2029 = vunpack.c.l.b16 %v1875
        %v2030 = vunpack.c.h.b16 %v1875
        %v2031 = vunpack.c.l.b16 %v1876
        %v2032 = vunpack.c.h.b16 %v1876
        %v2033 = vpack.c.b16 %v2003, %v2001
        %v2034 = vpack.c.b16 %v2004, %v2002
        %v2035 = vpack.c.b16 %v2007, %v2005
        %v2036 = vpack.c.b16 %v2008, %v2006
        %v2037 = vpack.c.b16 %v2011, %v2009
        %v2038 = vpack.c.b16 %v2012, %v2010
        %v2039 = vpack.c.b16 %v2015, %v2013
        %v2040 = vpack.c.b16 %v2016, %v2014
        %v2041 = vpack.c.b16 %v2019, %v2017
        %v2042 = vpack.c.b16 %v2020, %v2018
        %v2043 = vpack.c.b16 %v2023, %v2021
        %v2044 = vpack.c.b16 %v2024, %v2022
        %v2045 = vpack.c.b16 %v2027, %v2025
        %v2046 = vpack.c.b16 %v2028, %v2026
        %v2047 = vpack.c.b16 %v2031, %v2029
        %v2048 = vpack.c.b16 %v2032, %v2030
        %2065 = vmatpush.bf16.msra.mxu0 %v2047
        %2066 = vmatpush.bf16.msra.mxu0 %v2045
        %2067 = vmatpush.bf16.msra.mxu0 %v2043
        %2068 = vmatpush.bf16.msra.mxu0 %v2041
        %2069 = vmatpush.bf16.msra.mxu0 %v2039
        %2070 = vmatpush.bf16.msra.mxu0 %v2037
        %2071 = vmatpush.bf16.msra.mxu0 %v2035
        %2072 = vmatpush.bf16.msra.mxu0 %v2033
        %2073 = vmatmul.bf16.gmra.mxu0 %v1878
        %v2074 = vpop.f32.mrf.mxu0
        %v2075 = vadd.f32 0.0, %v2074
        %v2076 = vpop.f32.mrf.mxu0
        %2077 = vdwg.mxu0
        %2078 = vmatpush.bf16.msra.mxu0 %v2048
        %2079 = vmatpush.bf16.msra.mxu0 %v2046
        %2080 = vmatpush.bf16.msra.mxu0 %v2044
        %2081 = vmatpush.bf16.msra.mxu0 %v2042
        %2082 = vmatpush.bf16.msra.mxu0 %v2040
        %2083 = vmatpush.bf16.msra.mxu0 %v2038
        %2084 = vmatpush.bf16.msra.mxu0 %v2036
        %2085 = vmatpush.bf16.msra.mxu0 %v2034
        %2086 = vmatmul.bf16.gmra.mxu0 %v1878
        %v2087 = vpop.f32.mrf.mxu0
        %v2088 = vadd.f32 0.0, %v2087
        %v2089 = vpop.f32.mrf.mxu0
        %2090 = vdwg.mxu0
        %v2091 = vadd.f32 %v1969, %v2075
        %v2092 = vadd.f32 %v1982, %v2088
        %v2093 = vadd.f32 %v796, %v2091
        %v2094 = vadd.f32 %v797, %v2092
        %v2095 = vld [vmem:[%s8] sm:$0x3]
        %v2096 = vld [vmem:[%s9] sm:$0x3]
        %v2097 = vadd.f32 %v2093, %v2094
        %2098 = vadd.xlane.f32.xlu0 %v2097
        %v2099 = vpop.xlane.xlu0 %2098
        %v2100 = vrcp.pop 256.0
        %v2101 = vmul.f32 256.0, %v2100
        %v2102 = vsub.f32 1.0, %v2101
        %v2103 = vmul.f32 %v2100, %v2102
        %v2104 = vadd.f32 %v2100, %v2103
        %vm2105 = vweird.f32 %v2100
        %v2106 = vsel %vm2105, %v2100, %v2104
        %v2107 = vmul.f32 %v2099, %v2106
        %v2108 = vsub.f32 %v2093, %v2107
        %v2109 = vsub.f32 %v2094, %v2107
        %v2110 = vmul.f32 %v2108, %v2108
        %v2111 = vmul.f32 %v2109, %v2109
        %v2112 = vadd.f32 %v2110, %v2111
        %2113 = vadd.xlane.f32.xlu0 %v2112
        %v2114 = vpop.xlane.xlu0 %2113
        %v2115 = vmul.f32 %v2114, %v2106
        %v2116 = vadd.f32 %v2115, 1e-05
        %v2117 = vrsqrt.pop %v2116
        %v2118 = vmul.f32 %v2117, %v2116
        %v2119 = vmul.f32 %v2118, %v2117
        %v2120 = vmul.f32 0.5, %v2119
        %v2121 = vsub.f32 1.5, %v2120
        %v2122 = vmul.f32 %v2117, %v2121
        %vm2123 = vweird.f32 %v2116
        %vm2124 = vweird.f32 %v2117
        %vm2125 = vmor %vm2123, %vm2124
        %v2126 = vsel %vm2125, %v2117, %v2122
        %v2127 = vmul.f32 %v2108, %v2126
        %v2128 = vmul.f32 %v2109, %v2126
        %v2130 = vperm.slane %v2095, 0
        %v2131 = vperm.slane %v2095, 1
        %v2134 = vmul.f32 %v2127, %v2130
        %v2135 = vmul.f32 %v2128, %v2131
        %v2137 = vperm.slane %v2096, 0
        %v2138 = vperm.slane %v2096, 1
        %v2141 = vadd.f32 %v2134, %v2137
        %v2142 = vadd.f32 %v2135, %v2138
        %v2143 = vld [vmem:[#allocation11] sm:$0xf]
        %v2144 = vld [vmem:[#allocation11 + $0x4] sm:$0xf]
        %v2145 = vld [vmem:[#allocation11 + $0x8] sm:$0xf]
        %v2146 = vld [vmem:[#allocation11 + $0xc] sm:$0xf]
        %v2147 = vld [vmem:[#allocation11 + $0x10] sm:$0xf]
        %v2148 = vld [vmem:[#allocation11 + $0x14] sm:$0xf]
        %v2149 = vld [vmem:[#allocation11 + $0x18] sm:$0xf]
        %v2150 = vld [vmem:[#allocation11 + $0x1c] sm:$0xf]
        %v2151 = vld [vmem:[#allocation11 + $0x20] sm:$0xf]
        %v2152 = vld [vmem:[#allocation11 + $0x24] sm:$0xf]
        %v2153 = vld [vmem:[#allocation11 + $0x28] sm:$0xf]
        %v2154 = vld [vmem:[#allocation11 + $0x2c] sm:$0xf]
        %v2155 = vld [vmem:[#allocation11 + $0x30] sm:$0xf]
        %v2156 = vld [vmem:[#allocation11 + $0x34] sm:$0xf]
        %v2157 = vld [vmem:[#allocation11 + $0x38] sm:$0xf]
        %v2158 = vld [vmem:[#allocation11 + $0x3c] sm:$0xf]
        %v2159 = vld [vmem:[#allocation11 + $0x40] sm:$0xf]
        %v2160 = vld [vmem:[#allocation11 + $0x44] sm:$0xf]
        %v2161 = vld [vmem:[#allocation11 + $0x48] sm:$0xf]
        %v2162 = vld [vmem:[#allocation11 + $0x4c] sm:$0xf]
        %v2163 = vld [vmem:[#allocation11 + $0x50] sm:$0xf]
        %v2164 = vld [vmem:[#allocation11 + $0x54] sm:$0xf]
        %v2165 = vld [vmem:[#allocation11 + $0x58] sm:$0xf]
        %v2166 = vld [vmem:[#allocation11 + $0x5c] sm:$0xf]
        %v2167 = vld [vmem:[#allocation11 + $0x60] sm:$0xf]
        %v2168 = vld [vmem:[#allocation11 + $0x64] sm:$0xf]
        %v2169 = vld [vmem:[#allocation11 + $0x68] sm:$0xf]
        %v2170 = vld [vmem:[#allocation11 + $0x6c] sm:$0xf]
        %v2171 = vld [vmem:[#allocation11 + $0x70] sm:$0xf]
        %v2172 = vld [vmem:[#allocation11 + $0x74] sm:$0xf]
        %v2173 = vld [vmem:[#allocation11 + $0x78] sm:$0xf]
        %v2174 = vld [vmem:[#allocation11 + $0x7c] sm:$0xf]
        %v2175 = vld [vmem:[#allocation11 + $0x80] sm:$0xf]
        %v2176 = vld [vmem:[#allocation11 + $0x84] sm:$0xf]
        %v2177 = vld [vmem:[#allocation11 + $0x88] sm:$0xf]
        %v2178 = vld [vmem:[#allocation11 + $0x8c] sm:$0xf]
        %v2179 = vld [vmem:[#allocation11 + $0x90] sm:$0xf]
        %v2180 = vld [vmem:[#allocation11 + $0x94] sm:$0xf]
        %v2181 = vld [vmem:[#allocation11 + $0x98] sm:$0xf]
        %v2182 = vld [vmem:[#allocation11 + $0x9c] sm:$0xf]
        %v2183 = vld [vmem:[#allocation11 + $0xa0] sm:$0xf]
        %v2184 = vld [vmem:[#allocation11 + $0xa4] sm:$0xf]
        %v2185 = vld [vmem:[#allocation11 + $0xa8] sm:$0xf]
        %v2186 = vld [vmem:[#allocation11 + $0xac] sm:$0xf]
        %v2187 = vld [vmem:[#allocation11 + $0xb0] sm:$0xf]
        %v2188 = vld [vmem:[#allocation11 + $0xb4] sm:$0xf]
        %v2189 = vld [vmem:[#allocation11 + $0xb8] sm:$0xf]
        %v2190 = vld [vmem:[#allocation11 + $0xbc] sm:$0xf]
        %v2191 = vld [vmem:[#allocation11 + $0xc0] sm:$0xf]
        %v2192 = vld [vmem:[#allocation11 + $0xc4] sm:$0xf]
        %v2193 = vld [vmem:[#allocation11 + $0xc8] sm:$0xf]
        %v2194 = vld [vmem:[#allocation11 + $0xcc] sm:$0xf]
        %v2195 = vld [vmem:[#allocation11 + $0xd0] sm:$0xf]
        %v2196 = vld [vmem:[#allocation11 + $0xd4] sm:$0xf]
        %v2197 = vld [vmem:[#allocation11 + $0xd8] sm:$0xf]
        %v2198 = vld [vmem:[#allocation11 + $0xdc] sm:$0xf]
        %v2199 = vld [vmem:[#allocation11 + $0xe0] sm:$0xf]
        %v2200 = vld [vmem:[#allocation11 + $0xe4] sm:$0xf]
        %v2201 = vld [vmem:[#allocation11 + $0xe8] sm:$0xf]
        %v2202 = vld [vmem:[#allocation11 + $0xec] sm:$0xf]
        %v2203 = vld [vmem:[#allocation11 + $0xf0] sm:$0xf]
        %v2204 = vld [vmem:[#allocation11 + $0xf4] sm:$0xf]
        %v2205 = vld [vmem:[#allocation11 + $0xf8] sm:$0xf]
        %v2206 = vld [vmem:[#allocation11 + $0xfc] sm:$0xf]
        %v2207 = vpack.c.bf16 %v2142, %v2141
        %v2209 = vunpack.c.l.b16 %v2207
        %v2210 = vunpack.c.h.b16 %v2207
        %v2211 = vpack.c.b16 %v2209, %v2209
        %v2212 = vpack.c.b16 %v2210, %v2210
        %v2247 = vunpack.c.l.b16 %v2143
        %v2248 = vunpack.c.l.b16 %v2144
        %v2249 = vunpack.c.l.b16 %v2145
        %v2250 = vunpack.c.l.b16 %v2146
        %v2251 = vunpack.c.l.b16 %v2147
        %v2252 = vunpack.c.l.b16 %v2148
        %v2253 = vunpack.c.l.b16 %v2149
        %v2254 = vunpack.c.l.b16 %v2150
        %v2255 = vunpack.c.l.b16 %v2151
        %v2256 = vunpack.c.l.b16 %v2152
        %v2257 = vunpack.c.l.b16 %v2153
        %v2258 = vunpack.c.l.b16 %v2154
        %v2259 = vunpack.c.l.b16 %v2155
        %v2260 = vunpack.c.l.b16 %v2156
        %v2261 = vunpack.c.l.b16 %v2157
        %v2262 = vunpack.c.l.b16 %v2158
        %v2263 = vunpack.c.l.b16 %v2159
        %v2264 = vunpack.c.l.b16 %v2160
        %v2265 = vunpack.c.l.b16 %v2161
        %v2266 = vunpack.c.l.b16 %v2162
        %v2267 = vunpack.c.l.b16 %v2163
        %v2268 = vunpack.c.l.b16 %v2164
        %v2269 = vunpack.c.l.b16 %v2165
        %v2270 = vunpack.c.l.b16 %v2166
        %v2271 = vunpack.c.l.b16 %v2167
        %v2272 = vunpack.c.l.b16 %v2168
        %v2273 = vunpack.c.l.b16 %v2169
        %v2274 = vunpack.c.l.b16 %v2170
        %v2275 = vunpack.c.l.b16 %v2171
        %v2276 = vunpack.c.l.b16 %v2172
        %v2277 = vunpack.c.l.b16 %v2173
        %v2278 = vunpack.c.l.b16 %v2174
        %v2279 = vpack.c.b16 %v2248, %v2247
        %v2280 = vpack.c.b16 %v2250, %v2249
        %v2281 = vpack.c.b16 %v2252, %v2251
        %v2282 = vpack.c.b16 %v2254, %v2253
        %v2283 = vpack.c.b16 %v2256, %v2255
        %v2284 = vpack.c.b16 %v2258, %v2257
        %v2285 = vpack.c.b16 %v2260, %v2259
        %v2286 = vpack.c.b16 %v2262, %v2261
        %v2287 = vpack.c.b16 %v2264, %v2263
        %v2288 = vpack.c.b16 %v2266, %v2265
        %v2289 = vpack.c.b16 %v2268, %v2267
        %v2290 = vpack.c.b16 %v2270, %v2269
        %v2291 = vpack.c.b16 %v2272, %v2271
        %v2292 = vpack.c.b16 %v2274, %v2273
        %v2293 = vpack.c.b16 %v2276, %v2275
        %v2294 = vpack.c.b16 %v2278, %v2277
        %2311 = vmatpush.bf16.msra.mxu0 %v2286
        %2312 = vmatpush.bf16.msra.mxu0 %v2285
        %2313 = vmatpush.bf16.msra.mxu0 %v2284
        %2314 = vmatpush.bf16.msra.mxu0 %v2283
        %2315 = vmatpush.bf16.msra.mxu0 %v2282
        %2316 = vmatpush.bf16.msra.mxu0 %v2281
        %2317 = vmatpush.bf16.msra.mxu0 %v2280
        %2318 = vmatpush.bf16.msra.mxu0 %v2279
        %2319 = vmatmul.bf16.gmra.mxu0 %v2211
        %v2320 = vpop.f32.mrf.mxu0
        %v2321 = vadd.f32 0.0, %v2320
        %v2322 = vpop.f32.mrf.mxu0
        %2323 = vdwg.mxu0
        %2324 = vmatpush.bf16.msra.mxu0 %v2294
        %2325 = vmatpush.bf16.msra.mxu0 %v2293
        %2326 = vmatpush.bf16.msra.mxu0 %v2292
        %2327 = vmatpush.bf16.msra.mxu0 %v2291
        %2328 = vmatpush.bf16.msra.mxu0 %v2290
        %2329 = vmatpush.bf16.msra.mxu0 %v2289
        %2330 = vmatpush.bf16.msra.mxu0 %v2288
        %2331 = vmatpush.bf16.msra.mxu0 %v2287
        %2332 = vmatmul.bf16.gmra.mxu0 %v2212
        %v2333 = vpop.f32.mrf.mxu0
        %v2334 = vadd.f32 %v2321, %v2333
        %v2335 = vpop.f32.mrf.mxu0
        %2336 = vdwg.mxu0
        %v2369 = vunpack.c.l.b16 %v2175
        %v2370 = vunpack.c.l.b16 %v2176
        %v2371 = vunpack.c.l.b16 %v2177
        %v2372 = vunpack.c.l.b16 %v2178
        %v2373 = vunpack.c.l.b16 %v2179
        %v2374 = vunpack.c.l.b16 %v2180
        %v2375 = vunpack.c.l.b16 %v2181
        %v2376 = vunpack.c.l.b16 %v2182
        %v2377 = vunpack.c.l.b16 %v2183
        %v2378 = vunpack.c.l.b16 %v2184
        %v2379 = vunpack.c.l.b16 %v2185
        %v2380 = vunpack.c.l.b16 %v2186
        %v2381 = vunpack.c.l.b16 %v2187
        %v2382 = vunpack.c.l.b16 %v2188
        %v2383 = vunpack.c.l.b16 %v2189
        %v2384 = vunpack.c.l.b16 %v2190
        %v2385 = vunpack.c.l.b16 %v2191
        %v2386 = vunpack.c.l.b16 %v2192
        %v2387 = vunpack.c.l.b16 %v2193
        %v2388 = vunpack.c.l.b16 %v2194
        %v2389 = vunpack.c.l.b16 %v2195
        %v2390 = vunpack.c.l.b16 %v2196
        %v2391 = vunpack.c.l.b16 %v2197
        %v2392 = vunpack.c.l.b16 %v2198
        %v2393 = vunpack.c.l.b16 %v2199
        %v2394 = vunpack.c.l.b16 %v2200
        %v2395 = vunpack.c.l.b16 %v2201
        %v2396 = vunpack.c.l.b16 %v2202
        %v2397 = vunpack.c.l.b16 %v2203
        %v2398 = vunpack.c.l.b16 %v2204
        %v2399 = vunpack.c.l.b16 %v2205
        %v2400 = vunpack.c.l.b16 %v2206
        %v2401 = vpack.c.b16 %v2370, %v2369
        %v2402 = vpack.c.b16 %v2372, %v2371
        %v2403 = vpack.c.b16 %v2374, %v2373
        %v2404 = vpack.c.b16 %v2376, %v2375
        %v2405 = vpack.c.b16 %v2378, %v2377
        %v2406 = vpack.c.b16 %v2380, %v2379
        %v2407 = vpack.c.b16 %v2382, %v2381
        %v2408 = vpack.c.b16 %v2384, %v2383
        %v2409 = vpack.c.b16 %v2386, %v2385
        %v2410 = vpack.c.b16 %v2388, %v2387
        %v2411 = vpack.c.b16 %v2390, %v2389
        %v2412 = vpack.c.b16 %v2392, %v2391
        %v2413 = vpack.c.b16 %v2394, %v2393
        %v2414 = vpack.c.b16 %v2396, %v2395
        %v2415 = vpack.c.b16 %v2398, %v2397
        %v2416 = vpack.c.b16 %v2400, %v2399
        %2433 = vmatpush.bf16.msra.mxu0 %v2408
        %2434 = vmatpush.bf16.msra.mxu0 %v2407
        %2435 = vmatpush.bf16.msra.mxu0 %v2406
        %2436 = vmatpush.bf16.msra.mxu0 %v2405
        %2437 = vmatpush.bf16.msra.mxu0 %v2404
        %2438 = vmatpush.bf16.msra.mxu0 %v2403
        %2439 = vmatpush.bf16.msra.mxu0 %v2402
        %2440 = vmatpush.bf16.msra.mxu0 %v2401
        %2441 = vmatmul.bf16.gmra.mxu0 %v2211
        %v2442 = vpop.f32.mrf.mxu0
        %v2443 = vadd.f32 0.0, %v2442
        %v2444 = vpop.f32.mrf.mxu0
        %2445 = vdwg.mxu0
        %2446 = vmatpush.bf16.msra.mxu0 %v2416
        %2447 = vmatpush.bf16.msra.mxu0 %v2415
        %2448 = vmatpush.bf16.msra.mxu0 %v2414
        %2449 = vmatpush.bf16.msra.mxu0 %v2413
        %2450 = vmatpush.bf16.msra.mxu0 %v2412
        %2451 = vmatpush.bf16.msra.mxu0 %v2411
        %2452 = vmatpush.bf16.msra.mxu0 %v2410
        %2453 = vmatpush.bf16.msra.mxu0 %v2409
        %2454 = vmatmul.bf16.gmra.mxu0 %v2212
        %v2455 = vpop.f32.mrf.mxu0
        %v2456 = vadd.f32 %v2443, %v2455
        %v2457 = vpop.f32.mrf.mxu0
        %2458 = vdwg.mxu0
        %v2459 = vld [vmem:[#allocation13] sm:$0xf]
        %v2460 = vld [vmem:[#allocation13 + $0x4] sm:$0xf]
        %v2461 = vld [vmem:[#allocation13 + $0x8] sm:$0xf]
        %v2462 = vld [vmem:[#allocation13 + $0xc] sm:$0xf]
        %v2463 = vld [vmem:[#allocation13 + $0x10] sm:$0xf]
        %v2464 = vld [vmem:[#allocation13 + $0x14] sm:$0xf]
        %v2465 = vld [vmem:[#allocation13 + $0x18] sm:$0xf]
        %v2466 = vld [vmem:[#allocation13 + $0x1c] sm:$0xf]
        %v2467 = vld [vmem:[#allocation13 + $0x20] sm:$0xf]
        %v2468 = vld [vmem:[#allocation13 + $0x24] sm:$0xf]
        %v2469 = vld [vmem:[#allocation13 + $0x28] sm:$0xf]
        %v2470 = vld [vmem:[#allocation13 + $0x2c] sm:$0xf]
        %v2471 = vld [vmem:[#allocation13 + $0x30] sm:$0xf]
        %v2472 = vld [vmem:[#allocation13 + $0x34] sm:$0xf]
        %v2473 = vld [vmem:[#allocation13 + $0x38] sm:$0xf]
        %v2474 = vld [vmem:[#allocation13 + $0x3c] sm:$0xf]
        %v2475 = vld [vmem:[#allocation13 + $0x40] sm:$0xf]
        %v2476 = vld [vmem:[#allocation13 + $0x44] sm:$0xf]
        %v2477 = vld [vmem:[#allocation13 + $0x48] sm:$0xf]
        %v2478 = vld [vmem:[#allocation13 + $0x4c] sm:$0xf]
        %v2479 = vld [vmem:[#allocation13 + $0x50] sm:$0xf]
        %v2480 = vld [vmem:[#allocation13 + $0x54] sm:$0xf]
        %v2481 = vld [vmem:[#allocation13 + $0x58] sm:$0xf]
        %v2482 = vld [vmem:[#allocation13 + $0x5c] sm:$0xf]
        %v2483 = vld [vmem:[#allocation13 + $0x60] sm:$0xf]
        %v2484 = vld [vmem:[#allocation13 + $0x64] sm:$0xf]
        %v2485 = vld [vmem:[#allocation13 + $0x68] sm:$0xf]
        %v2486 = vld [vmem:[#allocation13 + $0x6c] sm:$0xf]
        %v2487 = vld [vmem:[#allocation13 + $0x70] sm:$0xf]
        %v2488 = vld [vmem:[#allocation13 + $0x74] sm:$0xf]
        %v2489 = vld [vmem:[#allocation13 + $0x78] sm:$0xf]
        %v2490 = vld [vmem:[#allocation13 + $0x7c] sm:$0xf]
        %v2491 = vld [vmem:[#allocation13 + $0x80] sm:$0xf]
        %v2492 = vld [vmem:[#allocation13 + $0x84] sm:$0xf]
        %v2493 = vld [vmem:[#allocation13 + $0x88] sm:$0xf]
        %v2494 = vld [vmem:[#allocation13 + $0x8c] sm:$0xf]
        %v2495 = vld [vmem:[#allocation13 + $0x90] sm:$0xf]
        %v2496 = vld [vmem:[#allocation13 + $0x94] sm:$0xf]
        %v2497 = vld [vmem:[#allocation13 + $0x98] sm:$0xf]
        %v2498 = vld [vmem:[#allocation13 + $0x9c] sm:$0xf]
        %v2499 = vld [vmem:[#allocation13 + $0xa0] sm:$0xf]
        %v2500 = vld [vmem:[#allocation13 + $0xa4] sm:$0xf]
        %v2501 = vld [vmem:[#allocation13 + $0xa8] sm:$0xf]
        %v2502 = vld [vmem:[#allocation13 + $0xac] sm:$0xf]
        %v2503 = vld [vmem:[#allocation13 + $0xb0] sm:$0xf]
        %v2504 = vld [vmem:[#allocation13 + $0xb4] sm:$0xf]
        %v2505 = vld [vmem:[#allocation13 + $0xb8] sm:$0xf]
        %v2506 = vld [vmem:[#allocation13 + $0xbc] sm:$0xf]
        %v2507 = vld [vmem:[#allocation13 + $0xc0] sm:$0xf]
        %v2508 = vld [vmem:[#allocation13 + $0xc4] sm:$0xf]
        %v2509 = vld [vmem:[#allocation13 + $0xc8] sm:$0xf]
        %v2510 = vld [vmem:[#allocation13 + $0xcc] sm:$0xf]
        %v2511 = vld [vmem:[#allocation13 + $0xd0] sm:$0xf]
        %v2512 = vld [vmem:[#allocation13 + $0xd4] sm:$0xf]
        %v2513 = vld [vmem:[#allocation13 + $0xd8] sm:$0xf]
        %v2514 = vld [vmem:[#allocation13 + $0xdc] sm:$0xf]
        %v2515 = vld [vmem:[#allocation13 + $0xe0] sm:$0xf]
        %v2516 = vld [vmem:[#allocation13 + $0xe4] sm:$0xf]
        %v2517 = vld [vmem:[#allocation13 + $0xe8] sm:$0xf]
        %v2518 = vld [vmem:[#allocation13 + $0xec] sm:$0xf]
        %v2519 = vld [vmem:[#allocation13 + $0xf0] sm:$0xf]
        %v2520 = vld [vmem:[#allocation13 + $0xf4] sm:$0xf]
        %v2521 = vld [vmem:[#allocation13 + $0xf8] sm:$0xf]
        %v2522 = vld [vmem:[#allocation13 + $0xfc] sm:$0xf]
        %v2523 = vld [vmem:[#allocation13 + $0x100] sm:$0xf]
        %v2524 = vld [vmem:[#allocation13 + $0x104] sm:$0xf]
        %v2525 = vld [vmem:[#allocation13 + $0x108] sm:$0xf]
        %v2526 = vld [vmem:[#allocation13 + $0x10c] sm:$0xf]
        %v2527 = vld [vmem:[#allocation13 + $0x110] sm:$0xf]
        %v2528 = vld [vmem:[#allocation13 + $0x114] sm:$0xf]
        %v2529 = vld [vmem:[#allocation13 + $0x118] sm:$0xf]
        %v2530 = vld [vmem:[#allocation13 + $0x11c] sm:$0xf]
        %v2531 = vld [vmem:[#allocation13 + $0x120] sm:$0xf]
        %v2532 = vld [vmem:[#allocation13 + $0x124] sm:$0xf]
        %v2533 = vld [vmem:[#allocation13 + $0x128] sm:$0xf]
        %v2534 = vld [vmem:[#allocation13 + $0x12c] sm:$0xf]
        %v2535 = vld [vmem:[#allocation13 + $0x130] sm:$0xf]
        %v2536 = vld [vmem:[#allocation13 + $0x134] sm:$0xf]
        %v2537 = vld [vmem:[#allocation13 + $0x138] sm:$0xf]
        %v2538 = vld [vmem:[#allocation13 + $0x13c] sm:$0xf]
        %v2539 = vld [vmem:[#allocation13 + $0x140] sm:$0xf]
        %v2540 = vld [vmem:[#allocation13 + $0x144] sm:$0xf]
        %v2541 = vld [vmem:[#allocation13 + $0x148] sm:$0xf]
        %v2542 = vld [vmem:[#allocation13 + $0x14c] sm:$0xf]
        %v2543 = vld [vmem:[#allocation13 + $0x150] sm:$0xf]
        %v2544 = vld [vmem:[#allocation13 + $0x154] sm:$0xf]
        %v2545 = vld [vmem:[#allocation13 + $0x158] sm:$0xf]
        %v2546 = vld [vmem:[#allocation13 + $0x15c] sm:$0xf]
        %v2547 = vld [vmem:[#allocation13 + $0x160] sm:$0xf]
        %v2548 = vld [vmem:[#allocation13 + $0x164] sm:$0xf]
        %v2549 = vld [vmem:[#allocation13 + $0x168] sm:$0xf]
        %v2550 = vld [vmem:[#allocation13 + $0x16c] sm:$0xf]
        %v2551 = vld [vmem:[#allocation13 + $0x170] sm:$0xf]
        %v2552 = vld [vmem:[#allocation13 + $0x174] sm:$0xf]
        %v2553 = vld [vmem:[#allocation13 + $0x178] sm:$0xf]
        %v2554 = vld [vmem:[#allocation13 + $0x17c] sm:$0xf]
        %v2555 = vld [vmem:[#allocation13 + $0x180] sm:$0xf]
        %v2556 = vld [vmem:[#allocation13 + $0x184] sm:$0xf]
        %v2557 = vld [vmem:[#allocation13 + $0x188] sm:$0xf]
        %v2558 = vld [vmem:[#allocation13 + $0x18c] sm:$0xf]
        %v2559 = vld [vmem:[#allocation13 + $0x190] sm:$0xf]
        %v2560 = vld [vmem:[#allocation13 + $0x194] sm:$0xf]
        %v2561 = vld [vmem:[#allocation13 + $0x198] sm:$0xf]
        %v2562 = vld [vmem:[#allocation13 + $0x19c] sm:$0xf]
        %v2563 = vld [vmem:[#allocation13 + $0x1a0] sm:$0xf]
        %v2564 = vld [vmem:[#allocation13 + $0x1a4] sm:$0xf]
        %v2565 = vld [vmem:[#allocation13 + $0x1a8] sm:$0xf]
        %v2566 = vld [vmem:[#allocation13 + $0x1ac] sm:$0xf]
        %v2567 = vld [vmem:[#allocation13 + $0x1b0] sm:$0xf]
        %v2568 = vld [vmem:[#allocation13 + $0x1b4] sm:$0xf]
        %v2569 = vld [vmem:[#allocation13 + $0x1b8] sm:$0xf]
        %v2570 = vld [vmem:[#allocation13 + $0x1bc] sm:$0xf]
        %v2571 = vld [vmem:[#allocation13 + $0x1c0] sm:$0xf]
        %v2572 = vld [vmem:[#allocation13 + $0x1c4] sm:$0xf]
        %v2573 = vld [vmem:[#allocation13 + $0x1c8] sm:$0xf]
        %v2574 = vld [vmem:[#allocation13 + $0x1cc] sm:$0xf]
        %v2575 = vld [vmem:[#allocation13 + $0x1d0] sm:$0xf]
        %v2576 = vld [vmem:[#allocation13 + $0x1d4] sm:$0xf]
        %v2577 = vld [vmem:[#allocation13 + $0x1d8] sm:$0xf]
        %v2578 = vld [vmem:[#allocation13 + $0x1dc] sm:$0xf]
        %v2579 = vld [vmem:[#allocation13 + $0x1e0] sm:$0xf]
        %v2580 = vld [vmem:[#allocation13 + $0x1e4] sm:$0xf]
        %v2581 = vld [vmem:[#allocation13 + $0x1e8] sm:$0xf]
        %v2582 = vld [vmem:[#allocation13 + $0x1ec] sm:$0xf]
        %v2583 = vld [vmem:[#allocation13 + $0x1f0] sm:$0xf]
        %v2584 = vld [vmem:[#allocation13 + $0x1f4] sm:$0xf]
        %v2585 = vld [vmem:[#allocation13 + $0x1f8] sm:$0xf]
        %v2586 = vld [vmem:[#allocation13 + $0x1fc] sm:$0xf]
        %v2587 = vpack.c.bf16 %v799, %v798
        %v2588 = vpack.c.bf16 %v801, %v800
        %v2591 = vunpack.c.l.b16 %v2587
        %v2592 = vunpack.c.h.b16 %v2587
        %v2593 = vunpack.c.l.b16 %v2588
        %v2594 = vunpack.c.h.b16 %v2588
        %v2595 = vpack.c.b16 %v2593, %v2591
        %v2596 = vpack.c.b16 %v2594, %v2592
        %v2631 = vunpack.c.l.b16 %v2459
        %v2632 = vunpack.c.l.b16 %v2460
        %v2633 = vunpack.c.l.b16 %v2461
        %v2634 = vunpack.c.l.b16 %v2462
        %v2635 = vunpack.c.l.b16 %v2463
        %v2636 = vunpack.c.l.b16 %v2464
        %v2637 = vunpack.c.l.b16 %v2465
        %v2638 = vunpack.c.l.b16 %v2466
        %v2639 = vunpack.c.l.b16 %v2467
        %v2640 = vunpack.c.l.b16 %v2468
        %v2641 = vunpack.c.l.b16 %v2469
        %v2642 = vunpack.c.l.b16 %v2470
        %v2643 = vunpack.c.l.b16 %v2471
        %v2644 = vunpack.c.l.b16 %v2472
        %v2645 = vunpack.c.l.b16 %v2473
        %v2646 = vunpack.c.l.b16 %v2474
        %v2647 = vunpack.c.l.b16 %v2475
        %v2648 = vunpack.c.l.b16 %v2476
        %v2649 = vunpack.c.l.b16 %v2477
        %v2650 = vunpack.c.l.b16 %v2478
        %v2651 = vunpack.c.l.b16 %v2479
        %v2652 = vunpack.c.l.b16 %v2480
        %v2653 = vunpack.c.l.b16 %v2481
        %v2654 = vunpack.c.l.b16 %v2482
        %v2655 = vunpack.c.l.b16 %v2483
        %v2656 = vunpack.c.l.b16 %v2484
        %v2657 = vunpack.c.l.b16 %v2485
        %v2658 = vunpack.c.l.b16 %v2486
        %v2659 = vunpack.c.l.b16 %v2487
        %v2660 = vunpack.c.l.b16 %v2488
        %v2661 = vunpack.c.l.b16 %v2489
        %v2662 = vunpack.c.l.b16 %v2490
        %v2663 = vpack.c.b16 %v2632, %v2631
        %v2664 = vpack.c.b16 %v2634, %v2633
        %v2665 = vpack.c.b16 %v2636, %v2635
        %v2666 = vpack.c.b16 %v2638, %v2637
        %v2667 = vpack.c.b16 %v2640, %v2639
        %v2668 = vpack.c.b16 %v2642, %v2641
        %v2669 = vpack.c.b16 %v2644, %v2643
        %v2670 = vpack.c.b16 %v2646, %v2645
        %v2671 = vpack.c.b16 %v2648, %v2647
        %v2672 = vpack.c.b16 %v2650, %v2649
        %v2673 = vpack.c.b16 %v2652, %v2651
        %v2674 = vpack.c.b16 %v2654, %v2653
        %v2675 = vpack.c.b16 %v2656, %v2655
        %v2676 = vpack.c.b16 %v2658, %v2657
        %v2677 = vpack.c.b16 %v2660, %v2659
        %v2678 = vpack.c.b16 %v2662, %v2661
        %2695 = vmatpush.bf16.msra.mxu0 %v2670
        %2696 = vmatpush.bf16.msra.mxu0 %v2669
        %2697 = vmatpush.bf16.msra.mxu0 %v2668
        %2698 = vmatpush.bf16.msra.mxu0 %v2667
        %2699 = vmatpush.bf16.msra.mxu0 %v2666
        %2700 = vmatpush.bf16.msra.mxu0 %v2665
        %2701 = vmatpush.bf16.msra.mxu0 %v2664
        %2702 = vmatpush.bf16.msra.mxu0 %v2663
        %2703 = vmatmul.bf16.gmra.mxu0 %v2595
        %v2704 = vpop.f32.mrf.mxu0
        %v2705 = vadd.f32 0.0, %v2704
        %v2706 = vpop.f32.mrf.mxu0
        %v2707 = vadd.f32 0.0, %v2706
        %2708 = vdwg.mxu0
        %2709 = vmatpush.bf16.msra.mxu0 %v2678
        %2710 = vmatpush.bf16.msra.mxu0 %v2677
        %2711 = vmatpush.bf16.msra.mxu0 %v2676
        %2712 = vmatpush.bf16.msra.mxu0 %v2675
        %2713 = vmatpush.bf16.msra.mxu0 %v2674
        %2714 = vmatpush.bf16.msra.mxu0 %v2673
        %2715 = vmatpush.bf16.msra.mxu0 %v2672
        %2716 = vmatpush.bf16.msra.mxu0 %v2671
        %2717 = vmatmul.bf16.gmra.mxu0 %v2596
        %v2718 = vpop.f32.mrf.mxu0
        %v2719 = vadd.f32 %v2705, %v2718
        %v2720 = vpop.f32.mrf.mxu0
        %v2721 = vadd.f32 %v2707, %v2720
        %2722 = vdwg.mxu0
        %v2755 = vunpack.c.l.b16 %v2491
        %v2756 = vunpack.c.l.b16 %v2492
        %v2757 = vunpack.c.l.b16 %v2493
        %v2758 = vunpack.c.l.b16 %v2494
        %v2759 = vunpack.c.l.b16 %v2495
        %v2760 = vunpack.c.l.b16 %v2496
        %v2761 = vunpack.c.l.b16 %v2497
        %v2762 = vunpack.c.l.b16 %v2498
        %v2763 = vunpack.c.l.b16 %v2499
        %v2764 = vunpack.c.l.b16 %v2500
        %v2765 = vunpack.c.l.b16 %v2501
        %v2766 = vunpack.c.l.b16 %v2502
        %v2767 = vunpack.c.l.b16 %v2503
        %v2768 = vunpack.c.l.b16 %v2504
        %v2769 = vunpack.c.l.b16 %v2505
        %v2770 = vunpack.c.l.b16 %v2506
        %v2771 = vunpack.c.l.b16 %v2507
        %v2772 = vunpack.c.l.b16 %v2508
        %v2773 = vunpack.c.l.b16 %v2509
        %v2774 = vunpack.c.l.b16 %v2510
        %v2775 = vunpack.c.l.b16 %v2511
        %v2776 = vunpack.c.l.b16 %v2512
        %v2777 = vunpack.c.l.b16 %v2513
        %v2778 = vunpack.c.l.b16 %v2514
        %v2779 = vunpack.c.l.b16 %v2515
        %v2780 = vunpack.c.l.b16 %v2516
        %v2781 = vunpack.c.l.b16 %v2517
        %v2782 = vunpack.c.l.b16 %v2518
        %v2783 = vunpack.c.l.b16 %v2519
        %v2784 = vunpack.c.l.b16 %v2520
        %v2785 = vunpack.c.l.b16 %v2521
        %v2786 = vunpack.c.l.b16 %v2522
        %v2787 = vpack.c.b16 %v2756, %v2755
        %v2788 = vpack.c.b16 %v2758, %v2757
        %v2789 = vpack.c.b16 %v2760, %v2759
        %v2790 = vpack.c.b16 %v2762, %v2761
        %v2791 = vpack.c.b16 %v2764, %v2763
        %v2792 = vpack.c.b16 %v2766, %v2765
        %v2793 = vpack.c.b16 %v2768, %v2767
        %v2794 = vpack.c.b16 %v2770, %v2769
        %v2795 = vpack.c.b16 %v2772, %v2771
        %v2796 = vpack.c.b16 %v2774, %v2773
        %v2797 = vpack.c.b16 %v2776, %v2775
        %v2798 = vpack.c.b16 %v2778, %v2777
        %v2799 = vpack.c.b16 %v2780, %v2779
        %v2800 = vpack.c.b16 %v2782, %v2781
        %v2801 = vpack.c.b16 %v2784, %v2783
        %v2802 = vpack.c.b16 %v2786, %v2785
        %2819 = vmatpush.bf16.msra.mxu0 %v2794
        %2820 = vmatpush.bf16.msra.mxu0 %v2793
        %2821 = vmatpush.bf16.msra.mxu0 %v2792
        %2822 = vmatpush.bf16.msra.mxu0 %v2791
        %2823 = vmatpush.bf16.msra.mxu0 %v2790
        %2824 = vmatpush.bf16.msra.mxu0 %v2789
        %2825 = vmatpush.bf16.msra.mxu0 %v2788
        %2826 = vmatpush.bf16.msra.mxu0 %v2787
        %2827 = vmatmul.bf16.gmra.mxu0 %v2595
        %v2828 = vpop.f32.mrf.mxu0
        %v2829 = vadd.f32 0.0, %v2828
        %v2830 = vpop.f32.mrf.mxu0
        %v2831 = vadd.f32 0.0, %v2830
        %2832 = vdwg.mxu0
        %2833 = vmatpush.bf16.msra.mxu0 %v2802
        %2834 = vmatpush.bf16.msra.mxu0 %v2801
        %2835 = vmatpush.bf16.msra.mxu0 %v2800
        %2836 = vmatpush.bf16.msra.mxu0 %v2799
        %2837 = vmatpush.bf16.msra.mxu0 %v2798
        %2838 = vmatpush.bf16.msra.mxu0 %v2797
        %2839 = vmatpush.bf16.msra.mxu0 %v2796
        %2840 = vmatpush.bf16.msra.mxu0 %v2795
        %2841 = vmatmul.bf16.gmra.mxu0 %v2596
        %v2842 = vpop.f32.mrf.mxu0
        %v2843 = vadd.f32 %v2829, %v2842
        %v2844 = vpop.f32.mrf.mxu0
        %v2845 = vadd.f32 %v2831, %v2844
        %2846 = vdwg.mxu0
        %v2879 = vunpack.c.l.b16 %v2523
        %v2880 = vunpack.c.l.b16 %v2524
        %v2881 = vunpack.c.l.b16 %v2525
        %v2882 = vunpack.c.l.b16 %v2526
        %v2883 = vunpack.c.l.b16 %v2527
        %v2884 = vunpack.c.l.b16 %v2528
        %v2885 = vunpack.c.l.b16 %v2529
        %v2886 = vunpack.c.l.b16 %v2530
        %v2887 = vunpack.c.l.b16 %v2531
        %v2888 = vunpack.c.l.b16 %v2532
        %v2889 = vunpack.c.l.b16 %v2533
        %v2890 = vunpack.c.l.b16 %v2534
        %v2891 = vunpack.c.l.b16 %v2535
        %v2892 = vunpack.c.l.b16 %v2536
        %v2893 = vunpack.c.l.b16 %v2537
        %v2894 = vunpack.c.l.b16 %v2538
        %v2895 = vunpack.c.l.b16 %v2539
        %v2896 = vunpack.c.l.b16 %v2540
        %v2897 = vunpack.c.l.b16 %v2541
        %v2898 = vunpack.c.l.b16 %v2542
        %v2899 = vunpack.c.l.b16 %v2543
        %v2900 = vunpack.c.l.b16 %v2544
        %v2901 = vunpack.c.l.b16 %v2545
        %v2902 = vunpack.c.l.b16 %v2546
        %v2903 = vunpack.c.l.b16 %v2547
        %v2904 = vunpack.c.l.b16 %v2548
        %v2905 = vunpack.c.l.b16 %v2549
        %v2906 = vunpack.c.l.b16 %v2550
        %v2907 = vunpack.c.l.b16 %v2551
        %v2908 = vunpack.c.l.b16 %v2552
        %v2909 = vunpack.c.l.b16 %v2553
        %v2910 = vunpack.c.l.b16 %v2554
        %v2911 = vpack.c.b16 %v2880, %v2879
        %v2912 = vpack.c.b16 %v2882, %v2881
        %v2913 = vpack.c.b16 %v2884, %v2883
        %v2914 = vpack.c.b16 %v2886, %v2885
        %v2915 = vpack.c.b16 %v2888, %v2887
        %v2916 = vpack.c.b16 %v2890, %v2889
        %v2917 = vpack.c.b16 %v2892, %v2891
        %v2918 = vpack.c.b16 %v2894, %v2893
        %v2919 = vpack.c.b16 %v2896, %v2895
        %v2920 = vpack.c.b16 %v2898, %v2897
        %v2921 = vpack.c.b16 %v2900, %v2899
        %v2922 = vpack.c.b16 %v2902, %v2901
        %v2923 = vpack.c.b16 %v2904, %v2903
        %v2924 = vpack.c.b16 %v2906, %v2905
        %v2925 = vpack.c.b16 %v2908, %v2907
        %v2926 = vpack.c.b16 %v2910, %v2909
        %2943 = vmatpush.bf16.msra.mxu0 %v2918
        %2944 = vmatpush.bf16.msra.mxu0 %v2917
        %2945 = vmatpush.bf16.msra.mxu0 %v2916
        %2946 = vmatpush.bf16.msra.mxu0 %v2915
        %2947 = vmatpush.bf16.msra.mxu0 %v2914
        %2948 = vmatpush.bf16.msra.mxu0 %v2913
        %2949 = vmatpush.bf16.msra.mxu0 %v2912
        %2950 = vmatpush.bf16.msra.mxu0 %v2911
        %2951 = vmatmul.bf16.gmra.mxu0 %v2595
        %v2952 = vpop.f32.mrf.mxu0
        %v2953 = vadd.f32 0.0, %v2952
        %v2954 = vpop.f32.mrf.mxu0
        %v2955 = vadd.f32 0.0, %v2954
        %2956 = vdwg.mxu0
        %2957 = vmatpush.bf16.msra.mxu0 %v2926
        %2958 = vmatpush.bf16.msra.mxu0 %v2925
        %2959 = vmatpush.bf16.msra.mxu0 %v2924
        %2960 = vmatpush.bf16.msra.mxu0 %v2923
        %2961 = vmatpush.bf16.msra.mxu0 %v2922
        %2962 = vmatpush.bf16.msra.mxu0 %v2921
        %2963 = vmatpush.bf16.msra.mxu0 %v2920
        %2964 = vmatpush.bf16.msra.mxu0 %v2919
        %2965 = vmatmul.bf16.gmra.mxu0 %v2596
        %v2966 = vpop.f32.mrf.mxu0
        %v2967 = vadd.f32 %v2953, %v2966
        %v2968 = vpop.f32.mrf.mxu0
        %v2969 = vadd.f32 %v2955, %v2968
        %2970 = vdwg.mxu0
        %v3003 = vunpack.c.l.b16 %v2555
        %v3004 = vunpack.c.l.b16 %v2556
        %v3005 = vunpack.c.l.b16 %v2557
        %v3006 = vunpack.c.l.b16 %v2558
        %v3007 = vunpack.c.l.b16 %v2559
        %v3008 = vunpack.c.l.b16 %v2560
        %v3009 = vunpack.c.l.b16 %v2561
        %v3010 = vunpack.c.l.b16 %v2562
        %v3011 = vunpack.c.l.b16 %v2563
        %v3012 = vunpack.c.l.b16 %v2564
        %v3013 = vunpack.c.l.b16 %v2565
        %v3014 = vunpack.c.l.b16 %v2566
        %v3015 = vunpack.c.l.b16 %v2567
        %v3016 = vunpack.c.l.b16 %v2568
        %v3017 = vunpack.c.l.b16 %v2569
        %v3018 = vunpack.c.l.b16 %v2570
        %v3019 = vunpack.c.l.b16 %v2571
        %v3020 = vunpack.c.l.b16 %v2572
        %v3021 = vunpack.c.l.b16 %v2573
        %v3022 = vunpack.c.l.b16 %v2574
        %v3023 = vunpack.c.l.b16 %v2575
        %v3024 = vunpack.c.l.b16 %v2576
        %v3025 = vunpack.c.l.b16 %v2577
        %v3026 = vunpack.c.l.b16 %v2578
        %v3027 = vunpack.c.l.b16 %v2579
        %v3028 = vunpack.c.l.b16 %v2580
        %v3029 = vunpack.c.l.b16 %v2581
        %v3030 = vunpack.c.l.b16 %v2582
        %v3031 = vunpack.c.l.b16 %v2583
        %v3032 = vunpack.c.l.b16 %v2584
        %v3033 = vunpack.c.l.b16 %v2585
        %v3034 = vunpack.c.l.b16 %v2586
        %v3035 = vpack.c.b16 %v3004, %v3003
        %v3036 = vpack.c.b16 %v3006, %v3005
        %v3037 = vpack.c.b16 %v3008, %v3007
        %v3038 = vpack.c.b16 %v3010, %v3009
        %v3039 = vpack.c.b16 %v3012, %v3011
        %v3040 = vpack.c.b16 %v3014, %v3013
        %v3041 = vpack.c.b16 %v3016, %v3015
        %v3042 = vpack.c.b16 %v3018, %v3017
        %v3043 = vpack.c.b16 %v3020, %v3019
        %v3044 = vpack.c.b16 %v3022, %v3021
        %v3045 = vpack.c.b16 %v3024, %v3023
        %v3046 = vpack.c.b16 %v3026, %v3025
        %v3047 = vpack.c.b16 %v3028, %v3027
        %v3048 = vpack.c.b16 %v3030, %v3029
        %v3049 = vpack.c.b16 %v3032, %v3031
        %v3050 = vpack.c.b16 %v3034, %v3033
        %3067 = vmatpush.bf16.msra.mxu0 %v3042
        %3068 = vmatpush.bf16.msra.mxu0 %v3041
        %3069 = vmatpush.bf16.msra.mxu0 %v3040
        %3070 = vmatpush.bf16.msra.mxu0 %v3039
        %3071 = vmatpush.bf16.msra.mxu0 %v3038
        %3072 = vmatpush.bf16.msra.mxu0 %v3037
        %3073 = vmatpush.bf16.msra.mxu0 %v3036
        %3074 = vmatpush.bf16.msra.mxu0 %v3035
        %3075 = vmatmul.bf16.gmra.mxu0 %v2595
        %v3076 = vpop.f32.mrf.mxu0
        %v3077 = vadd.f32 0.0, %v3076
        %v3078 = vpop.f32.mrf.mxu0
        %v3079 = vadd.f32 0.0, %v3078
        %3080 = vdwg.mxu0
        %3081 = vmatpush.bf16.msra.mxu0 %v3050
        %3082 = vmatpush.bf16.msra.mxu0 %v3049
        %3083 = vmatpush.bf16.msra.mxu0 %v3048
        %3084 = vmatpush.bf16.msra.mxu0 %v3047
        %3085 = vmatpush.bf16.msra.mxu0 %v3046
        %3086 = vmatpush.bf16.msra.mxu0 %v3045
        %3087 = vmatpush.bf16.msra.mxu0 %v3044
        %3088 = vmatpush.bf16.msra.mxu0 %v3043
        %3089 = vmatmul.bf16.gmra.mxu0 %v2596
        %v3090 = vpop.f32.mrf.mxu0
        %v3091 = vadd.f32 %v3077, %v3090
        %v3092 = vpop.f32.mrf.mxu0
        %v3093 = vadd.f32 %v3079, %v3092
        %3094 = vdwg.mxu0
        %v3095 = vpack.c.bf16 %v2334, %v2334
        %v3096 = vpack.c.bf16 %v2456, %v2456
        %v3097 = vpack.c.bf16 %v2719, %v2719
        %v3098 = vpack.c.bf16 %v2721, %v2721
        %v3099 = vpack.c.bf16 %v2843, %v2843
        %v3100 = vpack.c.bf16 %v2845, %v2845
        %v3103 = vunpack.c.l.b16 %v3097
        %v3104 = vunpack.c.l.b16 %v3098
        %v3105 = vpack.c.b16 %v3104, %v3103
        %3107 = vmatpush.bf16.xpose.msra.mxu0 0
        %3108 = vmatpush.bf16.xpose.msra.mxu0 0
        %3109 = vmatpush.bf16.xpose.msra.mxu0 0
        %3110 = vmatpush.bf16.xpose.msra.mxu0 0
        %3111 = vmatpush.bf16.xpose.msra.mxu0 0
        %3112 = vmatpush.bf16.xpose.msra.mxu0 0
        %3113 = vmatpush.bf16.xpose.msra.mxu0 0
        %3114 = vmatpush.bf16.xpose.msra.mxu0 %v3105
        %3115 = vmatmul.bf16.gmra.mxu0 %v3095
        %v3116 = vpop.f32.mrf.mxu0
        %v3117 = vadd.f32 0.0, %v3116
        %v3118 = vpop.f32.mrf.mxu0
        %3119 = vdwg.mxu0
        %v3122 = vunpack.c.l.b16 %v3099
        %v3123 = vunpack.c.l.b16 %v3100
        %v3124 = vpack.c.b16 %v3123, %v3122
        %3126 = vmatpush.bf16.xpose.msra.mxu0 0
        %3127 = vmatpush.bf16.xpose.msra.mxu0 0
        %3128 = vmatpush.bf16.xpose.msra.mxu0 0
        %3129 = vmatpush.bf16.xpose.msra.mxu0 0
        %3130 = vmatpush.bf16.xpose.msra.mxu0 0
        %3131 = vmatpush.bf16.xpose.msra.mxu0 0
        %3132 = vmatpush.bf16.xpose.msra.mxu0 0
        %3133 = vmatpush.bf16.xpose.msra.mxu0 %v3124
        %3134 = vmatmul.bf16.gmra.mxu0 %v3096
        %v3135 = vpop.f32.mrf.mxu0
        %v3136 = vadd.f32 0.0, %v3135
        %v3137 = vpop.f32.mrf.mxu0
        %3138 = vdwg.mxu0
        %v3139 = vmul.f32 %v3117, 0.088388346
        %v3140 = vmul.f32 %v3136, 0.088388346
        %vm3141 = vcmask 130048
        %v3142 = vsel %vm3141, %v3139, -inf
        %3143 = vmax.xlane.f32.xlu0 %v3142
        %v3144 = vpop.xlane.xlu0 %3143
        %v3145 = vsel %vm3141, %v3140, -inf
        %3146 = vmax.xlane.f32.xlu0 %v3145
        %v3147 = vpop.xlane.xlu0 %3146
        %v3148 = vsub.f32 %v3139, %v3144
        %v3149 = vsub.f32 %v3140, %v3147
        %v3150 = vmul.f32 %v3148, 1.442695
        %v3151 = vpow.pop %v3150
        %v3152 = vmul.f32 %v3149, 1.442695
        %v3153 = vpow.pop %v3152
        %v3154 = vsel %vm3141, %v3151, 0.0
        %3155 = vadd.xlane.f32.xlu0 %v3154
        %v3156 = vpop.xlane.xlu0 %3155
        %v3157 = vsel %vm3141, %v3153, 0.0
        %3158 = vadd.xlane.f32.xlu0 %v3157
        %v3159 = vpop.xlane.xlu0 %3158
        %v3160 = vrcp.pop %v3156
        %v3161 = vrcp.pop %v3159
        %v3162 = vmul.f32 %v3151, %v3160
        %v3163 = vmul.f32 %v3153, %v3161
        %vm3164 = vcmp.ne.f32.partialorder %v3162, %v3162
        %vm3165 = vcmp.ne.f32.partialorder %v3163, %v3163
        %v3166 = vsel %vm3164, 0.0, %v3162
        %v3167 = vsel %vm3165, 0.0, %v3163
        %vm3168 = vcmp.eq.f32.partialorder %v3166, inf
        %vm3169 = vcmp.eq.f32.partialorder %v3167, inf
        %v3170 = vsel %vm3168, 3.4028235e+38, %v3166
        %v3171 = vsel %vm3169, 3.4028235e+38, %v3167
        %vm3172 = vcmp.eq.f32.partialorder %v3170, -inf
        %vm3173 = vcmp.eq.f32.partialorder %v3171, -inf
        %v3174 = vsel %vm3172, -3.4028235e+38, %v3170
        %v3175 = vsel %vm3173, -3.4028235e+38, %v3171
        %v3176 = vpack.c.bf16 %v3174, %v3174
        %v3177 = vpack.c.bf16 %v3175, %v3175
        %v3178 = vpack.c.bf16 %v2967, %v2967
        %v3179 = vpack.c.bf16 %v2969, %v2969
        %v3180 = vpack.c.bf16 %v3091, %v3091
        %v3181 = vpack.c.bf16 %v3093, %v3093
        %v3184 = vunpack.c.l.b16 %v3178
        %v3185 = vunpack.c.l.b16 %v3179
        %v3186 = vpack.c.b16 %v3185, %v3184
        %v3189 = vsel %vm3141, %v3176, 0
        %3191 = vmatpush.bf16.msra.mxu0 0
        %3192 = vmatpush.bf16.msra.mxu0 0
        %3193 = vmatpush.bf16.msra.mxu0 0
        %3194 = vmatpush.bf16.msra.mxu0 0
        %3195 = vmatpush.bf16.msra.mxu0 0
        %3196 = vmatpush.bf16.msra.mxu0 0
        %3197 = vmatpush.bf16.msra.mxu0 0
        %3198 = vmatpush.bf16.msra.mxu0 %v3186
        %3199 = vmatmul.bf16.gmra.mxu0 %v3189
        %v3200 = vpop.f32.mrf.mxu0
        %v3201 = vadd.f32 0.0, %v3200
        %v3202 = vpop.f32.mrf.mxu0
        %3203 = vdwg.mxu0
        %v3206 = vunpack.c.l.b16 %v3180
        %v3207 = vunpack.c.l.b16 %v3181
        %v3208 = vpack.c.b16 %v3207, %v3206
        %v3211 = vsel %vm3141, %v3177, 0
        %3213 = vmatpush.bf16.msra.mxu0 0
        %3214 = vmatpush.bf16.msra.mxu0 0
        %3215 = vmatpush.bf16.msra.mxu0 0
        %3216 = vmatpush.bf16.msra.mxu0 0
        %3217 = vmatpush.bf16.msra.mxu0 0
        %3218 = vmatpush.bf16.msra.mxu0 0
        %3219 = vmatpush.bf16.msra.mxu0 0
        %3220 = vmatpush.bf16.msra.mxu0 %v3208
        %3221 = vmatmul.bf16.gmra.mxu0 %v3211
        %v3222 = vpop.f32.mrf.mxu0
        %v3223 = vadd.f32 0.0, %v3222
        %v3224 = vpop.f32.mrf.mxu0
        %3225 = vdwg.mxu0
        %v3226 = vld [vmem:[#allocation14] sm:$0xff]
        %v3227 = vld [vmem:[#allocation14 + $0x8] sm:$0xff]
        %v3228 = vld [vmem:[#allocation14 + $0x10] sm:$0xff]
        %v3229 = vld [vmem:[#allocation14 + $0x18] sm:$0xff]
        %v3230 = vld [vmem:[#allocation14 + $0x20] sm:$0xff]
        %v3231 = vld [vmem:[#allocation14 + $0x28] sm:$0xff]
        %v3232 = vld [vmem:[#allocation14 + $0x30] sm:$0xff]
        %v3233 = vld [vmem:[#allocation14 + $0x38] sm:$0xff]
        %v3234 = vld [vmem:[#allocation14 + $0x40] sm:$0xff]
        %v3235 = vld [vmem:[#allocation14 + $0x48] sm:$0xff]
        %v3236 = vld [vmem:[#allocation14 + $0x50] sm:$0xff]
        %v3237 = vld [vmem:[#allocation14 + $0x58] sm:$0xff]
        %v3238 = vld [vmem:[#allocation14 + $0x60] sm:$0xff]
        %v3239 = vld [vmem:[#allocation14 + $0x68] sm:$0xff]
        %v3240 = vld [vmem:[#allocation14 + $0x70] sm:$0xff]
        %v3241 = vld [vmem:[#allocation14 + $0x78] sm:$0xff]
        %v3242 = vld [vmem:[#allocation14 + $0x80] sm:$0xff]
        %v3243 = vld [vmem:[#allocation14 + $0x88] sm:$0xff]
        %v3244 = vld [vmem:[#allocation14 + $0x90] sm:$0xff]
        %v3245 = vld [vmem:[#allocation14 + $0x98] sm:$0xff]
        %v3246 = vld [vmem:[#allocation14 + $0xa0] sm:$0xff]
        %v3247 = vld [vmem:[#allocation14 + $0xa8] sm:$0xff]
        %v3248 = vld [vmem:[#allocation14 + $0xb0] sm:$0xff]
        %v3249 = vld [vmem:[#allocation14 + $0xb8] sm:$0xff]
        %v3250 = vld [vmem:[#allocation14 + $0xc0] sm:$0xff]
        %v3251 = vld [vmem:[#allocation14 + $0xc8] sm:$0xff]
        %v3252 = vld [vmem:[#allocation14 + $0xd0] sm:$0xff]
        %v3253 = vld [vmem:[#allocation14 + $0xd8] sm:$0xff]
        %v3254 = vld [vmem:[#allocation14 + $0xe0] sm:$0xff]
        %v3255 = vld [vmem:[#allocation14 + $0xe8] sm:$0xff]
        %v3256 = vld [vmem:[#allocation14 + $0xf0] sm:$0xff]
        %v3257 = vld [vmem:[#allocation14 + $0xf8] sm:$0xff]
        %v3258 = vpack.c.bf16 %v3201, %v3201
        %v3259 = vpack.c.bf16 %v3223, %v3223
        %v3276 = vunpack.c.l.b16 %v3226
        %v3277 = vunpack.c.h.b16 %v3226
        %v3278 = vunpack.c.l.b16 %v3227
        %v3279 = vunpack.c.h.b16 %v3227
        %v3280 = vunpack.c.l.b16 %v3228
        %v3281 = vunpack.c.h.b16 %v3228
        %v3282 = vunpack.c.l.b16 %v3229
        %v3283 = vunpack.c.h.b16 %v3229
        %v3284 = vunpack.c.l.b16 %v3230
        %v3285 = vunpack.c.h.b16 %v3230
        %v3286 = vunpack.c.l.b16 %v3231
        %v3287 = vunpack.c.h.b16 %v3231
        %v3288 = vunpack.c.l.b16 %v3232
        %v3289 = vunpack.c.h.b16 %v3232
        %v3290 = vunpack.c.l.b16 %v3233
        %v3291 = vunpack.c.h.b16 %v3233
        %v3292 = vunpack.c.l.b16 %v3234
        %v3293 = vunpack.c.h.b16 %v3234
        %v3294 = vunpack.c.l.b16 %v3235
        %v3295 = vunpack.c.h.b16 %v3235
        %v3296 = vunpack.c.l.b16 %v3236
        %v3297 = vunpack.c.h.b16 %v3236
        %v3298 = vunpack.c.l.b16 %v3237
        %v3299 = vunpack.c.h.b16 %v3237
        %v3300 = vunpack.c.l.b16 %v3238
        %v3301 = vunpack.c.h.b16 %v3238
        %v3302 = vunpack.c.l.b16 %v3239
        %v3303 = vunpack.c.h.b16 %v3239
        %v3304 = vunpack.c.l.b16 %v3240
        %v3305 = vunpack.c.h.b16 %v3240
        %v3306 = vunpack.c.l.b16 %v3241
        %v3307 = vunpack.c.h.b16 %v3241
        %v3308 = vpack.c.b16 %v3278, %v3276
        %v3309 = vpack.c.b16 %v3279, %v3277
        %v3310 = vpack.c.b16 %v3282, %v3280
        %v3311 = vpack.c.b16 %v3283, %v3281
        %v3312 = vpack.c.b16 %v3286, %v3284
        %v3313 = vpack.c.b16 %v3287, %v3285
        %v3314 = vpack.c.b16 %v3290, %v3288
        %v3315 = vpack.c.b16 %v3291, %v3289
        %v3316 = vpack.c.b16 %v3294, %v3292
        %v3317 = vpack.c.b16 %v3295, %v3293
        %v3318 = vpack.c.b16 %v3298, %v3296
        %v3319 = vpack.c.b16 %v3299, %v3297
        %v3320 = vpack.c.b16 %v3302, %v3300
        %v3321 = vpack.c.b16 %v3303, %v3301
        %v3322 = vpack.c.b16 %v3306, %v3304
        %v3323 = vpack.c.b16 %v3307, %v3305
        %3340 = vmatpush.bf16.msra.mxu0 %v3322
        %3341 = vmatpush.bf16.msra.mxu0 %v3320
        %3342 = vmatpush.bf16.msra.mxu0 %v3318
        %3343 = vmatpush.bf16.msra.mxu0 %v3316
        %3344 = vmatpush.bf16.msra.mxu0 %v3314
        %3345 = vmatpush.bf16.msra.mxu0 %v3312
        %3346 = vmatpush.bf16.msra.mxu0 %v3310
        %3347 = vmatpush.bf16.msra.mxu0 %v3308
        %3348 = vmatmul.bf16.gmra.mxu0 %v3258
        %v3349 = vpop.f32.mrf.mxu0
        %v3350 = vadd.f32 0.0, %v3349
        %v3351 = vpop.f32.mrf.mxu0
        %3352 = vdwg.mxu0
        %3353 = vmatpush.bf16.msra.mxu0 %v3323
        %3354 = vmatpush.bf16.msra.mxu0 %v3321
        %3355 = vmatpush.bf16.msra.mxu0 %v3319
        %3356 = vmatpush.bf16.msra.mxu0 %v3317
        %3357 = vmatpush.bf16.msra.mxu0 %v3315
        %3358 = vmatpush.bf16.msra.mxu0 %v3313
        %3359 = vmatpush.bf16.msra.mxu0 %v3311
        %3360 = vmatpush.bf16.msra.mxu0 %v3309
        %3361 = vmatmul.bf16.gmra.mxu0 %v3258
        %v3362 = vpop.f32.mrf.mxu0
        %v3363 = vadd.f32 0.0, %v3362
        %v3364 = vpop.f32.mrf.mxu0
        %3365 = vdwg.mxu0
        %v3382 = vunpack.c.l.b16 %v3242
        %v3383 = vunpack.c.h.b16 %v3242
        %v3384 = vunpack.c.l.b16 %v3243
        %v3385 = vunpack.c.h.b16 %v3243
        %v3386 = vunpack.c.l.b16 %v3244
        %v3387 = vunpack.c.h.b16 %v3244
        %v3388 = vunpack.c.l.b16 %v3245
        %v3389 = vunpack.c.h.b16 %v3245
        %v3390 = vunpack.c.l.b16 %v3246
        %v3391 = vunpack.c.h.b16 %v3246
        %v3392 = vunpack.c.l.b16 %v3247
        %v3393 = vunpack.c.h.b16 %v3247
        %v3394 = vunpack.c.l.b16 %v3248
        %v3395 = vunpack.c.h.b16 %v3248
        %v3396 = vunpack.c.l.b16 %v3249
        %v3397 = vunpack.c.h.b16 %v3249
        %v3398 = vunpack.c.l.b16 %v3250
        %v3399 = vunpack.c.h.b16 %v3250
        %v3400 = vunpack.c.l.b16 %v3251
        %v3401 = vunpack.c.h.b16 %v3251
        %v3402 = vunpack.c.l.b16 %v3252
        %v3403 = vunpack.c.h.b16 %v3252
        %v3404 = vunpack.c.l.b16 %v3253
        %v3405 = vunpack.c.h.b16 %v3253
        %v3406 = vunpack.c.l.b16 %v3254
        %v3407 = vunpack.c.h.b16 %v3254
        %v3408 = vunpack.c.l.b16 %v3255
        %v3409 = vunpack.c.h.b16 %v3255
        %v3410 = vunpack.c.l.b16 %v3256
        %v3411 = vunpack.c.h.b16 %v3256
        %v3412 = vunpack.c.l.b16 %v3257
        %v3413 = vunpack.c.h.b16 %v3257
        %v3414 = vpack.c.b16 %v3384, %v3382
        %v3415 = vpack.c.b16 %v3385, %v3383
        %v3416 = vpack.c.b16 %v3388, %v3386
        %v3417 = vpack.c.b16 %v3389, %v3387
        %v3418 = vpack.c.b16 %v3392, %v3390
        %v3419 = vpack.c.b16 %v3393, %v3391
        %v3420 = vpack.c.b16 %v3396, %v3394
        %v3421 = vpack.c.b16 %v3397, %v3395
        %v3422 = vpack.c.b16 %v3400, %v3398
        %v3423 = vpack.c.b16 %v3401, %v3399
        %v3424 = vpack.c.b16 %v3404, %v3402
        %v3425 = vpack.c.b16 %v3405, %v3403
        %v3426 = vpack.c.b16 %v3408, %v3406
        %v3427 = vpack.c.b16 %v3409, %v3407
        %v3428 = vpack.c.b16 %v3412, %v3410
        %v3429 = vpack.c.b16 %v3413, %v3411
        %3446 = vmatpush.bf16.msra.mxu0 %v3428
        %3447 = vmatpush.bf16.msra.mxu0 %v3426
        %3448 = vmatpush.bf16.msra.mxu0 %v3424
        %3449 = vmatpush.bf16.msra.mxu0 %v3422
        %3450 = vmatpush.bf16.msra.mxu0 %v3420
        %3451 = vmatpush.bf16.msra.mxu0 %v3418
        %3452 = vmatpush.bf16.msra.mxu0 %v3416
        %3453 = vmatpush.bf16.msra.mxu0 %v3414
        %3454 = vmatmul.bf16.gmra.mxu0 %v3259
        %v3455 = vpop.f32.mrf.mxu0
        %v3456 = vadd.f32 0.0, %v3455
        %v3457 = vpop.f32.mrf.mxu0
        %3458 = vdwg.mxu0
        %3459 = vmatpush.bf16.msra.mxu0 %v3429
        %3460 = vmatpush.bf16.msra.mxu0 %v3427
        %3461 = vmatpush.bf16.msra.mxu0 %v3425
        %3462 = vmatpush.bf16.msra.mxu0 %v3423
        %3463 = vmatpush.bf16.msra.mxu0 %v3421
        %3464 = vmatpush.bf16.msra.mxu0 %v3419
        %3465 = vmatpush.bf16.msra.mxu0 %v3417
        %3466 = vmatpush.bf16.msra.mxu0 %v3415
        %3467 = vmatmul.bf16.gmra.mxu0 %v3259
        %v3468 = vpop.f32.mrf.mxu0
        %v3469 = vadd.f32 0.0, %v3468
        %v3470 = vpop.f32.mrf.mxu0
        %3471 = vdwg.mxu0
        %v3472 = vadd.f32 %v3350, %v3456
        %v3473 = vadd.f32 %v3363, %v3469
        %v3474 = vadd.f32 %v2141, %v3472
        %v3475 = vadd.f32 %v2142, %v3473
        %v3476 = vld [vmem:[#allocation16] sm:$0x3]
        %v3477 = vld [vmem:[%s11] sm:$0x3]
        %v3478 = vadd.f32 %v3474, %v3475
        %3479 = vadd.xlane.f32.xlu0 %v3478
        %v3480 = vpop.xlane.xlu0 %3479
        %v3481 = vmul.f32 %v3480, %v2106
        %v3482 = vsub.f32 %v3474, %v3481
        %v3483 = vsub.f32 %v3475, %v3481
        %v3484 = vmul.f32 %v3482, %v3482
        %v3485 = vmul.f32 %v3483, %v3483
        %v3486 = vadd.f32 %v3484, %v3485
        %3487 = vadd.xlane.f32.xlu0 %v3486
        %v3488 = vpop.xlane.xlu0 %3487
        %v3489 = vmul.f32 %v3488, %v2106
        %v3490 = vadd.f32 %v3489, 1e-05
        %v3491 = vrsqrt.pop %v3490
        %v3492 = vmul.f32 %v3491, %v3490
        %v3493 = vmul.f32 %v3492, %v3491
        %v3494 = vmul.f32 0.5, %v3493
        %v3495 = vsub.f32 1.5, %v3494
        %v3496 = vmul.f32 %v3491, %v3495
        %vm3497 = vweird.f32 %v3490
        %vm3498 = vweird.f32 %v3491
        %vm3499 = vmor %vm3497, %vm3498
        %v3500 = vsel %vm3499, %v3491, %v3496
        %v3501 = vmul.f32 %v3482, %v3500
        %v3502 = vmul.f32 %v3483, %v3500
        %v3504 = vperm.slane %v3476, 0
        %v3505 = vperm.slane %v3476, 1
        %v3508 = vmul.f32 %v3501, %v3504
        %v3509 = vmul.f32 %v3502, %v3505
        %v3511 = vperm.slane %v3477, 0
        %v3512 = vperm.slane %v3477, 1
        %v3515 = vadd.f32 %v3508, %v3511
        %v3516 = vadd.f32 %v3509, %v3512
        %v3517 = vpack.c.bf16 %v3515, %v3515
        %v3518 = vpack.c.bf16 %v3516, %v3516
        %v3519 = vld [vmem:[#allocation19] sm:$0xff]
        %v3520 = vld [vmem:[#allocation19 + $0x8] sm:$0xff]
        %v3521 = vld [vmem:[#allocation19 + $0x10] sm:$0xff]
        %v3522 = vld [vmem:[#allocation19 + $0x18] sm:$0xff]
        %v3523 = vld [vmem:[#allocation19 + $0x20] sm:$0xff]
        %v3524 = vld [vmem:[#allocation19 + $0x28] sm:$0xff]
        %v3525 = vld [vmem:[#allocation19 + $0x30] sm:$0xff]
        %v3526 = vld [vmem:[#allocation19 + $0x38] sm:$0xff]
        %v3527 = vld [vmem:[#allocation19 + $0x40] sm:$0xff]
        %v3528 = vld [vmem:[#allocation19 + $0x48] sm:$0xff]
        %v3529 = vld [vmem:[#allocation19 + $0x50] sm:$0xff]
        %v3530 = vld [vmem:[#allocation19 + $0x58] sm:$0xff]
        %v3531 = vld [vmem:[#allocation19 + $0x60] sm:$0xff]
        %v3532 = vld [vmem:[#allocation19 + $0x68] sm:$0xff]
        %v3533 = vld [vmem:[#allocation19 + $0x70] sm:$0xff]
        %v3534 = vld [vmem:[#allocation19 + $0x78] sm:$0xff]
        %v3535 = vld [vmem:[#allocation19 + $0x80] sm:$0xff]
        %v3536 = vld [vmem:[#allocation19 + $0x88] sm:$0xff]
        %v3537 = vld [vmem:[#allocation19 + $0x90] sm:$0xff]
        %v3538 = vld [vmem:[#allocation19 + $0x98] sm:$0xff]
        %v3539 = vld [vmem:[#allocation19 + $0xa0] sm:$0xff]
        %v3540 = vld [vmem:[#allocation19 + $0xa8] sm:$0xff]
        %v3541 = vld [vmem:[#allocation19 + $0xb0] sm:$0xff]
        %v3542 = vld [vmem:[#allocation19 + $0xb8] sm:$0xff]
        %v3543 = vld [vmem:[#allocation19 + $0xc0] sm:$0xff]
        %v3544 = vld [vmem:[#allocation19 + $0xc8] sm:$0xff]
        %v3545 = vld [vmem:[#allocation19 + $0xd0] sm:$0xff]
        %v3546 = vld [vmem:[#allocation19 + $0xd8] sm:$0xff]
        %v3547 = vld [vmem:[#allocation19 + $0xe0] sm:$0xff]
        %v3548 = vld [vmem:[#allocation19 + $0xe8] sm:$0xff]
        %v3549 = vld [vmem:[#allocation19 + $0xf0] sm:$0xff]
        %v3550 = vld [vmem:[#allocation19 + $0xf8] sm:$0xff]
        %v3551 = vld [vmem:[#allocation19 + $0x100] sm:$0xff]
        %v3552 = vld [vmem:[#allocation19 + $0x108] sm:$0xff]
        %v3553 = vld [vmem:[#allocation19 + $0x110] sm:$0xff]
        %v3554 = vld [vmem:[#allocation19 + $0x118] sm:$0xff]
        %v3555 = vld [vmem:[#allocation19 + $0x120] sm:$0xff]
        %v3556 = vld [vmem:[#allocation19 + $0x128] sm:$0xff]
        %v3557 = vld [vmem:[#allocation19 + $0x130] sm:$0xff]
        %v3558 = vld [vmem:[#allocation19 + $0x138] sm:$0xff]
        %v3559 = vld [vmem:[#allocation19 + $0x140] sm:$0xff]
        %v3560 = vld [vmem:[#allocation19 + $0x148] sm:$0xff]
        %v3561 = vld [vmem:[#allocation19 + $0x150] sm:$0xff]
        %v3562 = vld [vmem:[#allocation19 + $0x158] sm:$0xff]
        %v3563 = vld [vmem:[#allocation19 + $0x160] sm:$0xff]
        %v3564 = vld [vmem:[#allocation19 + $0x168] sm:$0xff]
        %v3565 = vld [vmem:[#allocation19 + $0x170] sm:$0xff]
        %v3566 = vld [vmem:[#allocation19 + $0x178] sm:$0xff]
        %v3567 = vld [vmem:[#allocation19 + $0x180] sm:$0xff]
        %v3568 = vld [vmem:[#allocation19 + $0x188] sm:$0xff]
        %v3569 = vld [vmem:[#allocation19 + $0x190] sm:$0xff]
        %v3570 = vld [vmem:[#allocation19 + $0x198] sm:$0xff]
        %v3571 = vld [vmem:[#allocation19 + $0x1a0] sm:$0xff]
        %v3572 = vld [vmem:[#allocation19 + $0x1a8] sm:$0xff]
        %v3573 = vld [vmem:[#allocation19 + $0x1b0] sm:$0xff]
        %v3574 = vld [vmem:[#allocation19 + $0x1b8] sm:$0xff]
        %v3575 = vld [vmem:[#allocation19 + $0x1c0] sm:$0xff]
        %v3576 = vld [vmem:[#allocation19 + $0x1c8] sm:$0xff]
        %v3577 = vld [vmem:[#allocation19 + $0x1d0] sm:$0xff]
        %v3578 = vld [vmem:[#allocation19 + $0x1d8] sm:$0xff]
        %v3579 = vld [vmem:[#allocation19 + $0x1e0] sm:$0xff]
        %v3580 = vld [vmem:[#allocation19 + $0x1e8] sm:$0xff]
        %v3581 = vld [vmem:[#allocation19 + $0x1f0] sm:$0xff]
        %v3582 = vld [vmem:[#allocation19 + $0x1f8] sm:$0xff]
        %v3583 = vld [vmem:[%s15] sm:$0xf]
        %v3585 = vperm.slane %v3583, 0
        %v3586 = vperm.slane %v3583, 1
        %v3587 = vperm.slane %v3583, 2
        %v3588 = vperm.slane %v3583, 3
        %v3657 = vunpack.c.l.b16 %v3519
        %v3658 = vunpack.c.h.b16 %v3519
        %v3659 = vunpack.c.l.b16 %v3520
        %v3660 = vunpack.c.h.b16 %v3520
        %v3661 = vunpack.c.l.b16 %v3521
        %v3662 = vunpack.c.h.b16 %v3521
        %v3663 = vunpack.c.l.b16 %v3522
        %v3664 = vunpack.c.h.b16 %v3522
        %v3665 = vunpack.c.l.b16 %v3523
        %v3666 = vunpack.c.h.b16 %v3523
        %v3667 = vunpack.c.l.b16 %v3524
        %v3668 = vunpack.c.h.b16 %v3524
        %v3669 = vunpack.c.l.b16 %v3525
        %v3670 = vunpack.c.h.b16 %v3525
        %v3671 = vunpack.c.l.b16 %v3526
        %v3672 = vunpack.c.h.b16 %v3526
        %v3673 = vunpack.c.l.b16 %v3527
        %v3674 = vunpack.c.h.b16 %v3527
        %v3675 = vunpack.c.l.b16 %v3528
        %v3676 = vunpack.c.h.b16 %v3528
        %v3677 = vunpack.c.l.b16 %v3529
        %v3678 = vunpack.c.h.b16 %v3529
        %v3679 = vunpack.c.l.b16 %v3530
        %v3680 = vunpack.c.h.b16 %v3530
        %v3681 = vunpack.c.l.b16 %v3531
        %v3682 = vunpack.c.h.b16 %v3531
        %v3683 = vunpack.c.l.b16 %v3532
        %v3684 = vunpack.c.h.b16 %v3532
        %v3685 = vunpack.c.l.b16 %v3533
        %v3686 = vunpack.c.h.b16 %v3533
        %v3687 = vunpack.c.l.b16 %v3534
        %v3688 = vunpack.c.h.b16 %v3534
        %v3689 = vunpack.c.l.b16 %v3535
        %v3690 = vunpack.c.h.b16 %v3535
        %v3691 = vunpack.c.l.b16 %v3536
        %v3692 = vunpack.c.h.b16 %v3536
        %v3693 = vunpack.c.l.b16 %v3537
        %v3694 = vunpack.c.h.b16 %v3537
        %v3695 = vunpack.c.l.b16 %v3538
        %v3696 = vunpack.c.h.b16 %v3538
        %v3697 = vunpack.c.l.b16 %v3539
        %v3698 = vunpack.c.h.b16 %v3539
        %v3699 = vunpack.c.l.b16 %v3540
        %v3700 = vunpack.c.h.b16 %v3540
        %v3701 = vunpack.c.l.b16 %v3541
        %v3702 = vunpack.c.h.b16 %v3541
        %v3703 = vunpack.c.l.b16 %v3542
        %v3704 = vunpack.c.h.b16 %v3542
        %v3705 = vunpack.c.l.b16 %v3543
        %v3706 = vunpack.c.h.b16 %v3543
        %v3707 = vunpack.c.l.b16 %v3544
        %v3708 = vunpack.c.h.b16 %v3544
        %v3709 = vunpack.c.l.b16 %v3545
        %v3710 = vunpack.c.h.b16 %v3545
        %v3711 = vunpack.c.l.b16 %v3546
        %v3712 = vunpack.c.h.b16 %v3546
        %v3713 = vunpack.c.l.b16 %v3547
        %v3714 = vunpack.c.h.b16 %v3547
        %v3715 = vunpack.c.l.b16 %v3548
        %v3716 = vunpack.c.h.b16 %v3548
        %v3717 = vunpack.c.l.b16 %v3549
        %v3718 = vunpack.c.h.b16 %v3549
        %v3719 = vunpack.c.l.b16 %v3550
        %v3720 = vunpack.c.h.b16 %v3550
        %v3721 = vunpack.c.l.b16 %v3551
        %v3722 = vunpack.c.h.b16 %v3551
        %v3723 = vunpack.c.l.b16 %v3552
        %v3724 = vunpack.c.h.b16 %v3552
        %v3725 = vunpack.c.l.b16 %v3553
        %v3726 = vunpack.c.h.b16 %v3553
        %v3727 = vunpack.c.l.b16 %v3554
        %v3728 = vunpack.c.h.b16 %v3554
        %v3729 = vunpack.c.l.b16 %v3555
        %v3730 = vunpack.c.h.b16 %v3555
        %v3731 = vunpack.c.l.b16 %v3556
        %v3732 = vunpack.c.h.b16 %v3556
        %v3733 = vunpack.c.l.b16 %v3557
        %v3734 = vunpack.c.h.b16 %v3557
        %v3735 = vunpack.c.l.b16 %v3558
        %v3736 = vunpack.c.h.b16 %v3558
        %v3737 = vunpack.c.l.b16 %v3559
        %v3738 = vunpack.c.h.b16 %v3559
        %v3739 = vunpack.c.l.b16 %v3560
        %v3740 = vunpack.c.h.b16 %v3560
        %v3741 = vunpack.c.l.b16 %v3561
        %v3742 = vunpack.c.h.b16 %v3561
        %v3743 = vunpack.c.l.b16 %v3562
        %v3744 = vunpack.c.h.b16 %v3562
        %v3745 = vunpack.c.l.b16 %v3563
        %v3746 = vunpack.c.h.b16 %v3563
        %v3747 = vunpack.c.l.b16 %v3564
        %v3748 = vunpack.c.h.b16 %v3564
        %v3749 = vunpack.c.l.b16 %v3565
        %v3750 = vunpack.c.h.b16 %v3565
        %v3751 = vunpack.c.l.b16 %v3566
        %v3752 = vunpack.c.h.b16 %v3566
        %v3753 = vunpack.c.l.b16 %v3567
        %v3754 = vunpack.c.h.b16 %v3567
        %v3755 = vunpack.c.l.b16 %v3568
        %v3756 = vunpack.c.h.b16 %v3568
        %v3757 = vunpack.c.l.b16 %v3569
        %v3758 = vunpack.c.h.b16 %v3569
        %v3759 = vunpack.c.l.b16 %v3570
        %v3760 = vunpack.c.h.b16 %v3570
        %v3761 = vunpack.c.l.b16 %v3571
        %v3762 = vunpack.c.h.b16 %v3571
        %v3763 = vunpack.c.l.b16 %v3572
        %v3764 = vunpack.c.h.b16 %v3572
        %v3765 = vunpack.c.l.b16 %v3573
        %v3766 = vunpack.c.h.b16 %v3573
        %v3767 = vunpack.c.l.b16 %v3574
        %v3768 = vunpack.c.h.b16 %v3574
        %v3769 = vunpack.c.l.b16 %v3575
        %v3770 = vunpack.c.h.b16 %v3575
        %v3771 = vunpack.c.l.b16 %v3576
        %v3772 = vunpack.c.h.b16 %v3576
        %v3773 = vunpack.c.l.b16 %v3577
        %v3774 = vunpack.c.h.b16 %v3577
        %v3775 = vunpack.c.l.b16 %v3578
        %v3776 = vunpack.c.h.b16 %v3578
        %v3777 = vunpack.c.l.b16 %v3579
        %v3778 = vunpack.c.h.b16 %v3579
        %v3779 = vunpack.c.l.b16 %v3580
        %v3780 = vunpack.c.h.b16 %v3580
        %v3781 = vunpack.c.l.b16 %v3581
        %v3782 = vunpack.c.h.b16 %v3581
        %v3783 = vunpack.c.l.b16 %v3582
        %v3784 = vunpack.c.h.b16 %v3582
        %v3785 = vpack.c.b16 %v3661, %v3657
        %v3786 = vpack.c.b16 %v3662, %v3658
        %v3787 = vpack.c.b16 %v3663, %v3659
        %v3788 = vpack.c.b16 %v3664, %v3660
        %v3789 = vpack.c.b16 %v3669, %v3665
        %v3790 = vpack.c.b16 %v3670, %v3666
        %v3791 = vpack.c.b16 %v3671, %v3667
        %v3792 = vpack.c.b16 %v3672, %v3668
        %v3793 = vpack.c.b16 %v3677, %v3673
        %v3794 = vpack.c.b16 %v3678, %v3674
        %v3795 = vpack.c.b16 %v3679, %v3675
        %v3796 = vpack.c.b16 %v3680, %v3676
        %v3797 = vpack.c.b16 %v3685, %v3681
        %v3798 = vpack.c.b16 %v3686, %v3682
        %v3799 = vpack.c.b16 %v3687, %v3683
        %v3800 = vpack.c.b16 %v3688, %v3684
        %v3801 = vpack.c.b16 %v3693, %v3689
        %v3802 = vpack.c.b16 %v3694, %v3690
        %v3803 = vpack.c.b16 %v3695, %v3691
        %v3804 = vpack.c.b16 %v3696, %v3692
        %v3805 = vpack.c.b16 %v3701, %v3697
        %v3806 = vpack.c.b16 %v3702, %v3698
        %v3807 = vpack.c.b16 %v3703, %v3699
        %v3808 = vpack.c.b16 %v3704, %v3700
        %v3809 = vpack.c.b16 %v3709, %v3705
        %v3810 = vpack.c.b16 %v3710, %v3706
        %v3811 = vpack.c.b16 %v3711, %v3707
        %v3812 = vpack.c.b16 %v3712, %v3708
        %v3813 = vpack.c.b16 %v3717, %v3713
        %v3814 = vpack.c.b16 %v3718, %v3714
        %v3815 = vpack.c.b16 %v3719, %v3715
        %v3816 = vpack.c.b16 %v3720, %v3716
        %v3817 = vpack.c.b16 %v3725, %v3721
        %v3818 = vpack.c.b16 %v3726, %v3722
        %v3819 = vpack.c.b16 %v3727, %v3723
        %v3820 = vpack.c.b16 %v3728, %v3724
        %v3821 = vpack.c.b16 %v3733, %v3729
        %v3822 = vpack.c.b16 %v3734, %v3730
        %v3823 = vpack.c.b16 %v3735, %v3731
        %v3824 = vpack.c.b16 %v3736, %v3732
        %v3825 = vpack.c.b16 %v3741, %v3737
        %v3826 = vpack.c.b16 %v3742, %v3738
        %v3827 = vpack.c.b16 %v3743, %v3739
        %v3828 = vpack.c.b16 %v3744, %v3740
        %v3829 = vpack.c.b16 %v3749, %v3745
        %v3830 = vpack.c.b16 %v3750, %v3746
        %v3831 = vpack.c.b16 %v3751, %v3747
        %v3832 = vpack.c.b16 %v3752, %v3748
        %v3833 = vpack.c.b16 %v3757, %v3753
        %v3834 = vpack.c.b16 %v3758, %v3754
        %v3835 = vpack.c.b16 %v3759, %v3755
        %v3836 = vpack.c.b16 %v3760, %v3756
        %v3837 = vpack.c.b16 %v3765, %v3761
        %v3838 = vpack.c.b16 %v3766, %v3762
        %v3839 = vpack.c.b16 %v3767, %v3763
        %v3840 = vpack.c.b16 %v3768, %v3764
        %v3841 = vpack.c.b16 %v3773, %v3769
        %v3842 = vpack.c.b16 %v3774, %v3770
        %v3843 = vpack.c.b16 %v3775, %v3771
        %v3844 = vpack.c.b16 %v3776, %v3772
        %v3845 = vpack.c.b16 %v3781, %v3777
        %v3846 = vpack.c.b16 %v3782, %v3778
        %v3847 = vpack.c.b16 %v3783, %v3779
        %v3848 = vpack.c.b16 %v3784, %v3780
        %3913 = vmatpush.bf16.msra.mxu0 %v3813
        %3914 = vmatpush.bf16.msra.mxu0 %v3809
        %3915 = vmatpush.bf16.msra.mxu0 %v3805
        %3916 = vmatpush.bf16.msra.mxu0 %v3801
        %3917 = vmatpush.bf16.msra.mxu0 %v3797
        %3918 = vmatpush.bf16.msra.mxu0 %v3793
        %3919 = vmatpush.bf16.msra.mxu0 %v3789
        %3920 = vmatpush.bf16.msra.mxu0 %v3785
        %3921 = vmatmul.bf16.gmra.mxu0 %v3517
        %v3922 = vpop.f32.mrf.mxu0
        %v3923 = vadd.f32 %v3585, %v3922
        %v3924 = vpop.f32.mrf.mxu0
        %3925 = vdwg.mxu0
        %3926 = vmatpush.bf16.msra.mxu0 %v3845
        %3927 = vmatpush.bf16.msra.mxu0 %v3841
        %3928 = vmatpush.bf16.msra.mxu0 %v3837
        %3929 = vmatpush.bf16.msra.mxu0 %v3833
        %3930 = vmatpush.bf16.msra.mxu0 %v3829
        %3931 = vmatpush.bf16.msra.mxu0 %v3825
        %3932 = vmatpush.bf16.msra.mxu0 %v3821
        %3933 = vmatpush.bf16.msra.mxu0 %v3817
        %3934 = vmatmul.bf16.gmra.mxu0 %v3518
        %v3935 = vpop.f32.mrf.mxu0
        %v3936 = vadd.f32 %v3923, %v3935
        %v3937 = vpop.f32.mrf.mxu0
        %3938 = vdwg.mxu0
        %3939 = vmatpush.bf16.msra.mxu0 %v3814
        %3940 = vmatpush.bf16.msra.mxu0 %v3810
        %3941 = vmatpush.bf16.msra.mxu0 %v3806
        %3942 = vmatpush.bf16.msra.mxu0 %v3802
        %3943 = vmatpush.bf16.msra.mxu0 %v3798
        %3944 = vmatpush.bf16.msra.mxu0 %v3794
        %3945 = vmatpush.bf16.msra.mxu0 %v3790
        %3946 = vmatpush.bf16.msra.mxu0 %v3786
        %3947 = vmatmul.bf16.gmra.mxu0 %v3517
        %v3948 = vpop.f32.mrf.mxu0
        %v3949 = vadd.f32 %v3586, %v3948
        %v3950 = vpop.f32.mrf.mxu0
        %3951 = vdwg.mxu0
        %3952 = vmatpush.bf16.msra.mxu0 %v3846
        %3953 = vmatpush.bf16.msra.mxu0 %v3842
        %3954 = vmatpush.bf16.msra.mxu0 %v3838
        %3955 = vmatpush.bf16.msra.mxu0 %v3834
        %3956 = vmatpush.bf16.msra.mxu0 %v3830
        %3957 = vmatpush.bf16.msra.mxu0 %v3826
        %3958 = vmatpush.bf16.msra.mxu0 %v3822
        %3959 = vmatpush.bf16.msra.mxu0 %v3818
        %3960 = vmatmul.bf16.gmra.mxu0 %v3518
        %v3961 = vpop.f32.mrf.mxu0
        %v3962 = vadd.f32 %v3949, %v3961
        %v3963 = vpop.f32.mrf.mxu0
        %3964 = vdwg.mxu0
        %3965 = vmatpush.bf16.msra.mxu0 %v3815
        %3966 = vmatpush.bf16.msra.mxu0 %v3811
        %3967 = vmatpush.bf16.msra.mxu0 %v3807
        %3968 = vmatpush.bf16.msra.mxu0 %v3803
        %3969 = vmatpush.bf16.msra.mxu0 %v3799
        %3970 = vmatpush.bf16.msra.mxu0 %v3795
        %3971 = vmatpush.bf16.msra.mxu0 %v3791
        %3972 = vmatpush.bf16.msra.mxu0 %v3787
        %3973 = vmatmul.bf16.gmra.mxu0 %v3517
        %v3974 = vpop.f32.mrf.mxu0
        %v3975 = vadd.f32 %v3587, %v3974
        %v3976 = vpop.f32.mrf.mxu0
        %3977 = vdwg.mxu0
        %3978 = vmatpush.bf16.msra.mxu0 %v3847
        %3979 = vmatpush.bf16.msra.mxu0 %v3843
        %3980 = vmatpush.bf16.msra.mxu0 %v3839
        %3981 = vmatpush.bf16.msra.mxu0 %v3835
        %3982 = vmatpush.bf16.msra.mxu0 %v3831
        %3983 = vmatpush.bf16.msra.mxu0 %v3827
        %3984 = vmatpush.bf16.msra.mxu0 %v3823
        %3985 = vmatpush.bf16.msra.mxu0 %v3819
        %3986 = vmatmul.bf16.gmra.mxu0 %v3518
        %v3987 = vpop.f32.mrf.mxu0
        %v3988 = vadd.f32 %v3975, %v3987
        %v3989 = vpop.f32.mrf.mxu0
        %3990 = vdwg.mxu0
        %3991 = vmatpush.bf16.msra.mxu0 %v3816
        %3992 = vmatpush.bf16.msra.mxu0 %v3812
        %3993 = vmatpush.bf16.msra.mxu0 %v3808
        %3994 = vmatpush.bf16.msra.mxu0 %v3804
        %3995 = vmatpush.bf16.msra.mxu0 %v3800
        %3996 = vmatpush.bf16.msra.mxu0 %v3796
        %3997 = vmatpush.bf16.msra.mxu0 %v3792
        %3998 = vmatpush.bf16.msra.mxu0 %v3788
        %3999 = vmatmul.bf16.gmra.mxu0 %v3517
        %v4000 = vpop.f32.mrf.mxu0
        %v4001 = vadd.f32 %v3588, %v4000
        %v4002 = vpop.f32.mrf.mxu0
        %4003 = vdwg.mxu0
        %4004 = vmatpush.bf16.msra.mxu0 %v3848
        %4005 = vmatpush.bf16.msra.mxu0 %v3844
        %4006 = vmatpush.bf16.msra.mxu0 %v3840
        %4007 = vmatpush.bf16.msra.mxu0 %v3836
        %4008 = vmatpush.bf16.msra.mxu0 %v3832
        %4009 = vmatpush.bf16.msra.mxu0 %v3828
        %4010 = vmatpush.bf16.msra.mxu0 %v3824
        %4011 = vmatpush.bf16.msra.mxu0 %v3820
        %4012 = vmatmul.bf16.gmra.mxu0 %v3518
        %v4013 = vpop.f32.mrf.mxu0
        %v4014 = vadd.f32 %v4001, %v4013
        %v4015 = vpop.f32.mrf.mxu0
        %4016 = vdwg.mxu0
        %v4017 = vmax.f32 %v3936, 0.0
        %v4018 = vmax.f32 %v3962, 0.0
        %v4019 = vmax.f32 %v3988, 0.0
        %v4020 = vmax.f32 %v4014, 0.0
        %v4021 = vpack.c.bf16 %v4017, %v4017
        %v4022 = vpack.c.bf16 %v4018, %v4018
        %v4023 = vpack.c.bf16 %v4019, %v4019
        %v4024 = vpack.c.bf16 %v4020, %v4020
        %v4025 = vld [vmem:[#allocation20] sm:$0xff]
        %v4026 = vld [vmem:[#allocation20 + $0x8] sm:$0xff]
        %v4027 = vld [vmem:[#allocation20 + $0x10] sm:$0xff]
        %v4028 = vld [vmem:[#allocation20 + $0x18] sm:$0xff]
        %v4029 = vld [vmem:[#allocation20 + $0x20] sm:$0xff]
        %v4030 = vld [vmem:[#allocation20 + $0x28] sm:$0xff]
        %v4031 = vld [vmem:[#allocation20 + $0x30] sm:$0xff]
        %v4032 = vld [vmem:[#allocation20 + $0x38] sm:$0xff]
        %v4033 = vld [vmem:[#allocation20 + $0x40] sm:$0xff]
        %v4034 = vld [vmem:[#allocation20 + $0x48] sm:$0xff]
        %v4035 = vld [vmem:[#allocation20 + $0x50] sm:$0xff]
        %v4036 = vld [vmem:[#allocation20 + $0x58] sm:$0xff]
        %v4037 = vld [vmem:[#allocation20 + $0x60] sm:$0xff]
        %v4038 = vld [vmem:[#allocation20 + $0x68] sm:$0xff]
        %v4039 = vld [vmem:[#allocation20 + $0x70] sm:$0xff]
        %v4040 = vld [vmem:[#allocation20 + $0x78] sm:$0xff]
        %v4041 = vld [vmem:[#allocation20 + $0x80] sm:$0xff]
        %v4042 = vld [vmem:[#allocation20 + $0x88] sm:$0xff]
        %v4043 = vld [vmem:[#allocation20 + $0x90] sm:$0xff]
        %v4044 = vld [vmem:[#allocation20 + $0x98] sm:$0xff]
        %v4045 = vld [vmem:[#allocation20 + $0xa0] sm:$0xff]
        %v4046 = vld [vmem:[#allocation20 + $0xa8] sm:$0xff]
        %v4047 = vld [vmem:[#allocation20 + $0xb0] sm:$0xff]
        %v4048 = vld [vmem:[#allocation20 + $0xb8] sm:$0xff]
        %v4049 = vld [vmem:[#allocation20 + $0xc0] sm:$0xff]
        %v4050 = vld [vmem:[#allocation20 + $0xc8] sm:$0xff]
        %v4051 = vld [vmem:[#allocation20 + $0xd0] sm:$0xff]
        %v4052 = vld [vmem:[#allocation20 + $0xd8] sm:$0xff]
        %v4053 = vld [vmem:[#allocation20 + $0xe0] sm:$0xff]
        %v4054 = vld [vmem:[#allocation20 + $0xe8] sm:$0xff]
        %v4055 = vld [vmem:[#allocation20 + $0xf0] sm:$0xff]
        %v4056 = vld [vmem:[#allocation20 + $0xf8] sm:$0xff]
        %v4057 = vld [vmem:[#allocation20 + $0x100] sm:$0xff]
        %v4058 = vld [vmem:[#allocation20 + $0x108] sm:$0xff]
        %v4059 = vld [vmem:[#allocation20 + $0x110] sm:$0xff]
        %v4060 = vld [vmem:[#allocation20 + $0x118] sm:$0xff]
        %v4061 = vld [vmem:[#allocation20 + $0x120] sm:$0xff]
        %v4062 = vld [vmem:[#allocation20 + $0x128] sm:$0xff]
        %v4063 = vld [vmem:[#allocation20 + $0x130] sm:$0xff]
        %v4064 = vld [vmem:[#allocation20 + $0x138] sm:$0xff]
        %v4065 = vld [vmem:[#allocation20 + $0x140] sm:$0xff]
        %v4066 = vld [vmem:[#allocation20 + $0x148] sm:$0xff]
        %v4067 = vld [vmem:[#allocation20 + $0x150] sm:$0xff]
        %v4068 = vld [vmem:[#allocation20 + $0x158] sm:$0xff]
        %v4069 = vld [vmem:[#allocation20 + $0x160] sm:$0xff]
        %v4070 = vld [vmem:[#allocation20 + $0x168] sm:$0xff]
        %v4071 = vld [vmem:[#allocation20 + $0x170] sm:$0xff]
        %v4072 = vld [vmem:[#allocation20 + $0x178] sm:$0xff]
        %v4073 = vld [vmem:[#allocation20 + $0x180] sm:$0xff]
        %v4074 = vld [vmem:[#allocation20 + $0x188] sm:$0xff]
        %v4075 = vld [vmem:[#allocation20 + $0x190] sm:$0xff]
        %v4076 = vld [vmem:[#allocation20 + $0x198] sm:$0xff]
        %v4077 = vld [vmem:[#allocation20 + $0x1a0] sm:$0xff]
        %v4078 = vld [vmem:[#allocation20 + $0x1a8] sm:$0xff]
        %v4079 = vld [vmem:[#allocation20 + $0x1b0] sm:$0xff]
        %v4080 = vld [vmem:[#allocation20 + $0x1b8] sm:$0xff]
        %v4081 = vld [vmem:[#allocation20 + $0x1c0] sm:$0xff]
        %v4082 = vld [vmem:[#allocation20 + $0x1c8] sm:$0xff]
        %v4083 = vld [vmem:[#allocation20 + $0x1d0] sm:$0xff]
        %v4084 = vld [vmem:[#allocation20 + $0x1d8] sm:$0xff]
        %v4085 = vld [vmem:[#allocation20 + $0x1e0] sm:$0xff]
        %v4086 = vld [vmem:[#allocation20 + $0x1e8] sm:$0xff]
        %v4087 = vld [vmem:[#allocation20 + $0x1f0] sm:$0xff]
        %v4088 = vld [vmem:[#allocation20 + $0x1f8] sm:$0xff]
        %v4089 = vld [vmem:[%s17] sm:$0x3]
        %v4091 = vperm.slane %v4089, 0
        %v4092 = vperm.slane %v4089, 1
        %v4159 = vunpack.c.l.b16 %v4025
        %v4160 = vunpack.c.h.b16 %v4025
        %v4161 = vunpack.c.l.b16 %v4026
        %v4162 = vunpack.c.h.b16 %v4026
        %v4163 = vunpack.c.l.b16 %v4027
        %v4164 = vunpack.c.h.b16 %v4027
        %v4165 = vunpack.c.l.b16 %v4028
        %v4166 = vunpack.c.h.b16 %v4028
        %v4167 = vunpack.c.l.b16 %v4029
        %v4168 = vunpack.c.h.b16 %v4029
        %v4169 = vunpack.c.l.b16 %v4030
        %v4170 = vunpack.c.h.b16 %v4030
        %v4171 = vunpack.c.l.b16 %v4031
        %v4172 = vunpack.c.h.b16 %v4031
        %v4173 = vunpack.c.l.b16 %v4032
        %v4174 = vunpack.c.h.b16 %v4032
        %v4175 = vunpack.c.l.b16 %v4033
        %v4176 = vunpack.c.h.b16 %v4033
        %v4177 = vunpack.c.l.b16 %v4034
        %v4178 = vunpack.c.h.b16 %v4034
        %v4179 = vunpack.c.l.b16 %v4035
        %v4180 = vunpack.c.h.b16 %v4035
        %v4181 = vunpack.c.l.b16 %v4036
        %v4182 = vunpack.c.h.b16 %v4036
        %v4183 = vunpack.c.l.b16 %v4037
        %v4184 = vunpack.c.h.b16 %v4037
        %v4185 = vunpack.c.l.b16 %v4038
        %v4186 = vunpack.c.h.b16 %v4038
        %v4187 = vunpack.c.l.b16 %v4039
        %v4188 = vunpack.c.h.b16 %v4039
        %v4189 = vunpack.c.l.b16 %v4040
        %v4190 = vunpack.c.h.b16 %v4040
        %v4191 = vunpack.c.l.b16 %v4041
        %v4192 = vunpack.c.h.b16 %v4041
        %v4193 = vunpack.c.l.b16 %v4042
        %v4194 = vunpack.c.h.b16 %v4042
        %v4195 = vunpack.c.l.b16 %v4043
        %v4196 = vunpack.c.h.b16 %v4043
        %v4197 = vunpack.c.l.b16 %v4044
        %v4198 = vunpack.c.h.b16 %v4044
        %v4199 = vunpack.c.l.b16 %v4045
        %v4200 = vunpack.c.h.b16 %v4045
        %v4201 = vunpack.c.l.b16 %v4046
        %v4202 = vunpack.c.h.b16 %v4046
        %v4203 = vunpack.c.l.b16 %v4047
        %v4204 = vunpack.c.h.b16 %v4047
        %v4205 = vunpack.c.l.b16 %v4048
        %v4206 = vunpack.c.h.b16 %v4048
        %v4207 = vunpack.c.l.b16 %v4049
        %v4208 = vunpack.c.h.b16 %v4049
        %v4209 = vunpack.c.l.b16 %v4050
        %v4210 = vunpack.c.h.b16 %v4050
        %v4211 = vunpack.c.l.b16 %v4051
        %v4212 = vunpack.c.h.b16 %v4051
        %v4213 = vunpack.c.l.b16 %v4052
        %v4214 = vunpack.c.h.b16 %v4052
        %v4215 = vunpack.c.l.b16 %v4053
        %v4216 = vunpack.c.h.b16 %v4053
        %v4217 = vunpack.c.l.b16 %v4054
        %v4218 = vunpack.c.h.b16 %v4054
        %v4219 = vunpack.c.l.b16 %v4055
        %v4220 = vunpack.c.h.b16 %v4055
        %v4221 = vunpack.c.l.b16 %v4056
        %v4222 = vunpack.c.h.b16 %v4056
        %v4223 = vunpack.c.l.b16 %v4057
        %v4224 = vunpack.c.h.b16 %v4057
        %v4225 = vunpack.c.l.b16 %v4058
        %v4226 = vunpack.c.h.b16 %v4058
        %v4227 = vunpack.c.l.b16 %v4059
        %v4228 = vunpack.c.h.b16 %v4059
        %v4229 = vunpack.c.l.b16 %v4060
        %v4230 = vunpack.c.h.b16 %v4060
        %v4231 = vunpack.c.l.b16 %v4061
        %v4232 = vunpack.c.h.b16 %v4061
        %v4233 = vunpack.c.l.b16 %v4062
        %v4234 = vunpack.c.h.b16 %v4062
        %v4235 = vunpack.c.l.b16 %v4063
        %v4236 = vunpack.c.h.b16 %v4063
        %v4237 = vunpack.c.l.b16 %v4064
        %v4238 = vunpack.c.h.b16 %v4064
        %v4239 = vunpack.c.l.b16 %v4065
        %v4240 = vunpack.c.h.b16 %v4065
        %v4241 = vunpack.c.l.b16 %v4066
        %v4242 = vunpack.c.h.b16 %v4066
        %v4243 = vunpack.c.l.b16 %v4067
        %v4244 = vunpack.c.h.b16 %v4067
        %v4245 = vunpack.c.l.b16 %v4068
        %v4246 = vunpack.c.h.b16 %v4068
        %v4247 = vunpack.c.l.b16 %v4069
        %v4248 = vunpack.c.h.b16 %v4069
        %v4249 = vunpack.c.l.b16 %v4070
        %v4250 = vunpack.c.h.b16 %v4070
        %v4251 = vunpack.c.l.b16 %v4071
        %v4252 = vunpack.c.h.b16 %v4071
        %v4253 = vunpack.c.l.b16 %v4072
        %v4254 = vunpack.c.h.b16 %v4072
        %v4255 = vunpack.c.l.b16 %v4073
        %v4256 = vunpack.c.h.b16 %v4073
        %v4257 = vunpack.c.l.b16 %v4074
        %v4258 = vunpack.c.h.b16 %v4074
        %v4259 = vunpack.c.l.b16 %v4075
        %v4260 = vunpack.c.h.b16 %v4075
        %v4261 = vunpack.c.l.b16 %v4076
        %v4262 = vunpack.c.h.b16 %v4076
        %v4263 = vunpack.c.l.b16 %v4077
        %v4264 = vunpack.c.h.b16 %v4077
        %v4265 = vunpack.c.l.b16 %v4078
        %v4266 = vunpack.c.h.b16 %v4078
        %v4267 = vunpack.c.l.b16 %v4079
        %v4268 = vunpack.c.h.b16 %v4079
        %v4269 = vunpack.c.l.b16 %v4080
        %v4270 = vunpack.c.h.b16 %v4080
        %v4271 = vunpack.c.l.b16 %v4081
        %v4272 = vunpack.c.h.b16 %v4081
        %v4273 = vunpack.c.l.b16 %v4082
        %v4274 = vunpack.c.h.b16 %v4082
        %v4275 = vunpack.c.l.b16 %v4083
        %v4276 = vunpack.c.h.b16 %v4083
        %v4277 = vunpack.c.l.b16 %v4084
        %v4278 = vunpack.c.h.b16 %v4084
        %v4279 = vunpack.c.l.b16 %v4085
        %v4280 = vunpack.c.h.b16 %v4085
        %v4281 = vunpack.c.l.b16 %v4086
        %v4282 = vunpack.c.h.b16 %v4086
        %v4283 = vunpack.c.l.b16 %v4087
        %v4284 = vunpack.c.h.b16 %v4087
        %v4285 = vunpack.c.l.b16 %v4088
        %v4286 = vunpack.c.h.b16 %v4088
        %v4287 = vpack.c.b16 %v4161, %v4159
        %v4288 = vpack.c.b16 %v4162, %v4160
        %v4289 = vpack.c.b16 %v4165, %v4163
        %v4290 = vpack.c.b16 %v4166, %v4164
        %v4291 = vpack.c.b16 %v4169, %v4167
        %v4292 = vpack.c.b16 %v4170, %v4168
        %v4293 = vpack.c.b16 %v4173, %v4171
        %v4294 = vpack.c.b16 %v4174, %v4172
        %v4295 = vpack.c.b16 %v4177, %v4175
        %v4296 = vpack.c.b16 %v4178, %v4176
        %v4297 = vpack.c.b16 %v4181, %v4179
        %v4298 = vpack.c.b16 %v4182, %v4180
        %v4299 = vpack.c.b16 %v4185, %v4183
        %v4300 = vpack.c.b16 %v4186, %v4184
        %v4301 = vpack.c.b16 %v4189, %v4187
        %v4302 = vpack.c.b16 %v4190, %v4188
        %v4303 = vpack.c.b16 %v4193, %v4191
        %v4304 = vpack.c.b16 %v4194, %v4192
        %v4305 = vpack.c.b16 %v4197, %v4195
        %v4306 = vpack.c.b16 %v4198, %v4196
        %v4307 = vpack.c.b16 %v4201, %v4199
        %v4308 = vpack.c.b16 %v4202, %v4200
        %v4309 = vpack.c.b16 %v4205, %v4203
        %v4310 = vpack.c.b16 %v4206, %v4204
        %v4311 = vpack.c.b16 %v4209, %v4207
        %v4312 = vpack.c.b16 %v4210, %v4208
        %v4313 = vpack.c.b16 %v4213, %v4211
        %v4314 = vpack.c.b16 %v4214, %v4212
        %v4315 = vpack.c.b16 %v4217, %v4215
        %v4316 = vpack.c.b16 %v4218, %v4216
        %v4317 = vpack.c.b16 %v4221, %v4219
        %v4318 = vpack.c.b16 %v4222, %v4220
        %v4319 = vpack.c.b16 %v4225, %v4223
        %v4320 = vpack.c.b16 %v4226, %v4224
        %v4321 = vpack.c.b16 %v4229, %v4227
        %v4322 = vpack.c.b16 %v4230, %v4228
        %v4323 = vpack.c.b16 %v4233, %v4231
        %v4324 = vpack.c.b16 %v4234, %v4232
        %v4325 = vpack.c.b16 %v4237, %v4235
        %v4326 = vpack.c.b16 %v4238, %v4236
        %v4327 = vpack.c.b16 %v4241, %v4239
        %v4328 = vpack.c.b16 %v4242, %v4240
        %v4329 = vpack.c.b16 %v4245, %v4243
        %v4330 = vpack.c.b16 %v4246, %v4244
        %v4331 = vpack.c.b16 %v4249, %v4247
        %v4332 = vpack.c.b16 %v4250, %v4248
        %v4333 = vpack.c.b16 %v4253, %v4251
        %v4334 = vpack.c.b16 %v4254, %v4252
        %v4335 = vpack.c.b16 %v4257, %v4255
        %v4336 = vpack.c.b16 %v4258, %v4256
        %v4337 = vpack.c.b16 %v4261, %v4259
        %v4338 = vpack.c.b16 %v4262, %v4260
        %v4339 = vpack.c.b16 %v4265, %v4263
        %v4340 = vpack.c.b16 %v4266, %v4264
        %v4341 = vpack.c.b16 %v4269, %v4267
        %v4342 = vpack.c.b16 %v4270, %v4268
        %v4343 = vpack.c.b16 %v4273, %v4271
        %v4344 = vpack.c.b16 %v4274, %v4272
        %v4345 = vpack.c.b16 %v4277, %v4275
        %v4346 = vpack.c.b16 %v4278, %v4276
        %v4347 = vpack.c.b16 %v4281, %v4279
        %v4348 = vpack.c.b16 %v4282, %v4280
        %v4349 = vpack.c.b16 %v4285, %v4283
        %v4350 = vpack.c.b16 %v4286, %v4284
        %4415 = vmatpush.bf16.msra.mxu0 %v4301
        %4416 = vmatpush.bf16.msra.mxu0 %v4299
        %4417 = vmatpush.bf16.msra.mxu0 %v4297
        %4418 = vmatpush.bf16.msra.mxu0 %v4295
        %4419 = vmatpush.bf16.msra.mxu0 %v4293
        %4420 = vmatpush.bf16.msra.mxu0 %v4291
        %4421 = vmatpush.bf16.msra.mxu0 %v4289
        %4422 = vmatpush.bf16.msra.mxu0 %v4287
        %4423 = vmatmul.bf16.gmra.mxu0 %v4021
        %v4424 = vpop.f32.mrf.mxu0
        %v4425 = vadd.f32 %v4091, %v4424
        %v4426 = vpop.f32.mrf.mxu0
        %4427 = vdwg.mxu0
        %4428 = vmatpush.bf16.msra.mxu0 %v4317
        %4429 = vmatpush.bf16.msra.mxu0 %v4315
        %4430 = vmatpush.bf16.msra.mxu0 %v4313
        %4431 = vmatpush.bf16.msra.mxu0 %v4311
        %4432 = vmatpush.bf16.msra.mxu0 %v4309
        %4433 = vmatpush.bf16.msra.mxu0 %v4307
        %4434 = vmatpush.bf16.msra.mxu0 %v4305
        %4435 = vmatpush.bf16.msra.mxu0 %v4303
        %4436 = vmatmul.bf16.gmra.mxu0 %v4022
        %v4437 = vpop.f32.mrf.mxu0
        %v4438 = vadd.f32 %v4425, %v4437
        %v4439 = vpop.f32.mrf.mxu0
        %4440 = vdwg.mxu0
        %4441 = vmatpush.bf16.msra.mxu0 %v4333
        %4442 = vmatpush.bf16.msra.mxu0 %v4331
        %4443 = vmatpush.bf16.msra.mxu0 %v4329
        %4444 = vmatpush.bf16.msra.mxu0 %v4327
        %4445 = vmatpush.bf16.msra.mxu0 %v4325
        %4446 = vmatpush.bf16.msra.mxu0 %v4323
        %4447 = vmatpush.bf16.msra.mxu0 %v4321
        %4448 = vmatpush.bf16.msra.mxu0 %v4319
        %4449 = vmatmul.bf16.gmra.mxu0 %v4023
        %v4450 = vpop.f32.mrf.mxu0
        %v4451 = vadd.f32 %v4438, %v4450
        %v4452 = vpop.f32.mrf.mxu0
        %4453 = vdwg.mxu0
        %4454 = vmatpush.bf16.msra.mxu0 %v4349
        %4455 = vmatpush.bf16.msra.mxu0 %v4347
        %4456 = vmatpush.bf16.msra.mxu0 %v4345
        %4457 = vmatpush.bf16.msra.mxu0 %v4343
        %4458 = vmatpush.bf16.msra.mxu0 %v4341
        %4459 = vmatpush.bf16.msra.mxu0 %v4339
        %4460 = vmatpush.bf16.msra.mxu0 %v4337
        %4461 = vmatpush.bf16.msra.mxu0 %v4335
        %4462 = vmatmul.bf16.gmra.mxu0 %v4024
        %v4463 = vpop.f32.mrf.mxu0
        %v4464 = vadd.f32 %v4451, %v4463
        %v4465 = vpop.f32.mrf.mxu0
        %4466 = vdwg.mxu0
        %4467 = vmatpush.bf16.msra.mxu0 %v4302
        %4468 = vmatpush.bf16.msra.mxu0 %v4300
        %4469 = vmatpush.bf16.msra.mxu0 %v4298
        %4470 = vmatpush.bf16.msra.mxu0 %v4296
        %4471 = vmatpush.bf16.msra.mxu0 %v4294
        %4472 = vmatpush.bf16.msra.mxu0 %v4292
        %4473 = vmatpush.bf16.msra.mxu0 %v4290
        %4474 = vmatpush.bf16.msra.mxu0 %v4288
        %4475 = vmatmul.bf16.gmra.mxu0 %v4021
        %v4476 = vpop.f32.mrf.mxu0
        %v4477 = vadd.f32 %v4092, %v4476
        %v4478 = vpop.f32.mrf.mxu0
        %4479 = vdwg.mxu0
        %4480 = vmatpush.bf16.msra.mxu0 %v4318
        %4481 = vmatpush.bf16.msra.mxu0 %v4316
        %4482 = vmatpush.bf16.msra.mxu0 %v4314
        %4483 = vmatpush.bf16.msra.mxu0 %v4312
        %4484 = vmatpush.bf16.msra.mxu0 %v4310
        %4485 = vmatpush.bf16.msra.mxu0 %v4308
        %4486 = vmatpush.bf16.msra.mxu0 %v4306
        %4487 = vmatpush.bf16.msra.mxu0 %v4304
        %4488 = vmatmul.bf16.gmra.mxu0 %v4022
        %v4489 = vpop.f32.mrf.mxu0
        %v4490 = vadd.f32 %v4477, %v4489
        %v4491 = vpop.f32.mrf.mxu0
        %4492 = vdwg.mxu0
        %4493 = vmatpush.bf16.msra.mxu0 %v4334
        %4494 = vmatpush.bf16.msra.mxu0 %v4332
        %4495 = vmatpush.bf16.msra.mxu0 %v4330
        %4496 = vmatpush.bf16.msra.mxu0 %v4328
        %4497 = vmatpush.bf16.msra.mxu0 %v4326
        %4498 = vmatpush.bf16.msra.mxu0 %v4324
        %4499 = vmatpush.bf16.msra.mxu0 %v4322
        %4500 = vmatpush.bf16.msra.mxu0 %v4320
        %4501 = vmatmul.bf16.gmra.mxu0 %v4023
        %v4502 = vpop.f32.mrf.mxu0
        %v4503 = vadd.f32 %v4490, %v4502
        %v4504 = vpop.f32.mrf.mxu0
        %4505 = vdwg.mxu0
        %4506 = vmatpush.bf16.msra.mxu0 %v4350
        %4507 = vmatpush.bf16.msra.mxu0 %v4348
        %4508 = vmatpush.bf16.msra.mxu0 %v4346
        %4509 = vmatpush.bf16.msra.mxu0 %v4344
        %4510 = vmatpush.bf16.msra.mxu0 %v4342
        %4511 = vmatpush.bf16.msra.mxu0 %v4340
        %4512 = vmatpush.bf16.msra.mxu0 %v4338
        %4513 = vmatpush.bf16.msra.mxu0 %v4336
        %4514 = vmatmul.bf16.gmra.mxu0 %v4024
        %v4515 = vpop.f32.mrf.mxu0
        %v4516 = vadd.f32 %v4503, %v4515
        %v4517 = vpop.f32.mrf.mxu0
        %4518 = vdwg.mxu0
        %v4519 = vadd.f32 %v3515, %v4464
        %v4520 = vadd.f32 %v3516, %v4516
        %v4521 = vld [vmem:[#allocation17] sm:$0x3]
        %v4522 = vld [vmem:[%s13] sm:$0x3]
        %v4523 = vadd.f32 %v4519, %v4520
        %4524 = vadd.xlane.f32.xlu0 %v4523
        %v4525 = vpop.xlane.xlu0 %4524
        %v4526 = vmul.f32 %v4525, %v2106
        %v4527 = vsub.f32 %v4519, %v4526
        %v4528 = vsub.f32 %v4520, %v4526
        %v4529 = vmul.f32 %v4527, %v4527
        %v4530 = vmul.f32 %v4528, %v4528
        %v4531 = vadd.f32 %v4529, %v4530
        %4532 = vadd.xlane.f32.xlu0 %v4531
        %v4533 = vpop.xlane.xlu0 %4532
        %v4534 = vmul.f32 %v4533, %v2106
        %v4535 = vadd.f32 %v4534, 1e-05
        %v4536 = vrsqrt.pop %v4535
        %v4537 = vmul.f32 %v4536, %v4535
        %v4538 = vmul.f32 %v4537, %v4536
        %v4539 = vmul.f32 0.5, %v4538
        %v4540 = vsub.f32 1.5, %v4539
        %v4541 = vmul.f32 %v4536, %v4540
        %vm4542 = vweird.f32 %v4535
        %vm4543 = vweird.f32 %v4536
        %vm4544 = vmor %vm4542, %vm4543
        %v4545 = vsel %vm4544, %v4536, %v4541
        %v4546 = vmul.f32 %v4527, %v4545
        %v4547 = vmul.f32 %v4528, %v4545
        %v4549 = vperm.slane %v4521, 0
        %v4550 = vperm.slane %v4521, 1
        %v4553 = vmul.f32 %v4546, %v4549
        %v4554 = vmul.f32 %v4547, %v4550
        %v4556 = vperm.slane %v4522, 0
        %v4557 = vperm.slane %v4522, 1
        %v4560 = vadd.f32 %v4553, %v4556
        %v4561 = vadd.f32 %v4554, %v4557
        %4562 = vst [vmem:[%s794] sm:$0xff] %v4560
        %4563 = vst [vmem:[%s794 + $0x8] sm:$0xff] %v4561
        %s4564 = sand.u32 %s439, 1
        %s4565 = scalar_lea.sflag [#allocation4], %s4564
        %s4566 = sand.u32 %s439, 1
        %s4567 = smul.addr %s4566, 16
        %s4568 = scalar_lea.vmem [#allocation22], %s4567
        // Predicated region
        $region141: #{tpu_custom_call.1} parent=91 // pred_check
          %p4569 = pneg %p449
        $region142: #{tpu_custom_call.1} parent=91 // pred_check_branch
          %4571 = sbr.rel (%p4569) target = $region144
        $region143: #{tpu_custom_call.1} parent=91 // pred_region
          %4573 = vsyncadd %s4565, 0
          %s4574 = smul.addr %s43, 2
          %s4575 = smul.addr %s4574, 8
          %s4576 = scalar_lea.hbm %s18, %s4575
          %s4578 = sshll.u32 %s4568, 4
          %s4579 = int_to_ptr.vmem [resolvable:$true] %s4578
          %s4580 = sshll.u32 %s4576, 4
          %s4581 = int_to_ptr.hbm [resolvable:$true] %s4580
          %4583 = dma.vmem_to_hbm [thread:$0]  %s4579, 256, %s4581, %s4565
        $region144: #{tpu_custom_call.1} parent=91 // pred_fallthru
          _
      $region92: #{tpu_custom_call.1} parent=5 // pred_fallthru
        _
      %p4584 = scmp.le.s32.totalorder 2, %s38
      // Predicated region
      $region145: #{tpu_custom_call.1} parent=5 // pred_check
        %p4585 = pneg %p4584
      $region146: #{tpu_custom_call.1} parent=5 // pred_check_branch
        %4587 = sbr.rel (%p4585) target = $region148
      $region147: #{tpu_custom_call.1} parent=5 // pred_region
        %s4588 = ssub.s32 %s38, 2
        // Predicated region
        $region149: #{tpu_custom_call.1} parent=147 // pred_check
          %p4589 = pneg %p455
        $region150: #{tpu_custom_call.1} parent=147 // pred_check_branch
          %4591 = sbr.rel (%p4589) target = $region152
        $region151: #{tpu_custom_call.1} parent=147 // pred_region
          %s4592 = sand.u32 %s440, 1
          %s4593 = scalar_lea.sflag [#allocation4], %s4592
          %s4594 = sand.u32 %s440, 1
          %s4595 = smul.addr %s4594, 16
          %s4596 = scalar_lea.vmem [#allocation22], %s4595
          %4598 = dma.done %s4593, 256
        $region152: #{tpu_custom_call.1} parent=147 // pred_fallthru
          _
      $region148: #{tpu_custom_call.1} parent=5 // pred_fallthru
        _
    $region6: #{tpu_custom_call.1} parent=1 // loop_footer
      %s42 = sadd.s32 1, %s38
    $region7: #{tpu_custom_call.1} parent=1 // loop_footer_branch
      %37 = sbr.rel target = $region3
    $region8: #{tpu_custom_call.1} parent=1 // loop_exit
      _
    %4599 = vsyncpa [#allocation3], 1
    %s4600 = scalar_lea.sflag [#allocation3], 1
    %4601 = vsyncpa %s4600, 1
    %4602 = vsyncpa [#allocation6], 1
    %s4603 = scalar_lea.sflag [#allocation6], 1
    %4604 = vsyncpa %s4603, 1
    %4605 = vsyncpa [#allocation9], 1
    %4606 = vsyncpa [#allocation12], 1
    %4607 = vsyncpa [#allocation15], 1
    %4608 = vsyncpa [#allocation18], 1
    %4609 = vsyncpa [#allocation21], 1
    %4610 = vsyncpa [#allocation4], 1
    %s4611 = scalar_lea.sflag [#allocation4], 1
    %4612 = vsyncpa %s4611, 1

</llo_original>
